<compile_context>
chip_gen: v7x
topology: tpu7x:2x2x1
jax: 0.10.0
libtpu: 0.0.40
codegen_flags: <defaults>
</compile_context>

<pallas_src>
import math
import functools

import jax
import jax.numpy as jnp
from jax.experimental import pallas as pl
from jax.experimental.pallas import tpu as pltpu


_SUBLANE = 8     # f32 sublane count
_LANE = 128      # lane count


def _round_up(x, m):
    return (x + m - 1) // m * m


# --------------------------------------------------------------------------
# Pallas kernel: one GRU layer (single direction), time-chunked recurrence.
# --------------------------------------------------------------------------
def _gru_layer_kernel(x_ref, h0_ref, wih_ref, bih_ref, whh_ref, bhn_ref,
                      out_ref, h_scr, xg_scr, *,
                      reverse, t_real, num_chunks, unroll):
    t = pl.program_id(1)

    @pl.when(t == 0)
    def _init():
        h_scr[...] = h0_ref[...]

    TB, BB, E = x_ref.shape
    Hp = whh_ref.shape[0]

    # (1) x-side gate pre-activations for the WHOLE chunk: one wide MXU matmul
    #     (M = TB*BB, N = 3*Hp), hoisted out of the sequential recurrence.
    #     The x-side bias already contains b_ir+b_hr / b_iz+b_hz / b_in.
    x2d = x_ref[...].reshape(TB * BB, E)
    xg = jnp.dot(x2d.astype(wih_ref.dtype), wih_ref[...],
                 preferred_element_type=jnp.float32) + bih_ref[...]
    xg_scr[...] = xg.reshape(TB, BB, 3 * Hp)

    # h-side n-gate bias: broadcast ONCE per chunk (not once per unrolled step;
    # JAX does not CSE broadcast_in_dim).
    bhn = jnp.broadcast_to(bhn_ref[...], (BB, Hp))

    # Only the reverse direction can encounter padded timesteps *before* real
    # ones (padding lives at the tail of the padded sequence).
    t_pad = num_chunks * TB
    need_mask = bool(reverse) and (t_pad > t_real)           # static python bool
    chunk_base = ((num_chunks - 1 - t) if reverse else t) * TB

    # (2) sequential recurrence: one fused (BB, Hp) x (Hp, 3*Hp) MXU matmul per
    #     step; gate math in f32 on the VPU/EUP.  Gate order matches torch:
    #     [r, z, n];  n = tanh(xg_n + r * (W_hn h + b_hn)).
    def step(i, h):
        j = (TB - 1 - i) if reverse else i              # in-chunk time position
        xg_t = xg_scr[j]                                # (BB, 3*Hp)
        hg = jnp.dot(h.astype(whh_ref.dtype), whh_ref[...],
                     preferred_element_type=jnp.float32)
        r = jax.nn.sigmoid(xg_t[:, :Hp] + hg[:, :Hp])
        z = jax.nn.sigmoid(xg_t[:, Hp:2 * Hp] + hg[:, Hp:2 * Hp])
        n = jnp.tanh(xg_t[:, 2 * Hp:] + r * (hg[:, 2 * Hp:] + bhn))
        h_new = (1.0 - z) * n + z * h
        if need_mask:
            # skip padded (gtime >= T) steps so the carry entering the real
            # region of the reversed sequence is untouched.
            h_new = jnp.where(chunk_base + j < t_real, h_new, h)
        out_ref[j] = h_new.astype(out_ref.dtype)        # lane-dense store
        return h_new

    h_scr[...] = jax.lax.fori_loop(0, TB, step, h_scr[...], unroll=unroll)


def gru_layer(x, h0, w_ih, w_hh, b_ih, b_hh, *, reverse=False,
              time_chunk=16, param_dtype=jnp.bfloat16,
              out_dtype=jnp.float32):
    """One GRU layer/direction.  x: (B, T, E), h0: (B, H).
    w_ih: (3H, E), w_hh: (3H, H), biases (3H,)  (torch layout, gates [r,z,n]).
    Returns (seq (B, T, H) in out_dtype, h_T (B, H) float32)."""
    B, T, E = x.shape
    H = w_hh.shape[1]
    f32 = jnp.float32
    out_dtype = jnp.dtype(out_dtype)

    # sublane alignment: 8 for f32 activations, 16 when activations are bf16.
    sub = _SUBLANE if (out_dtype.itemsize >= 4 and x.dtype.itemsize >= 4) else 2 * _SUBLANE
    Bp = _round_up(B, sub)
    BBLK = min(Bp, 128)                  # large batch block -> MXU row fill
    Bp = _round_up(Bp, BBLK)
    nb = Bp // BBLK

    Hp = _round_up(H, _LANE)             # lane-dense, unmasked vst, aligned MXU N

    # time chunking: pick TB so padding is < one chunk (no gcd TB=1 cliff).
    nt = -(-T // max(1, time_chunk))
    TB = -(-T // nt)
    Tp = nt * TB

    # time-major input; zero-pad batch rows and tail timesteps (sliced off /
    # mask-skipped below).
    x_t = jnp.transpose(x, (1, 0, 2))
    x_t = jnp.pad(x_t, ((0, Tp - T), (0, Bp - B), (0, 0)))
    h0_p = jnp.pad(h0.astype(f32), ((0, Bp - B), (0, Hp - H)))

    # Fused + padded gate weights, transposed to (K, 3*Hp).  Zero-padded
    # rows/cols keep padded hidden columns at exactly 0 for every timestep, so
    # real columns are bit-exactly unaffected.
    def pack_w(w, k_dim):
        out = jnp.zeros((k_dim, 3 * Hp), param_dtype)
        for g in range(3):
            out = out.at[:w.shape[1], g * Hp:g * Hp + H].set(
                w[g * H:(g + 1) * H, :].T.astype(param_dtype))
        return out

    wih_p = pack_w(w_ih, E)
    whh_p = pack_w(w_hh, Hp)

    # Fold b_hr / b_hz into the x-side bias (mathematically identical for the
    # r/z gates); only b_hn must stay on the h side (it sits inside the r* term).
    bih_p = jnp.zeros((1, 3 * Hp), f32)
    for g in range(3):
        bg = b_ih[g * H:(g + 1) * H].astype(f32)
        if g < 2:
            bg = bg + b_hh[g * H:(g + 1) * H].astype(f32)
        bih_p = bih_p.at[0, g * Hp:g * Hp + H].set(bg)
    bhn_p = jnp.zeros((1, Hp), f32).at[0, :H].set(b_hh[2 * H:].astype(f32))

    if reverse:
        x_map = lambda b, t: (nt - 1 - t, b, 0)      # reversed chunk order
    else:
        x_map = lambda b, t: (t, b, 0)

    kernel = functools.partial(
        _gru_layer_kernel, reverse=reverse, t_real=T, num_chunks=nt,
        unroll=True if TB <= 8 else 8)               # partial unroll for big TB

    out_t = pl.pallas_call(
        kernel,
        out_shape=jax.ShapeDtypeStruct((Tp, Bp, Hp), out_dtype),
        grid=(nb, nt),
        in_specs=[
            pl.BlockSpec((TB, BBLK, E), x_map),                  # x chunk
            pl.BlockSpec((BBLK, Hp), lambda b, t: (b, 0)),       # h0
            pl.BlockSpec((E, 3 * Hp), lambda b, t: (0, 0)),      # W_ih^T (fused)
            pl.BlockSpec((1, 3 * Hp), lambda b, t: (0, 0)),      # fused x-side bias
            pl.BlockSpec((Hp, 3 * Hp), lambda b, t: (0, 0)),     # W_hh^T (fused)
            pl.BlockSpec((1, Hp), lambda b, t: (0, 0)),          # b_hn
        ],
        out_specs=pl.BlockSpec((TB, BBLK, Hp), x_map),           # sequence out
        scratch_shapes=[
            pltpu.VMEM((BBLK, Hp), f32),              # f32 hidden-state carry
            pltpu.VMEM((TB, BBLK, 3 * Hp), f32),      # hoisted x-side preacts
        ],
        compiler_params=pltpu.CompilerParams(
            # time must stay innermost + sequential ("arbitrary"): the h_scr
            # carry depends on it.  Batch may shard across TensorCores.
            dimension_semantics=("parallel", "arbitrary"),
            vmem_limit_bytes=64 * 1024 * 1024),
    )(x_t, h0_p, wih_p, bih_p, whh_p, bhn_p)

    seq_t = out_t[:T, :B, :H]                         # drop time/batch/lane pad
    seq = jnp.transpose(seq_t, (1, 0, 2))             # (B, T, H)
    h_T = (seq_t[0] if reverse else seq_t[T - 1]).astype(f32)
    return seq, h_T


# --------------------------------------------------------------------------
# Encoder forward (layers / directions + enc construction), pure-JAX glue.
# --------------------------------------------------------------------------
def _encoder_impl(inputs, params, layer_fn, *, n_layers, bidir, hidden_size,
                  init_h=None, inter_dtype=jnp.float32):
    B, T, _ = inputs.shape
    D = 2 if bidir else 1
    if init_h is None:
        init_h = jnp.broadcast_to(params["init_h"],
                                  (n_layers * D, B, hidden_size))
    layer_in = inputs            # embedder=None -> inputs are already embeddings
    h_n = []
    for l in range(n_layers):
        o_dtype = jnp.float32 if l == n_layers - 1 else inter_dtype
        dir_outs = []
        for d in range(D):
            w = params["rnn"][(l, d)]
            seq, hT = layer_fn(layer_in, init_h[l * D + d],
                               w["w_ih"], w["w_hh"], w["b_ih"], w["b_hh"],
                               reverse=(d == 1), out_dtype=o_dtype)
            dir_outs.append(seq)
            h_n.append(hT)
        layer_in = dir_outs[0] if D == 1 else jnp.concatenate(dir_outs, axis=-1)
    hids = layer_in                                                    # (B, T, D*H)
    last = jnp.stack(h_n, 0).reshape(n_layers, D, B, hidden_size)[-1]  # (D, B, H)
    enc = jnp.transpose(last, (1, 0, 2)).reshape(B, D * hidden_size)
    return enc, hids


def encoder_forward(inputs, params, *, n_layers, bidir, hidden_size,
                    init_h=None, time_chunk=16, param_dtype=jnp.bfloat16):
    layer_fn = functools.partial(gru_layer, time_chunk=time_chunk,
                                 param_dtype=param_dtype)
    return _encoder_impl(inputs, params, layer_fn, n_layers=n_layers,
                         bidir=bidir, hidden_size=hidden_size, init_h=init_h,
                         inter_dtype=jnp.dtype(param_dtype))


# --------------------------------------------------------------------------
# Pure-JAX reference (exact f32) and parameter init.
# --------------------------------------------------------------------------
def _gru_layer_reference(x, h0, w_ih, w_hh, b_ih, b_hh, *, reverse=False,
                         out_dtype=jnp.float32):
    del out_dtype  # reference stays exact f32
    if reverse:
        x = x[:, ::-1, :]
    B, T, _ = x.shape
    H = w_hh.shape[1]
    h = h0.astype(jnp.float32)
    outs = []
    for t in range(T):
        gi = x[:, t, :].astype(jnp.float32) @ w_ih.T + b_ih
        gh = h @ w_hh.T + b_hh
        r = jax.nn.sigmoid(gi[:, :H] + gh[:, :H])
        z = jax.nn.sigmoid(gi[:, H:2 * H] + gh[:, H:2 * H])
        n = jnp.tanh(gi[:, 2 * H:] + r * gh[:, 2 * H:])
        h = (1.0 - z) * n + z * h
        outs.append(h)
    seq = jnp.stack(outs, axis=1)
    if reverse:
        seq = seq[:, ::-1, :]
    return seq, h


def encoder_reference(inputs, params, *, n_layers, bidir, hidden_size,
                      init_h=None):
    return _encoder_impl(inputs, params, _gru_layer_reference,
                         n_layers=n_layers, bidir=bidir,
                         hidden_size=hidden_size, init_h=init_h)


def init_encoder_params(key, input_size, hidden_size, n_layers, bidir):
    """orthogonal_ for dim>1 weights (module's init_weights), torch-GRU-style
    uniform biases, randn init_h parameter."""
    D = 2 if bidir else 1
    orth = jax.nn.initializers.orthogonal()
    stdv = 1.0 / math.sqrt(hidden_size)
    keys = jax.random.split(key, n_layers * D * 4 + 1)
    params = {"rnn": {}}
    ki = 0
    for l in range(n_layers):
        in_dim = input_size if l == 0 else D * hidden_size
        for d in range(D):
            w_ih = orth(keys[ki], (3 * hidden_size, in_dim), jnp.float32); ki += 1
            w_hh = orth(keys[ki], (3 * hidden_size, hidden_size), jnp.float32); ki += 1
            b_ih = jax.random.uniform(keys[ki], (3 * hidden_size,), jnp.float32,
                                      -stdv, stdv); ki += 1
            b_hh = jax.random.uniform(keys[ki], (3 * hidden_size,), jnp.float32,
                                      -stdv, stdv); ki += 1
            params["rnn"][(l, d)] = dict(w_ih=w_ih, w_hh=w_hh, b_ih=b_ih, b_hh=b_hh)
    params["init_h"] = jax.random.normal(keys[ki], (n_layers * D, 1, hidden_size),
                                         jnp.float32)
    return params


if __name__ == "__main__":
    # --- test 1: the nominal Encoder config (bidir, 1 layer) ---------------
    B, T, E, H = 2, 8, 16, 32
    n_layers, bidir = 1, True
    D = 2 if bidir else 1

    key = jax.random.PRNGKey(0)
    kp, kx = jax.random.split(key)
    params = init_encoder_params(kp, E, H, n_layers, bidir)
    inputs = jax.random.normal(kx, (B, T, E), jnp.float32)   # embedder=None path

    enc_ref, hids_ref = encoder_reference(inputs, params, n_layers=n_layers,
                                          bidir=bidir, hidden_size=H)

    # exact path: f32 weights
    fwd_f32 = jax.jit(functools.partial(
        encoder_forward, n_layers=n_layers, bidir=bidir, hidden_size=H,
        time_chunk=8, param_dtype=jnp.float32))
    enc, hids = fwd_f32(inputs, params)
    jax.block_until_ready((enc, hids))
    assert enc.shape == (B, D * H) and hids.shape == (B, T, D * H)
    assert bool(jnp.all(jnp.isfinite(enc))) and bool(jnp.all(jnp.isfinite(hids)))
    assert jnp.allclose(enc, enc_ref, rtol=5e-3, atol=5e-3)
    assert jnp.allclose(hids, hids_ref, rtol=5e-3, atol=5e-3)

    # default path: bf16 weights, f32 accumulation / carry (loose check)
    fwd_bf16 = jax.jit(functools.partial(
        encoder_forward, n_layers=n_layers, bidir=bidir, hidden_size=H))
    enc_b, hids_b = fwd_bf16(inputs, params)
    jax.block_until_ready((enc_b, hids_b))
    assert jnp.allclose(enc_b, enc_ref, rtol=0.0, atol=1e-1)
    assert jnp.allclose(hids_b, hids_ref, rtol=0.0, atol=1e-1)

    # --- test 2: awkward T (time padding + reverse carry mask), 2 layers ---
    B2, T2, H2, L2 = 3, 11, 32, 2
    params2 = init_encoder_params(jax.random.PRNGKey(1), E, H2, L2, True)
    inputs2 = jax.random.normal(jax.random.PRNGKey(2), (B2, T2, E), jnp.float32)
    fwd2 = jax.jit(functools.partial(
        encoder_forward, n_layers=L2, bidir=True, hidden_size=H2,
        time_chunk=8, param_dtype=jnp.float32))
    enc2, hids2 = fwd2(inputs2, params2)
    jax.block_until_ready((enc2, hids2))
    enc2_ref, hids2_ref = encoder_reference(inputs2, params2, n_layers=L2,
                                            bidir=True, hidden_size=H2)
    assert jnp.allclose(enc2, enc2_ref, rtol=5e-3, atol=5e-3)
    assert jnp.allclose(hids2, hids2_ref, rtol=5e-3, atol=5e-3)

    print("KERNEL_OK")
</pallas_src>

<mosaic_0001>
module attributes {stable_mosaic.version = 11 : i64} {
  func.func @_gru_layer_kernel(%arg0: i32, %arg1: i32, %arg2: memref<8x8x16xf32, #tpu.memory_space<vmem>>, %arg3: memref<8x128xf32, #tpu.memory_space<vmem>>, %arg4: memref<16x384xf32, #tpu.memory_space<vmem>>, %arg5: memref<1x384xf32, #tpu.memory_space<vmem>>, %arg6: memref<128x384xf32, #tpu.memory_space<vmem>>, %arg7: memref<1x128xf32, #tpu.memory_space<vmem>>, %arg8: memref<8x8x128xf32, #tpu.memory_space<vmem>>, %arg9: memref<8x128xf32, #tpu.memory_space<vmem>>, %arg10: memref<8x8x384xf32, #tpu.memory_space<vmem>>) attributes {dimension_semantics = [#tpu.dimension_semantics<parallel>, #tpu.dimension_semantics<arbitrary>], iteration_bounds = array<i64: 1, 1>, scalar_prefetch = 0 : i64, scratch_operands = 2 : i64, tpu.core_type = #tpu.core_type<tc>, window_params = [{transform_indices = @transform_0, window_bounds = array<i64: 8, 8, 16>}, {transform_indices = @transform_1, window_bounds = array<i64: 8, 128>}, {pipeline_mode = #tpu.pipeline_mode<synchronous>, transform_indices = @transform_2, window_bounds = array<i64: 16, 384>}, {pipeline_mode = #tpu.pipeline_mode<synchronous>, transform_indices = @transform_3, window_bounds = array<i64: 1, 384>}, {pipeline_mode = #tpu.pipeline_mode<synchronous>, transform_indices = @transform_4, window_bounds = array<i64: 128, 384>}, {pipeline_mode = #tpu.pipeline_mode<synchronous>, transform_indices = @transform_5, window_bounds = array<i64: 1, 128>}, {transform_indices = @transform_6, window_bounds = array<i64: 8, 8, 128>}]} {
    %c0_i32 = arith.constant 0 : i32
    %0 = arith.cmpi eq, %arg1, %c0_i32 : i32
    %1 = arith.extui %0 : i1 to i32
    %c0_i32_0 = arith.constant 0 : i32
    %2 = arith.cmpi ne, %1, %c0_i32_0 : i32
    scf.if %2 {
      %c0_97 = arith.constant 0 : index
      %c0_98 = arith.constant 0 : index
      %305 = vector.load %arg3[%c0_97, %c0_98] : memref<8x128xf32, #tpu.memory_space<vmem>>, vector<8x128xf32>
      %c0_99 = arith.constant 0 : index
      %c0_100 = arith.constant 0 : index
      %306 = vector.load %arg9[%c0_99, %c0_100] : memref<8x128xf32, #tpu.memory_space<vmem>>, vector<8x128xf32>
      tpu.vector_store %arg9[%c0_99, %c0_100], %305 {strides = array<i32>} : memref<8x128xf32, #tpu.memory_space<vmem>>, vector<8x128xf32>,
    } else {
    }
    %c0 = arith.constant 0 : index
    %c0_1 = arith.constant 0 : index
    %c0_2 = arith.constant 0 : index
    %3 = vector.load %arg2[%c0, %c0_1, %c0_2] : memref<8x8x16xf32, #tpu.memory_space<vmem>>, vector<8x8x16xf32>
    %4 = vector.shape_cast %3 : vector<8x8x16xf32> to vector<64x16xf32>
    %c0_3 = arith.constant 0 : index
    %c0_4 = arith.constant 0 : index
    %5 = vector.load %arg4[%c0_3, %c0_4] : memref<16x384xf32, #tpu.memory_space<vmem>>, vector<16x384xf32>
    %cst = arith.constant dense<0.000000e+00> : vector<64x384xf32>
    %6 = tpu.matmul %4, %5, %cst {dimension_numbers = #tpu.dot_dimension_numbers<[1], [0], [0], [1], [0, 0, 1, 1], [], []>} : vector<64x16xf32>, vector<16x384xf32>, vector<64x384xf32> -> vector<64x384xf32>
    %c0_5 = arith.constant 0 : index
    %c0_6 = arith.constant 0 : index
    %7 = vector.load %arg5[%c0_5, %c0_6] : memref<1x384xf32, #tpu.memory_space<vmem>>, vector<1x384xf32>
    %8 = vector.broadcast %7 : vector<1x384xf32> to vector<64x384xf32>
    %9 = arith.addf %6, %8 : vector<64x384xf32>
    %10 = vector.shape_cast %9 : vector<64x384xf32> to vector<8x8x384xf32>
    %c0_7 = arith.constant 0 : index
    %c0_8 = arith.constant 0 : index
    %c0_9 = arith.constant 0 : index
    %11 = vector.load %arg10[%c0_7, %c0_8, %c0_9] : memref<8x8x384xf32, #tpu.memory_space<vmem>>, vector<8x8x384xf32>
    tpu.vector_store %arg10[%c0_7, %c0_8, %c0_9], %10 {strides = array<i32>} : memref<8x8x384xf32, #tpu.memory_space<vmem>>, vector<8x8x384xf32>,
    %c0_10 = arith.constant 0 : index
    %c0_11 = arith.constant 0 : index
    %12 = vector.load %arg7[%c0_10, %c0_11] : memref<1x128xf32, #tpu.memory_space<vmem>>, vector<1x128xf32>
    %13 = vector.shape_cast %12 : vector<1x128xf32> to vector<1x128xf32>
    %14 = vector.broadcast %13 : vector<1x128xf32> to vector<8x128xf32>
    %c0_12 = arith.constant 0 : index
    %c0_13 = arith.constant 0 : index
    %15 = vector.load %arg9[%c0_12, %c0_13] : memref<8x128xf32, #tpu.memory_space<vmem>>, vector<8x128xf32>
    %c0_i32_14 = arith.constant 0 : i32
    %16 = arith.index_cast %c0_i32_14 : i32 to index
    %c0_15 = arith.constant 0 : index
    %c0_16 = arith.constant 0 : index
    %17 = vector.load %arg10[%16, %c0_15, %c0_16] : memref<8x8x384xf32, #tpu.memory_space<vmem>>, vector<1x8x384xf32>
    %18 = vector.shape_cast %17 : vector<1x8x384xf32> to vector<8x384xf32>
    %c0_17 = arith.constant 0 : index
    %c0_18 = arith.constant 0 : index
    %19 = vector.load %arg6[%c0_17, %c0_18] : memref<128x384xf32, #tpu.memory_space<vmem>>, vector<128x384xf32>
    %cst_19 = arith.constant dense<0.000000e+00> : vector<8x384xf32>
    %20 = tpu.matmul %15, %19, %cst_19 {dimension_numbers = #tpu.dot_dimension_numbers<[1], [0], [0], [1], [0, 0, 1, 1], [], []>} : vector<8x128xf32>, vector<128x384xf32>, vector<8x384xf32> -> vector<8x384xf32>
    %21 = vector.extract_strided_slice %18 {offsets = [0, 0], sizes = [8, 128], strides = [1, 1]} : vector<8x384xf32> to vector<8x128xf32>
    %22 = vector.extract_strided_slice %20 {offsets = [0, 0], sizes = [8, 128], strides = [1, 1]} : vector<8x384xf32> to vector<8x128xf32>
    %23 = arith.addf %21, %22 : vector<8x128xf32>
    %24 = arith.negf %23 : vector<8x128xf32>
    %25 = math.exp %24 : vector<8x128xf32>
    %cst_20 = arith.constant 1.000000e+00 : f32
    %26 = vector.broadcast %cst_20 : f32 to vector<8x128xf32>
    %27 = arith.addf %26, %25 : vector<8x128xf32>
    %28 = arith.divf %26, %27 : vector<8x128xf32>
    %29 = vector.extract_strided_slice %18 {offsets = [0, 128], sizes = [8, 128], strides = [1, 1]} : vector<8x384xf32> to vector<8x128xf32>
    %30 = vector.extract_strided_slice %20 {offsets = [0, 128], sizes = [8, 128], strides = [1, 1]} : vector<8x384xf32> to vector<8x128xf32>
    %31 = arith.addf %29, %30 : vector<8x128xf32>
    %32 = arith.negf %31 : vector<8x128xf32>
    %33 = math.exp %32 : vector<8x128xf32>
    %cst_21 = arith.constant 1.000000e+00 : f32
    %34 = vector.broadcast %cst_21 : f32 to vector<8x128xf32>
    %35 = arith.addf %34, %33 : vector<8x128xf32>
    %36 = arith.divf %34, %35 : vector<8x128xf32>
    %37 = vector.extract_strided_slice %18 {offsets = [0, 256], sizes = [8, 128], strides = [1, 1]} : vector<8x384xf32> to vector<8x128xf32>
    %38 = vector.extract_strided_slice %20 {offsets = [0, 256], sizes = [8, 128], strides = [1, 1]} : vector<8x384xf32> to vector<8x128xf32>
    %39 = arith.addf %38, %14 : vector<8x128xf32>
    %40 = arith.mulf %28, %39 : vector<8x128xf32>
    %41 = arith.addf %37, %40 : vector<8x128xf32>
    %42 = math.tanh %41 : vector<8x128xf32>
    %cst_22 = arith.constant 1.000000e+00 : f32
    %43 = vector.broadcast %cst_22 : f32 to vector<8x128xf32>
    %44 = arith.subf %43, %36 : vector<8x128xf32>
    %45 = arith.mulf %44, %42 : vector<8x128xf32>
    %46 = arith.mulf %36, %15 : vector<8x128xf32>
    %47 = arith.addf %45, %46 : vector<8x128xf32>
    %48 = arith.index_cast %c0_i32_14 : i32 to index
    %c0_23 = arith.constant 0 : index
    %c0_24 = arith.constant 0 : index
    %49 = vector.load %arg8[%48, %c0_23, %c0_24] : memref<8x8x128xf32, #tpu.memory_space<vmem>>, vector<1x8x128xf32>
    %50 = vector.shape_cast %49 : vector<1x8x128xf32> to vector<8x128xf32>
    %51 = vector.shape_cast %47 : vector<8x128xf32> to vector<1x8x128xf32>
    tpu.vector_store %arg8[%48, %c0_23, %c0_24], %51 {strides = array<i32>} : memref<8x8x128xf32, #tpu.memory_space<vmem>>, vector<1x8x128xf32>,
    %c1_i32 = arith.constant 1 : i32
    %52 = arith.index_cast %c1_i32 : i32 to index
    %c0_25 = arith.constant 0 : index
    %c0_26 = arith.constant 0 : index
    %53 = vector.load %arg10[%52, %c0_25, %c0_26] : memref<8x8x384xf32, #tpu.memory_space<vmem>>, vector<1x8x384xf32>
    %54 = vector.shape_cast %53 : vector<1x8x384xf32> to vector<8x384xf32>
    %c0_27 = arith.constant 0 : index
    %c0_28 = arith.constant 0 : index
    %55 = vector.load %arg6[%c0_27, %c0_28] : memref<128x384xf32, #tpu.memory_space<vmem>>, vector<128x384xf32>
    %cst_29 = arith.constant dense<0.000000e+00> : vector<8x384xf32>
    %56 = tpu.matmul %47, %55, %cst_29 {dimension_numbers = #tpu.dot_dimension_numbers<[1], [0], [0], [1], [0, 0, 1, 1], [], []>} : vector<8x128xf32>, vector<128x384xf32>, vector<8x384xf32> -> vector<8x384xf32>
    %57 = vector.extract_strided_slice %54 {offsets = [0, 0], sizes = [8, 128], strides = [1, 1]} : vector<8x384xf32> to vector<8x128xf32>
    %58 = vector.extract_strided_slice %56 {offsets = [0, 0], sizes = [8, 128], strides = [1, 1]} : vector<8x384xf32> to vector<8x128xf32>
    %59 = arith.addf %57, %58 : vector<8x128xf32>
    %60 = arith.negf %59 : vector<8x128xf32>
    %61 = math.exp %60 : vector<8x128xf32>
    %cst_30 = arith.constant 1.000000e+00 : f32
    %62 = vector.broadcast %cst_30 : f32 to vector<8x128xf32>
    %63 = arith.addf %62, %61 : vector<8x128xf32>
    %64 = arith.divf %62, %63 : vector<8x128xf32>
    %65 = vector.extract_strided_slice %54 {offsets = [0, 128], sizes = [8, 128], strides = [1, 1]} : vector<8x384xf32> to vector<8x128xf32>
    %66 = vector.extract_strided_slice %56 {offsets = [0, 128], sizes = [8, 128], strides = [1, 1]} : vector<8x384xf32> to vector<8x128xf32>
    %67 = arith.addf %65, %66 : vector<8x128xf32>
    %68 = arith.negf %67 : vector<8x128xf32>
    %69 = math.exp %68 : vector<8x128xf32>
    %cst_31 = arith.constant 1.000000e+00 : f32
    %70 = vector.broadcast %cst_31 : f32 to vector<8x128xf32>
    %71 = arith.addf %70, %69 : vector<8x128xf32>
    %72 = arith.divf %70, %71 : vector<8x128xf32>
    %73 = vector.extract_strided_slice %54 {offsets = [0, 256], sizes = [8, 128], strides = [1, 1]} : vector<8x384xf32> to vector<8x128xf32>
    %74 = vector.extract_strided_slice %56 {offsets = [0, 256], sizes = [8, 128], strides = [1, 1]} : vector<8x384xf32> to vector<8x128xf32>
    %75 = arith.addf %74, %14 : vector<8x128xf32>
    %76 = arith.mulf %64, %75 : vector<8x128xf32>
    %77 = arith.addf %73, %76 : vector<8x128xf32>
    %78 = math.tanh %77 : vector<8x128xf32>
    %cst_32 = arith.constant 1.000000e+00 : f32
    %79 = vector.broadcast %cst_32 : f32 to vector<8x128xf32>
    %80 = arith.subf %79, %72 : vector<8x128xf32>
    %81 = arith.mulf %80, %78 : vector<8x128xf32>
    %82 = arith.mulf %72, %47 : vector<8x128xf32>
    %83 = arith.addf %81, %82 : vector<8x128xf32>
    %84 = arith.index_cast %c1_i32 : i32 to index
    %c0_33 = arith.constant 0 : index
    %c0_34 = arith.constant 0 : index
    %85 = vector.load %arg8[%84, %c0_33, %c0_34] : memref<8x8x128xf32, #tpu.memory_space<vmem>>, vector<1x8x128xf32>
    %86 = vector.shape_cast %85 : vector<1x8x128xf32> to vector<8x128xf32>
    %87 = vector.shape_cast %83 : vector<8x128xf32> to vector<1x8x128xf32>
    tpu.vector_store %arg8[%84, %c0_33, %c0_34], %87 {strides = array<i32>} : memref<8x8x128xf32, #tpu.memory_space<vmem>>, vector<1x8x128xf32>,
    %c2_i32 = arith.constant 2 : i32
    %88 = arith.index_cast %c2_i32 : i32 to index
    %c0_35 = arith.constant 0 : index
    %c0_36 = arith.constant 0 : index
    %89 = vector.load %arg10[%88, %c0_35, %c0_36] : memref<8x8x384xf32, #tpu.memory_space<vmem>>, vector<1x8x384xf32>
    %90 = vector.shape_cast %89 : vector<1x8x384xf32> to vector<8x384xf32>
    %c0_37 = arith.constant 0 : index
    %c0_38 = arith.constant 0 : index
    %91 = vector.load %arg6[%c0_37, %c0_38] : memref<128x384xf32, #tpu.memory_space<vmem>>, vector<128x384xf32>
    %cst_39 = arith.constant dense<0.000000e+00> : vector<8x384xf32>
    %92 = tpu.matmul %83, %91, %cst_39 {dimension_numbers = #tpu.dot_dimension_numbers<[1], [0], [0], [1], [0, 0, 1, 1], [], []>} : vector<8x128xf32>, vector<128x384xf32>, vector<8x384xf32> -> vector<8x384xf32>
    %93 = vector.extract_strided_slice %90 {offsets = [0, 0], sizes = [8, 128], strides = [1, 1]} : vector<8x384xf32> to vector<8x128xf32>
    %94 = vector.extract_strided_slice %92 {offsets = [0, 0], sizes = [8, 128], strides = [1, 1]} : vector<8x384xf32> to vector<8x128xf32>
    %95 = arith.addf %93, %94 : vector<8x128xf32>
    %96 = arith.negf %95 : vector<8x128xf32>
    %97 = math.exp %96 : vector<8x128xf32>
    %cst_40 = arith.constant 1.000000e+00 : f32
    %98 = vector.broadcast %cst_40 : f32 to vector<8x128xf32>
    %99 = arith.addf %98, %97 : vector<8x128xf32>
    %100 = arith.divf %98, %99 : vector<8x128xf32>
    %101 = vector.extract_strided_slice %90 {offsets = [0, 128], sizes = [8, 128], strides = [1, 1]} : vector<8x384xf32> to vector<8x128xf32>
    %102 = vector.extract_strided_slice %92 {offsets = [0, 128], sizes = [8, 128], strides = [1, 1]} : vector<8x384xf32> to vector<8x128xf32>
    %103 = arith.addf %101, %102 : vector<8x128xf32>
    %104 = arith.negf %103 : vector<8x128xf32>
    %105 = math.exp %104 : vector<8x128xf32>
    %cst_41 = arith.constant 1.000000e+00 : f32
    %106 = vector.broadcast %cst_41 : f32 to vector<8x128xf32>
    %107 = arith.addf %106, %105 : vector<8x128xf32>
    %108 = arith.divf %106, %107 : vector<8x128xf32>
    %109 = vector.extract_strided_slice %90 {offsets = [0, 256], sizes = [8, 128], strides = [1, 1]} : vector<8x384xf32> to vector<8x128xf32>
    %110 = vector.extract_strided_slice %92 {offsets = [0, 256], sizes = [8, 128], strides = [1, 1]} : vector<8x384xf32> to vector<8x128xf32>
    %111 = arith.addf %110, %14 : vector<8x128xf32>
    %112 = arith.mulf %100, %111 : vector<8x128xf32>
    %113 = arith.addf %109, %112 : vector<8x128xf32>
    %114 = math.tanh %113 : vector<8x128xf32>
    %cst_42 = arith.constant 1.000000e+00 : f32
    %115 = vector.broadcast %cst_42 : f32 to vector<8x128xf32>
    %116 = arith.subf %115, %108 : vector<8x128xf32>
    %117 = arith.mulf %116, %114 : vector<8x128xf32>
    %118 = arith.mulf %108, %83 : vector<8x128xf32>
    %119 = arith.addf %117, %118 : vector<8x128xf32>
    %120 = arith.index_cast %c2_i32 : i32 to index
    %c0_43 = arith.constant 0 : index
    %c0_44 = arith.constant 0 : index
    %121 = vector.load %arg8[%120, %c0_43, %c0_44] : memref<8x8x128xf32, #tpu.memory_space<vmem>>, vector<1x8x128xf32>
    %122 = vector.shape_cast %121 : vector<1x8x128xf32> to vector<8x128xf32>
    %123 = vector.shape_cast %119 : vector<8x128xf32> to vector<1x8x128xf32>
    tpu.vector_store %arg8[%120, %c0_43, %c0_44], %123 {strides = array<i32>} : memref<8x8x128xf32, #tpu.memory_space<vmem>>, vector<1x8x128xf32>,
    %c3_i32 = arith.constant 3 : i32
    %124 = arith.index_cast %c3_i32 : i32 to index
    %c0_45 = arith.constant 0 : index
    %c0_46 = arith.constant 0 : index
    %125 = vector.load %arg10[%124, %c0_45, %c0_46] : memref<8x8x384xf32, #tpu.memory_space<vmem>>, vector<1x8x384xf32>
    %126 = vector.shape_cast %125 : vector<1x8x384xf32> to vector<8x384xf32>
    %c0_47 = arith.constant 0 : index
    %c0_48 = arith.constant 0 : index
    %127 = vector.load %arg6[%c0_47, %c0_48] : memref<128x384xf32, #tpu.memory_space<vmem>>, vector<128x384xf32>
    %cst_49 = arith.constant dense<0.000000e+00> : vector<8x384xf32>
    %128 = tpu.matmul %119, %127, %cst_49 {dimension_numbers = #tpu.dot_dimension_numbers<[1], [0], [0], [1], [0, 0, 1, 1], [], []>} : vector<8x128xf32>, vector<128x384xf32>, vector<8x384xf32> -> vector<8x384xf32>
    %129 = vector.extract_strided_slice %126 {offsets = [0, 0], sizes = [8, 128], strides = [1, 1]} : vector<8x384xf32> to vector<8x128xf32>
    %130 = vector.extract_strided_slice %128 {offsets = [0, 0], sizes = [8, 128], strides = [1, 1]} : vector<8x384xf32> to vector<8x128xf32>
    %131 = arith.addf %129, %130 : vector<8x128xf32>
    %132 = arith.negf %131 : vector<8x128xf32>
    %133 = math.exp %132 : vector<8x128xf32>
    %cst_50 = arith.constant 1.000000e+00 : f32
    %134 = vector.broadcast %cst_50 : f32 to vector<8x128xf32>
    %135 = arith.addf %134, %133 : vector<8x128xf32>
    %136 = arith.divf %134, %135 : vector<8x128xf32>
    %137 = vector.extract_strided_slice %126 {offsets = [0, 128], sizes = [8, 128], strides = [1, 1]} : vector<8x384xf32> to vector<8x128xf32>
    %138 = vector.extract_strided_slice %128 {offsets = [0, 128], sizes = [8, 128], strides = [1, 1]} : vector<8x384xf32> to vector<8x128xf32>
    %139 = arith.addf %137, %138 : vector<8x128xf32>
    %140 = arith.negf %139 : vector<8x128xf32>
    %141 = math.exp %140 : vector<8x128xf32>
    %cst_51 = arith.constant 1.000000e+00 : f32
    %142 = vector.broadcast %cst_51 : f32 to vector<8x128xf32>
    %143 = arith.addf %142, %141 : vector<8x128xf32>
    %144 = arith.divf %142, %143 : vector<8x128xf32>
    %145 = vector.extract_strided_slice %126 {offsets = [0, 256], sizes = [8, 128], strides = [1, 1]} : vector<8x384xf32> to vector<8x128xf32>
    %146 = vector.extract_strided_slice %128 {offsets = [0, 256], sizes = [8, 128], strides = [1, 1]} : vector<8x384xf32> to vector<8x128xf32>
    %147 = arith.addf %146, %14 : vector<8x128xf32>
    %148 = arith.mulf %136, %147 : vector<8x128xf32>
    %149 = arith.addf %145, %148 : vector<8x128xf32>
    %150 = math.tanh %149 : vector<8x128xf32>
    %cst_52 = arith.constant 1.000000e+00 : f32
    %151 = vector.broadcast %cst_52 : f32 to vector<8x128xf32>
    %152 = arith.subf %151, %144 : vector<8x128xf32>
    %153 = arith.mulf %152, %150 : vector<8x128xf32>
    %154 = arith.mulf %144, %119 : vector<8x128xf32>
    %155 = arith.addf %153, %154 : vector<8x128xf32>
    %156 = arith.index_cast %c3_i32 : i32 to index
    %c0_53 = arith.constant 0 : index
    %c0_54 = arith.constant 0 : index
    %157 = vector.load %arg8[%156, %c0_53, %c0_54] : memref<8x8x128xf32, #tpu.memory_space<vmem>>, vector<1x8x128xf32>
    %158 = vector.shape_cast %157 : vector<1x8x128xf32> to vector<8x128xf32>
    %159 = vector.shape_cast %155 : vector<8x128xf32> to vector<1x8x128xf32>
    tpu.vector_store %arg8[%156, %c0_53, %c0_54], %159 {strides = array<i32>} : memref<8x8x128xf32, #tpu.memory_space<vmem>>, vector<1x8x128xf32>,
    %c4_i32 = arith.constant 4 : i32
    %160 = arith.index_cast %c4_i32 : i32 to index
    %c0_55 = arith.constant 0 : index
    %c0_56 = arith.constant 0 : index
    %161 = vector.load %arg10[%160, %c0_55, %c0_56] : memref<8x8x384xf32, #tpu.memory_space<vmem>>, vector<1x8x384xf32>
    %162 = vector.shape_cast %161 : vector<1x8x384xf32> to vector<8x384xf32>
    %c0_57 = arith.constant 0 : index
    %c0_58 = arith.constant 0 : index
    %163 = vector.load %arg6[%c0_57, %c0_58] : memref<128x384xf32, #tpu.memory_space<vmem>>, vector<128x384xf32>
    %cst_59 = arith.constant dense<0.000000e+00> : vector<8x384xf32>
    %164 = tpu.matmul %155, %163, %cst_59 {dimension_numbers = #tpu.dot_dimension_numbers<[1], [0], [0], [1], [0, 0, 1, 1], [], []>} : vector<8x128xf32>, vector<128x384xf32>, vector<8x384xf32> -> vector<8x384xf32>
    %165 = vector.extract_strided_slice %162 {offsets = [0, 0], sizes = [8, 128], strides = [1, 1]} : vector<8x384xf32> to vector<8x128xf32>
    %166 = vector.extract_strided_slice %164 {offsets = [0, 0], sizes = [8, 128], strides = [1, 1]} : vector<8x384xf32> to vector<8x128xf32>
    %167 = arith.addf %165, %166 : vector<8x128xf32>
    %168 = arith.negf %167 : vector<8x128xf32>
    %169 = math.exp %168 : vector<8x128xf32>
    %cst_60 = arith.constant 1.000000e+00 : f32
    %170 = vector.broadcast %cst_60 : f32 to vector<8x128xf32>
    %171 = arith.addf %170, %169 : vector<8x128xf32>
    %172 = arith.divf %170, %171 : vector<8x128xf32>
    %173 = vector.extract_strided_slice %162 {offsets = [0, 128], sizes = [8, 128], strides = [1, 1]} : vector<8x384xf32> to vector<8x128xf32>
    %174 = vector.extract_strided_slice %164 {offsets = [0, 128], sizes = [8, 128], strides = [1, 1]} : vector<8x384xf32> to vector<8x128xf32>
    %175 = arith.addf %173, %174 : vector<8x128xf32>
    %176 = arith.negf %175 : vector<8x128xf32>
    %177 = math.exp %176 : vector<8x128xf32>
    %cst_61 = arith.constant 1.000000e+00 : f32
    %178 = vector.broadcast %cst_61 : f32 to vector<8x128xf32>
    %179 = arith.addf %178, %177 : vector<8x128xf32>
    %180 = arith.divf %178, %179 : vector<8x128xf32>
    %181 = vector.extract_strided_slice %162 {offsets = [0, 256], sizes = [8, 128], strides = [1, 1]} : vector<8x384xf32> to vector<8x128xf32>
    %182 = vector.extract_strided_slice %164 {offsets = [0, 256], sizes = [8, 128], strides = [1, 1]} : vector<8x384xf32> to vector<8x128xf32>
    %183 = arith.addf %182, %14 : vector<8x128xf32>
    %184 = arith.mulf %172, %183 : vector<8x128xf32>
    %185 = arith.addf %181, %184 : vector<8x128xf32>
    %186 = math.tanh %185 : vector<8x128xf32>
    %cst_62 = arith.constant 1.000000e+00 : f32
    %187 = vector.broadcast %cst_62 : f32 to vector<8x128xf32>
    %188 = arith.subf %187, %180 : vector<8x128xf32>
    %189 = arith.mulf %188, %186 : vector<8x128xf32>
    %190 = arith.mulf %180, %155 : vector<8x128xf32>
    %191 = arith.addf %189, %190 : vector<8x128xf32>
    %192 = arith.index_cast %c4_i32 : i32 to index
    %c0_63 = arith.constant 0 : index
    %c0_64 = arith.constant 0 : index
    %193 = vector.load %arg8[%192, %c0_63, %c0_64] : memref<8x8x128xf32, #tpu.memory_space<vmem>>, vector<1x8x128xf32>
    %194 = vector.shape_cast %193 : vector<1x8x128xf32> to vector<8x128xf32>
    %195 = vector.shape_cast %191 : vector<8x128xf32> to vector<1x8x128xf32>
    tpu.vector_store %arg8[%192, %c0_63, %c0_64], %195 {strides = array<i32>} : memref<8x8x128xf32, #tpu.memory_space<vmem>>, vector<1x8x128xf32>,
    %c5_i32 = arith.constant 5 : i32
    %196 = arith.index_cast %c5_i32 : i32 to index
    %c0_65 = arith.constant 0 : index
    %c0_66 = arith.constant 0 : index
    %197 = vector.load %arg10[%196, %c0_65, %c0_66] : memref<8x8x384xf32, #tpu.memory_space<vmem>>, vector<1x8x384xf32>
    %198 = vector.shape_cast %197 : vector<1x8x384xf32> to vector<8x384xf32>
    %c0_67 = arith.constant 0 : index
    %c0_68 = arith.constant 0 : index
    %199 = vector.load %arg6[%c0_67, %c0_68] : memref<128x384xf32, #tpu.memory_space<vmem>>, vector<128x384xf32>
    %cst_69 = arith.constant dense<0.000000e+00> : vector<8x384xf32>
    %200 = tpu.matmul %191, %199, %cst_69 {dimension_numbers = #tpu.dot_dimension_numbers<[1], [0], [0], [1], [0, 0, 1, 1], [], []>} : vector<8x128xf32>, vector<128x384xf32>, vector<8x384xf32> -> vector<8x384xf32>
    %201 = vector.extract_strided_slice %198 {offsets = [0, 0], sizes = [8, 128], strides = [1, 1]} : vector<8x384xf32> to vector<8x128xf32>
    %202 = vector.extract_strided_slice %200 {offsets = [0, 0], sizes = [8, 128], strides = [1, 1]} : vector<8x384xf32> to vector<8x128xf32>
    %203 = arith.addf %201, %202 : vector<8x128xf32>
    %204 = arith.negf %203 : vector<8x128xf32>
    %205 = math.exp %204 : vector<8x128xf32>
    %cst_70 = arith.constant 1.000000e+00 : f32
    %206 = vector.broadcast %cst_70 : f32 to vector<8x128xf32>
    %207 = arith.addf %206, %205 : vector<8x128xf32>
    %208 = arith.divf %206, %207 : vector<8x128xf32>
    %209 = vector.extract_strided_slice %198 {offsets = [0, 128], sizes = [8, 128], strides = [1, 1]} : vector<8x384xf32> to vector<8x128xf32>
    %210 = vector.extract_strided_slice %200 {offsets = [0, 128], sizes = [8, 128], strides = [1, 1]} : vector<8x384xf32> to vector<8x128xf32>
    %211 = arith.addf %209, %210 : vector<8x128xf32>
    %212 = arith.negf %211 : vector<8x128xf32>
    %213 = math.exp %212 : vector<8x128xf32>
    %cst_71 = arith.constant 1.000000e+00 : f32
    %214 = vector.broadcast %cst_71 : f32 to vector<8x128xf32>
    %215 = arith.addf %214, %213 : vector<8x128xf32>
    %216 = arith.divf %214, %215 : vector<8x128xf32>
    %217 = vector.extract_strided_slice %198 {offsets = [0, 256], sizes = [8, 128], strides = [1, 1]} : vector<8x384xf32> to vector<8x128xf32>
    %218 = vector.extract_strided_slice %200 {offsets = [0, 256], sizes = [8, 128], strides = [1, 1]} : vector<8x384xf32> to vector<8x128xf32>
    %219 = arith.addf %218, %14 : vector<8x128xf32>
    %220 = arith.mulf %208, %219 : vector<8x128xf32>
    %221 = arith.addf %217, %220 : vector<8x128xf32>
    %222 = math.tanh %221 : vector<8x128xf32>
    %cst_72 = arith.constant 1.000000e+00 : f32
    %223 = vector.broadcast %cst_72 : f32 to vector<8x128xf32>
    %224 = arith.subf %223, %216 : vector<8x128xf32>
    %225 = arith.mulf %224, %222 : vector<8x128xf32>
    %226 = arith.mulf %216, %191 : vector<8x128xf32>
    %227 = arith.addf %225, %226 : vector<8x128xf32>
    %228 = arith.index_cast %c5_i32 : i32 to index
    %c0_73 = arith.constant 0 : index
    %c0_74 = arith.constant 0 : index
    %229 = vector.load %arg8[%228, %c0_73, %c0_74] : memref<8x8x128xf32, #tpu.memory_space<vmem>>, vector<1x8x128xf32>
    %230 = vector.shape_cast %229 : vector<1x8x128xf32> to vector<8x128xf32>
    %231 = vector.shape_cast %227 : vector<8x128xf32> to vector<1x8x128xf32>
    tpu.vector_store %arg8[%228, %c0_73, %c0_74], %231 {strides = array<i32>} : memref<8x8x128xf32, #tpu.memory_space<vmem>>, vector<1x8x128xf32>,
    %c6_i32 = arith.constant 6 : i32
    %232 = arith.index_cast %c6_i32 : i32 to index
    %c0_75 = arith.constant 0 : index
    %c0_76 = arith.constant 0 : index
    %233 = vector.load %arg10[%232, %c0_75, %c0_76] : memref<8x8x384xf32, #tpu.memory_space<vmem>>, vector<1x8x384xf32>
    %234 = vector.shape_cast %233 : vector<1x8x384xf32> to vector<8x384xf32>
    %c0_77 = arith.constant 0 : index
    %c0_78 = arith.constant 0 : index
    %235 = vector.load %arg6[%c0_77, %c0_78] : memref<128x384xf32, #tpu.memory_space<vmem>>, vector<128x384xf32>
    %cst_79 = arith.constant dense<0.000000e+00> : vector<8x384xf32>
    %236 = tpu.matmul %227, %235, %cst_79 {dimension_numbers = #tpu.dot_dimension_numbers<[1], [0], [0], [1], [0, 0, 1, 1], [], []>} : vector<8x128xf32>, vector<128x384xf32>, vector<8x384xf32> -> vector<8x384xf32>
    %237 = vector.extract_strided_slice %234 {offsets = [0, 0], sizes = [8, 128], strides = [1, 1]} : vector<8x384xf32> to vector<8x128xf32>
    %238 = vector.extract_strided_slice %236 {offsets = [0, 0], sizes = [8, 128], strides = [1, 1]} : vector<8x384xf32> to vector<8x128xf32>
    %239 = arith.addf %237, %238 : vector<8x128xf32>
    %240 = arith.negf %239 : vector<8x128xf32>
    %241 = math.exp %240 : vector<8x128xf32>
    %cst_80 = arith.constant 1.000000e+00 : f32
    %242 = vector.broadcast %cst_80 : f32 to vector<8x128xf32>
    %243 = arith.addf %242, %241 : vector<8x128xf32>
    %244 = arith.divf %242, %243 : vector<8x128xf32>
    %245 = vector.extract_strided_slice %234 {offsets = [0, 128], sizes = [8, 128], strides = [1, 1]} : vector<8x384xf32> to vector<8x128xf32>
    %246 = vector.extract_strided_slice %236 {offsets = [0, 128], sizes = [8, 128], strides = [1, 1]} : vector<8x384xf32> to vector<8x128xf32>
    %247 = arith.addf %245, %246 : vector<8x128xf32>
    %248 = arith.negf %247 : vector<8x128xf32>
    %249 = math.exp %248 : vector<8x128xf32>
    %cst_81 = arith.constant 1.000000e+00 : f32
    %250 = vector.broadcast %cst_81 : f32 to vector<8x128xf32>
    %251 = arith.addf %250, %249 : vector<8x128xf32>
    %252 = arith.divf %250, %251 : vector<8x128xf32>
    %253 = vector.extract_strided_slice %234 {offsets = [0, 256], sizes = [8, 128], strides = [1, 1]} : vector<8x384xf32> to vector<8x128xf32>
    %254 = vector.extract_strided_slice %236 {offsets = [0, 256], sizes = [8, 128], strides = [1, 1]} : vector<8x384xf32> to vector<8x128xf32>
    %255 = arith.addf %254, %14 : vector<8x128xf32>
    %256 = arith.mulf %244, %255 : vector<8x128xf32>
    %257 = arith.addf %253, %256 : vector<8x128xf32>
    %258 = math.tanh %257 : vector<8x128xf32>
    %cst_82 = arith.constant 1.000000e+00 : f32
    %259 = vector.broadcast %cst_82 : f32 to vector<8x128xf32>
    %260 = arith.subf %259, %252 : vector<8x128xf32>
    %261 = arith.mulf %260, %258 : vector<8x128xf32>
    %262 = arith.mulf %252, %227 : vector<8x128xf32>
    %263 = arith.addf %261, %262 : vector<8x128xf32>
    %264 = arith.index_cast %c6_i32 : i32 to index
    %c0_83 = arith.constant 0 : index
    %c0_84 = arith.constant 0 : index
    %265 = vector.load %arg8[%264, %c0_83, %c0_84] : memref<8x8x128xf32, #tpu.memory_space<vmem>>, vector<1x8x128xf32>
    %266 = vector.shape_cast %265 : vector<1x8x128xf32> to vector<8x128xf32>
    %267 = vector.shape_cast %263 : vector<8x128xf32> to vector<1x8x128xf32>
    tpu.vector_store %arg8[%264, %c0_83, %c0_84], %267 {strides = array<i32>} : memref<8x8x128xf32, #tpu.memory_space<vmem>>, vector<1x8x128xf32>,
    %c7_i32 = arith.constant 7 : i32
    %268 = arith.index_cast %c7_i32 : i32 to index
    %c0_85 = arith.constant 0 : index
    %c0_86 = arith.constant 0 : index
    %269 = vector.load %arg10[%268, %c0_85, %c0_86] : memref<8x8x384xf32, #tpu.memory_space<vmem>>, vector<1x8x384xf32>
    %270 = vector.shape_cast %269 : vector<1x8x384xf32> to vector<8x384xf32>
    %c0_87 = arith.constant 0 : index
    %c0_88 = arith.constant 0 : index
    %271 = vector.load %arg6[%c0_87, %c0_88] : memref<128x384xf32, #tpu.memory_space<vmem>>, vector<128x384xf32>
    %cst_89 = arith.constant dense<0.000000e+00> : vector<8x384xf32>
    %272 = tpu.matmul %263, %271, %cst_89 {dimension_numbers = #tpu.dot_dimension_numbers<[1], [0], [0], [1], [0, 0, 1, 1], [], []>} : vector<8x128xf32>, vector<128x384xf32>, vector<8x384xf32> -> vector<8x384xf32>
    %273 = vector.extract_strided_slice %270 {offsets = [0, 0], sizes = [8, 128], strides = [1, 1]} : vector<8x384xf32> to vector<8x128xf32>
    %274 = vector.extract_strided_slice %272 {offsets = [0, 0], sizes = [8, 128], strides = [1, 1]} : vector<8x384xf32> to vector<8x128xf32>
    %275 = arith.addf %273, %274 : vector<8x128xf32>
    %276 = arith.negf %275 : vector<8x128xf32>
    %277 = math.exp %276 : vector<8x128xf32>
    %cst_90 = arith.constant 1.000000e+00 : f32
    %278 = vector.broadcast %cst_90 : f32 to vector<8x128xf32>
    %279 = arith.addf %278, %277 : vector<8x128xf32>
    %280 = arith.divf %278, %279 : vector<8x128xf32>
    %281 = vector.extract_strided_slice %270 {offsets = [0, 128], sizes = [8, 128], strides = [1, 1]} : vector<8x384xf32> to vector<8x128xf32>
    %282 = vector.extract_strided_slice %272 {offsets = [0, 128], sizes = [8, 128], strides = [1, 1]} : vector<8x384xf32> to vector<8x128xf32>
    %283 = arith.addf %281, %282 : vector<8x128xf32>
    %284 = arith.negf %283 : vector<8x128xf32>
    %285 = math.exp %284 : vector<8x128xf32>
    %cst_91 = arith.constant 1.000000e+00 : f32
    %286 = vector.broadcast %cst_91 : f32 to vector<8x128xf32>
    %287 = arith.addf %286, %285 : vector<8x128xf32>
    %288 = arith.divf %286, %287 : vector<8x128xf32>
    %289 = vector.extract_strided_slice %270 {offsets = [0, 256], sizes = [8, 128], strides = [1, 1]} : vector<8x384xf32> to vector<8x128xf32>
    %290 = vector.extract_strided_slice %272 {offsets = [0, 256], sizes = [8, 128], strides = [1, 1]} : vector<8x384xf32> to vector<8x128xf32>
    %291 = arith.addf %290, %14 : vector<8x128xf32>
    %292 = arith.mulf %280, %291 : vector<8x128xf32>
    %293 = arith.addf %289, %292 : vector<8x128xf32>
    %294 = math.tanh %293 : vector<8x128xf32>
    %cst_92 = arith.constant 1.000000e+00 : f32
    %295 = vector.broadcast %cst_92 : f32 to vector<8x128xf32>
    %296 = arith.subf %295, %288 : vector<8x128xf32>
    %297 = arith.mulf %296, %294 : vector<8x128xf32>
    %298 = arith.mulf %288, %263 : vector<8x128xf32>
    %299 = arith.addf %297, %298 : vector<8x128xf32>
    %300 = arith.index_cast %c7_i32 : i32 to index
    %c0_93 = arith.constant 0 : index
    %c0_94 = arith.constant 0 : index
    %301 = vector.load %arg8[%300, %c0_93, %c0_94] : memref<8x8x128xf32, #tpu.memory_space<vmem>>, vector<1x8x128xf32>
    %302 = vector.shape_cast %301 : vector<1x8x128xf32> to vector<8x128xf32>
    %303 = vector.shape_cast %299 : vector<8x128xf32> to vector<1x8x128xf32>
    tpu.vector_store %arg8[%300, %c0_93, %c0_94], %303 {strides = array<i32>} : memref<8x8x128xf32, #tpu.memory_space<vmem>>, vector<1x8x128xf32>,
    %c8_i32 = arith.constant 8 : i32
    %c0_95 = arith.constant 0 : index
    %c0_96 = arith.constant 0 : index
    %304 = vector.load %arg9[%c0_95, %c0_96] : memref<8x128xf32, #tpu.memory_space<vmem>>, vector<8x128xf32>
    tpu.vector_store %arg9[%c0_95, %c0_96], %299 {strides = array<i32>} : memref<8x128xf32, #tpu.memory_space<vmem>>, vector<8x128xf32>,
    return
  }
  func.func @transform_0(%arg0: i32, %arg1: i32) -> (i32, i32, i32) {
    %c0_i32 = arith.constant 0 : i32
    %c0_i32_0 = arith.constant 0 : i32
    return %arg1, %arg0, %c0_i32 : i32, i32, i32
  }
  func.func @transform_1(%arg0: i32, %arg1: i32) -> (i32, i32) {
    %c0_i32 = arith.constant 0 : i32
    %c0_i32_0 = arith.constant 0 : i32
    return %arg0, %c0_i32 : i32, i32
  }
  func.func @transform_2(%arg0: i32, %arg1: i32) -> (i32, i32) {
    %c0_i32 = arith.constant 0 : i32
    %c0_i32_0 = arith.constant 0 : i32
    %c0_i32_1 = arith.constant 0 : i32
    return %c0_i32, %c0_i32_0 : i32, i32
  }
  func.func @transform_3(%arg0: i32, %arg1: i32) -> (i32, i32) {
    %c0_i32 = arith.constant 0 : i32
    %c0_i32_0 = arith.constant 0 : i32
    %c0_i32_1 = arith.constant 0 : i32
    return %c0_i32, %c0_i32_0 : i32, i32
  }
  func.func @transform_4(%arg0: i32, %arg1: i32) -> (i32, i32) {
    %c0_i32 = arith.constant 0 : i32
    %c0_i32_0 = arith.constant 0 : i32
    %c0_i32_1 = arith.constant 0 : i32
    return %c0_i32, %c0_i32_0 : i32, i32
  }
  func.func @transform_5(%arg0: i32, %arg1: i32) -> (i32, i32) {
    %c0_i32 = arith.constant 0 : i32
    %c0_i32_0 = arith.constant 0 : i32
    %c0_i32_1 = arith.constant 0 : i32
    return %c0_i32, %c0_i32_0 : i32, i32
  }
  func.func @transform_6(%arg0: i32, %arg1: i32) -> (i32, i32, i32) {
    %c0_i32 = arith.constant 0 : i32
    %c0_i32_0 = arith.constant 0 : i32
    return %arg1, %arg0, %c0_i32 : i32, i32, i32
  }
}

module attributes {stable_mosaic.version = 11 : i64} {
  func.func @_gru_layer_kernel(%arg0: i32, %arg1: i32, %arg2: memref<8x8x16xf32, #tpu.memory_space<vmem>>, %arg3: memref<8x128xf32, #tpu.memory_space<vmem>>, %arg4: memref<16x384xf32, #tpu.memory_space<vmem>>, %arg5: memref<1x384xf32, #tpu.memory_space<vmem>>, %arg6: memref<128x384xf32, #tpu.memory_space<vmem>>, %arg7: memref<1x128xf32, #tpu.memory_space<vmem>>, %arg8: memref<8x8x128xf32, #tpu.memory_space<vmem>>, %arg9: memref<8x128xf32, #tpu.memory_space<vmem>>, %arg10: memref<8x8x384xf32, #tpu.memory_space<vmem>>) attributes {dimension_semantics = [#tpu.dimension_semantics<parallel>, #tpu.dimension_semantics<arbitrary>], iteration_bounds = array<i64: 1, 1>, scalar_prefetch = 0 : i64, scratch_operands = 2 : i64, tpu.core_type = #tpu.core_type<tc>, window_params = [{transform_indices = @transform_0, window_bounds = array<i64: 8, 8, 16>}, {transform_indices = @transform_1, window_bounds = array<i64: 8, 128>}, {pipeline_mode = #tpu.pipeline_mode<synchronous>, transform_indices = @transform_2, window_bounds = array<i64: 16, 384>}, {pipeline_mode = #tpu.pipeline_mode<synchronous>, transform_indices = @transform_3, window_bounds = array<i64: 1, 384>}, {pipeline_mode = #tpu.pipeline_mode<synchronous>, transform_indices = @transform_4, window_bounds = array<i64: 128, 384>}, {pipeline_mode = #tpu.pipeline_mode<synchronous>, transform_indices = @transform_5, window_bounds = array<i64: 1, 128>}, {transform_indices = @transform_6, window_bounds = array<i64: 8, 8, 128>}]} {
    %c0_i32 = arith.constant 0 : i32
    %0 = arith.cmpi eq, %arg1, %c0_i32 : i32
    %1 = arith.extui %0 : i1 to i32
    %c0_i32_0 = arith.constant 0 : i32
    %2 = arith.cmpi ne, %1, %c0_i32_0 : i32
    scf.if %2 {
      %c0_105 = arith.constant 0 : index
      %c0_106 = arith.constant 0 : index
      %313 = vector.load %arg3[%c0_105, %c0_106] : memref<8x128xf32, #tpu.memory_space<vmem>>, vector<8x128xf32>
      %c0_107 = arith.constant 0 : index
      %c0_108 = arith.constant 0 : index
      %314 = vector.load %arg9[%c0_107, %c0_108] : memref<8x128xf32, #tpu.memory_space<vmem>>, vector<8x128xf32>
      tpu.vector_store %arg9[%c0_107, %c0_108], %313 {strides = array<i32>} : memref<8x128xf32, #tpu.memory_space<vmem>>, vector<8x128xf32>,
    } else {
    }
    %c0 = arith.constant 0 : index
    %c0_1 = arith.constant 0 : index
    %c0_2 = arith.constant 0 : index
    %3 = vector.load %arg2[%c0, %c0_1, %c0_2] : memref<8x8x16xf32, #tpu.memory_space<vmem>>, vector<8x8x16xf32>
    %4 = vector.shape_cast %3 : vector<8x8x16xf32> to vector<64x16xf32>
    %c0_3 = arith.constant 0 : index
    %c0_4 = arith.constant 0 : index
    %5 = vector.load %arg4[%c0_3, %c0_4] : memref<16x384xf32, #tpu.memory_space<vmem>>, vector<16x384xf32>
    %cst = arith.constant dense<0.000000e+00> : vector<64x384xf32>
    %6 = tpu.matmul %4, %5, %cst {dimension_numbers = #tpu.dot_dimension_numbers<[1], [0], [0], [1], [0, 0, 1, 1], [], []>} : vector<64x16xf32>, vector<16x384xf32>, vector<64x384xf32> -> vector<64x384xf32>
    %c0_5 = arith.constant 0 : index
    %c0_6 = arith.constant 0 : index
    %7 = vector.load %arg5[%c0_5, %c0_6] : memref<1x384xf32, #tpu.memory_space<vmem>>, vector<1x384xf32>
    %8 = vector.broadcast %7 : vector<1x384xf32> to vector<64x384xf32>
    %9 = arith.addf %6, %8 : vector<64x384xf32>
    %10 = vector.shape_cast %9 : vector<64x384xf32> to vector<8x8x384xf32>
    %c0_7 = arith.constant 0 : index
    %c0_8 = arith.constant 0 : index
    %c0_9 = arith.constant 0 : index
    %11 = vector.load %arg10[%c0_7, %c0_8, %c0_9] : memref<8x8x384xf32, #tpu.memory_space<vmem>>, vector<8x8x384xf32>
    tpu.vector_store %arg10[%c0_7, %c0_8, %c0_9], %10 {strides = array<i32>} : memref<8x8x384xf32, #tpu.memory_space<vmem>>, vector<8x8x384xf32>,
    %c0_10 = arith.constant 0 : index
    %c0_11 = arith.constant 0 : index
    %12 = vector.load %arg7[%c0_10, %c0_11] : memref<1x128xf32, #tpu.memory_space<vmem>>, vector<1x128xf32>
    %13 = vector.shape_cast %12 : vector<1x128xf32> to vector<1x128xf32>
    %14 = vector.broadcast %13 : vector<1x128xf32> to vector<8x128xf32>
    %c0_12 = arith.constant 0 : index
    %c0_13 = arith.constant 0 : index
    %15 = vector.load %arg9[%c0_12, %c0_13] : memref<8x128xf32, #tpu.memory_space<vmem>>, vector<8x128xf32>
    %c0_i32_14 = arith.constant 0 : i32
    %c7_i32 = arith.constant 7 : i32
    %16 = arith.subi %c7_i32, %c0_i32_14 : i32
    %17 = arith.index_cast %16 : i32 to index
    %c0_15 = arith.constant 0 : index
    %c0_16 = arith.constant 0 : index
    %18 = vector.load %arg10[%17, %c0_15, %c0_16] : memref<8x8x384xf32, #tpu.memory_space<vmem>>, vector<1x8x384xf32>
    %19 = vector.shape_cast %18 : vector<1x8x384xf32> to vector<8x384xf32>
    %c0_17 = arith.constant 0 : index
    %c0_18 = arith.constant 0 : index
    %20 = vector.load %arg6[%c0_17, %c0_18] : memref<128x384xf32, #tpu.memory_space<vmem>>, vector<128x384xf32>
    %cst_19 = arith.constant dense<0.000000e+00> : vector<8x384xf32>
    %21 = tpu.matmul %15, %20, %cst_19 {dimension_numbers = #tpu.dot_dimension_numbers<[1], [0], [0], [1], [0, 0, 1, 1], [], []>} : vector<8x128xf32>, vector<128x384xf32>, vector<8x384xf32> -> vector<8x384xf32>
    %22 = vector.extract_strided_slice %19 {offsets = [0, 0], sizes = [8, 128], strides = [1, 1]} : vector<8x384xf32> to vector<8x128xf32>
    %23 = vector.extract_strided_slice %21 {offsets = [0, 0], sizes = [8, 128], strides = [1, 1]} : vector<8x384xf32> to vector<8x128xf32>
    %24 = arith.addf %22, %23 : vector<8x128xf32>
    %25 = arith.negf %24 : vector<8x128xf32>
    %26 = math.exp %25 : vector<8x128xf32>
    %cst_20 = arith.constant 1.000000e+00 : f32
    %27 = vector.broadcast %cst_20 : f32 to vector<8x128xf32>
    %28 = arith.addf %27, %26 : vector<8x128xf32>
    %29 = arith.divf %27, %28 : vector<8x128xf32>
    %30 = vector.extract_strided_slice %19 {offsets = [0, 128], sizes = [8, 128], strides = [1, 1]} : vector<8x384xf32> to vector<8x128xf32>
    %31 = vector.extract_strided_slice %21 {offsets = [0, 128], sizes = [8, 128], strides = [1, 1]} : vector<8x384xf32> to vector<8x128xf32>
    %32 = arith.addf %30, %31 : vector<8x128xf32>
    %33 = arith.negf %32 : vector<8x128xf32>
    %34 = math.exp %33 : vector<8x128xf32>
    %cst_21 = arith.constant 1.000000e+00 : f32
    %35 = vector.broadcast %cst_21 : f32 to vector<8x128xf32>
    %36 = arith.addf %35, %34 : vector<8x128xf32>
    %37 = arith.divf %35, %36 : vector<8x128xf32>
    %38 = vector.extract_strided_slice %19 {offsets = [0, 256], sizes = [8, 128], strides = [1, 1]} : vector<8x384xf32> to vector<8x128xf32>
    %39 = vector.extract_strided_slice %21 {offsets = [0, 256], sizes = [8, 128], strides = [1, 1]} : vector<8x384xf32> to vector<8x128xf32>
    %40 = arith.addf %39, %14 : vector<8x128xf32>
    %41 = arith.mulf %29, %40 : vector<8x128xf32>
    %42 = arith.addf %38, %41 : vector<8x128xf32>
    %43 = math.tanh %42 : vector<8x128xf32>
    %cst_22 = arith.constant 1.000000e+00 : f32
    %44 = vector.broadcast %cst_22 : f32 to vector<8x128xf32>
    %45 = arith.subf %44, %37 : vector<8x128xf32>
    %46 = arith.mulf %45, %43 : vector<8x128xf32>
    %47 = arith.mulf %37, %15 : vector<8x128xf32>
    %48 = arith.addf %46, %47 : vector<8x128xf32>
    %49 = arith.index_cast %16 : i32 to index
    %c0_23 = arith.constant 0 : index
    %c0_24 = arith.constant 0 : index
    %50 = vector.load %arg8[%49, %c0_23, %c0_24] : memref<8x8x128xf32, #tpu.memory_space<vmem>>, vector<1x8x128xf32>
    %51 = vector.shape_cast %50 : vector<1x8x128xf32> to vector<8x128xf32>
    %52 = vector.shape_cast %48 : vector<8x128xf32> to vector<1x8x128xf32>
    tpu.vector_store %arg8[%49, %c0_23, %c0_24], %52 {strides = array<i32>} : memref<8x8x128xf32, #tpu.memory_space<vmem>>, vector<1x8x128xf32>,
    %c1_i32 = arith.constant 1 : i32
    %c7_i32_25 = arith.constant 7 : i32
    %53 = arith.subi %c7_i32_25, %c1_i32 : i32
    %54 = arith.index_cast %53 : i32 to index
    %c0_26 = arith.constant 0 : index
    %c0_27 = arith.constant 0 : index
    %55 = vector.load %arg10[%54, %c0_26, %c0_27] : memref<8x8x384xf32, #tpu.memory_space<vmem>>, vector<1x8x384xf32>
    %56 = vector.shape_cast %55 : vector<1x8x384xf32> to vector<8x384xf32>
    %c0_28 = arith.constant 0 : index
    %c0_29 = arith.constant 0 : index
    %57 = vector.load %arg6[%c0_28, %c0_29] : memref<128x384xf32, #tpu.memory_space<vmem>>, vector<128x384xf32>
    %cst_30 = arith.constant dense<0.000000e+00> : vector<8x384xf32>
    %58 = tpu.matmul %48, %57, %cst_30 {dimension_numbers = #tpu.dot_dimension_numbers<[1], [0], [0], [1], [0, 0, 1, 1], [], []>} : vector<8x128xf32>, vector<128x384xf32>, vector<8x384xf32> -> vector<8x384xf32>
    %59 = vector.extract_strided_slice %56 {offsets = [0, 0], sizes = [8, 128], strides = [1, 1]} : vector<8x384xf32> to vector<8x128xf32>
    %60 = vector.extract_strided_slice %58 {offsets = [0, 0], sizes = [8, 128], strides = [1, 1]} : vector<8x384xf32> to vector<8x128xf32>
    %61 = arith.addf %59, %60 : vector<8x128xf32>
    %62 = arith.negf %61 : vector<8x128xf32>
    %63 = math.exp %62 : vector<8x128xf32>
    %cst_31 = arith.constant 1.000000e+00 : f32
    %64 = vector.broadcast %cst_31 : f32 to vector<8x128xf32>
    %65 = arith.addf %64, %63 : vector<8x128xf32>
    %66 = arith.divf %64, %65 : vector<8x128xf32>
    %67 = vector.extract_strided_slice %56 {offsets = [0, 128], sizes = [8, 128], strides = [1, 1]} : vector<8x384xf32> to vector<8x128xf32>
    %68 = vector.extract_strided_slice %58 {offsets = [0, 128], sizes = [8, 128], strides = [1, 1]} : vector<8x384xf32> to vector<8x128xf32>
    %69 = arith.addf %67, %68 : vector<8x128xf32>
    %70 = arith.negf %69 : vector<8x128xf32>
    %71 = math.exp %70 : vector<8x128xf32>
    %cst_32 = arith.constant 1.000000e+00 : f32
    %72 = vector.broadcast %cst_32 : f32 to vector<8x128xf32>
    %73 = arith.addf %72, %71 : vector<8x128xf32>
    %74 = arith.divf %72, %73 : vector<8x128xf32>
    %75 = vector.extract_strided_slice %56 {offsets = [0, 256], sizes = [8, 128], strides = [1, 1]} : vector<8x384xf32> to vector<8x128xf32>
    %76 = vector.extract_strided_slice %58 {offsets = [0, 256], sizes = [8, 128], strides = [1, 1]} : vector<8x384xf32> to vector<8x128xf32>
    %77 = arith.addf %76, %14 : vector<8x128xf32>
    %78 = arith.mulf %66, %77 : vector<8x128xf32>
    %79 = arith.addf %75, %78 : vector<8x128xf32>
    %80 = math.tanh %79 : vector<8x128xf32>
    %cst_33 = arith.constant 1.000000e+00 : f32
    %81 = vector.broadcast %cst_33 : f32 to vector<8x128xf32>
    %82 = arith.subf %81, %74 : vector<8x128xf32>
    %83 = arith.mulf %82, %80 : vector<8x128xf32>
    %84 = arith.mulf %74, %48 : vector<8x128xf32>
    %85 = arith.addf %83, %84 : vector<8x128xf32>
    %86 = arith.index_cast %53 : i32 to index
    %c0_34 = arith.constant 0 : index
    %c0_35 = arith.constant 0 : index
    %87 = vector.load %arg8[%86, %c0_34, %c0_35] : memref<8x8x128xf32, #tpu.memory_space<vmem>>, vector<1x8x128xf32>
    %88 = vector.shape_cast %87 : vector<1x8x128xf32> to vector<8x128xf32>
    %89 = vector.shape_cast %85 : vector<8x128xf32> to vector<1x8x128xf32>
    tpu.vector_store %arg8[%86, %c0_34, %c0_35], %89 {strides = array<i32>} : memref<8x8x128xf32, #tpu.memory_space<vmem>>, vector<1x8x128xf32>,
    %c2_i32 = arith.constant 2 : i32
    %c7_i32_36 = arith.constant 7 : i32
    %90 = arith.subi %c7_i32_36, %c2_i32 : i32
    %91 = arith.index_cast %90 : i32 to index
    %c0_37 = arith.constant 0 : index
    %c0_38 = arith.constant 0 : index
    %92 = vector.load %arg10[%91, %c0_37, %c0_38] : memref<8x8x384xf32, #tpu.memory_space<vmem>>, vector<1x8x384xf32>
    %93 = vector.shape_cast %92 : vector<1x8x384xf32> to vector<8x384xf32>
    %c0_39 = arith.constant 0 : index
    %c0_40 = arith.constant 0 : index
    %94 = vector.load %arg6[%c0_39, %c0_40] : memref<128x384xf32, #tpu.memory_space<vmem>>, vector<128x384xf32>
    %cst_41 = arith.constant dense<0.000000e+00> : vector<8x384xf32>
    %95 = tpu.matmul %85, %94, %cst_41 {dimension_numbers = #tpu.dot_dimension_numbers<[1], [0], [0], [1], [0, 0, 1, 1], [], []>} : vector<8x128xf32>, vector<128x384xf32>, vector<8x384xf32> -> vector<8x384xf32>
    %96 = vector.extract_strided_slice %93 {offsets = [0, 0], sizes = [8, 128], strides = [1, 1]} : vector<8x384xf32> to vector<8x128xf32>
    %97 = vector.extract_strided_slice %95 {offsets = [0, 0], sizes = [8, 128], strides = [1, 1]} : vector<8x384xf32> to vector<8x128xf32>
    %98 = arith.addf %96, %97 : vector<8x128xf32>
    %99 = arith.negf %98 : vector<8x128xf32>
    %100 = math.exp %99 : vector<8x128xf32>
    %cst_42 = arith.constant 1.000000e+00 : f32
    %101 = vector.broadcast %cst_42 : f32 to vector<8x128xf32>
    %102 = arith.addf %101, %100 : vector<8x128xf32>
    %103 = arith.divf %101, %102 : vector<8x128xf32>
    %104 = vector.extract_strided_slice %93 {offsets = [0, 128], sizes = [8, 128], strides = [1, 1]} : vector<8x384xf32> to vector<8x128xf32>
    %105 = vector.extract_strided_slice %95 {offsets = [0, 128], sizes = [8, 128], strides = [1, 1]} : vector<8x384xf32> to vector<8x128xf32>
    %106 = arith.addf %104, %105 : vector<8x128xf32>
    %107 = arith.negf %106 : vector<8x128xf32>
    %108 = math.exp %107 : vector<8x128xf32>
    %cst_43 = arith.constant 1.000000e+00 : f32
    %109 = vector.broadcast %cst_43 : f32 to vector<8x128xf32>
    %110 = arith.addf %109, %108 : vector<8x128xf32>
    %111 = arith.divf %109, %110 : vector<8x128xf32>
    %112 = vector.extract_strided_slice %93 {offsets = [0, 256], sizes = [8, 128], strides = [1, 1]} : vector<8x384xf32> to vector<8x128xf32>
    %113 = vector.extract_strided_slice %95 {offsets = [0, 256], sizes = [8, 128], strides = [1, 1]} : vector<8x384xf32> to vector<8x128xf32>
    %114 = arith.addf %113, %14 : vector<8x128xf32>
    %115 = arith.mulf %103, %114 : vector<8x128xf32>
    %116 = arith.addf %112, %115 : vector<8x128xf32>
    %117 = math.tanh %116 : vector<8x128xf32>
    %cst_44 = arith.constant 1.000000e+00 : f32
    %118 = vector.broadcast %cst_44 : f32 to vector<8x128xf32>
    %119 = arith.subf %118, %111 : vector<8x128xf32>
    %120 = arith.mulf %119, %117 : vector<8x128xf32>
    %121 = arith.mulf %111, %85 : vector<8x128xf32>
    %122 = arith.addf %120, %121 : vector<8x128xf32>
    %123 = arith.index_cast %90 : i32 to index
    %c0_45 = arith.constant 0 : index
    %c0_46 = arith.constant 0 : index
    %124 = vector.load %arg8[%123, %c0_45, %c0_46] : memref<8x8x128xf32, #tpu.memory_space<vmem>>, vector<1x8x128xf32>
    %125 = vector.shape_cast %124 : vector<1x8x128xf32> to vector<8x128xf32>
    %126 = vector.shape_cast %122 : vector<8x128xf32> to vector<1x8x128xf32>
    tpu.vector_store %arg8[%123, %c0_45, %c0_46], %126 {strides = array<i32>} : memref<8x8x128xf32, #tpu.memory_space<vmem>>, vector<1x8x128xf32>,
    %c3_i32 = arith.constant 3 : i32
    %c7_i32_47 = arith.constant 7 : i32
    %127 = arith.subi %c7_i32_47, %c3_i32 : i32
    %128 = arith.index_cast %127 : i32 to index
    %c0_48 = arith.constant 0 : index
    %c0_49 = arith.constant 0 : index
    %129 = vector.load %arg10[%128, %c0_48, %c0_49] : memref<8x8x384xf32, #tpu.memory_space<vmem>>, vector<1x8x384xf32>
    %130 = vector.shape_cast %129 : vector<1x8x384xf32> to vector<8x384xf32>
    %c0_50 = arith.constant 0 : index
    %c0_51 = arith.constant 0 : index
    %131 = vector.load %arg6[%c0_50, %c0_51] : memref<128x384xf32, #tpu.memory_space<vmem>>, vector<128x384xf32>
    %cst_52 = arith.constant dense<0.000000e+00> : vector<8x384xf32>
    %132 = tpu.matmul %122, %131, %cst_52 {dimension_numbers = #tpu.dot_dimension_numbers<[1], [0], [0], [1], [0, 0, 1, 1], [], []>} : vector<8x128xf32>, vector<128x384xf32>, vector<8x384xf32> -> vector<8x384xf32>
    %133 = vector.extract_strided_slice %130 {offsets = [0, 0], sizes = [8, 128], strides = [1, 1]} : vector<8x384xf32> to vector<8x128xf32>
    %134 = vector.extract_strided_slice %132 {offsets = [0, 0], sizes = [8, 128], strides = [1, 1]} : vector<8x384xf32> to vector<8x128xf32>
    %135 = arith.addf %133, %134 : vector<8x128xf32>
    %136 = arith.negf %135 : vector<8x128xf32>
    %137 = math.exp %136 : vector<8x128xf32>
    %cst_53 = arith.constant 1.000000e+00 : f32
    %138 = vector.broadcast %cst_53 : f32 to vector<8x128xf32>
    %139 = arith.addf %138, %137 : vector<8x128xf32>
    %140 = arith.divf %138, %139 : vector<8x128xf32>
    %141 = vector.extract_strided_slice %130 {offsets = [0, 128], sizes = [8, 128], strides = [1, 1]} : vector<8x384xf32> to vector<8x128xf32>
    %142 = vector.extract_strided_slice %132 {offsets = [0, 128], sizes = [8, 128], strides = [1, 1]} : vector<8x384xf32> to vector<8x128xf32>
    %143 = arith.addf %141, %142 : vector<8x128xf32>
    %144 = arith.negf %143 : vector<8x128xf32>
    %145 = math.exp %144 : vector<8x128xf32>
    %cst_54 = arith.constant 1.000000e+00 : f32
    %146 = vector.broadcast %cst_54 : f32 to vector<8x128xf32>
    %147 = arith.addf %146, %145 : vector<8x128xf32>
    %148 = arith.divf %146, %147 : vector<8x128xf32>
    %149 = vector.extract_strided_slice %130 {offsets = [0, 256], sizes = [8, 128], strides = [1, 1]} : vector<8x384xf32> to vector<8x128xf32>
    %150 = vector.extract_strided_slice %132 {offsets = [0, 256], sizes = [8, 128], strides = [1, 1]} : vector<8x384xf32> to vector<8x128xf32>
    %151 = arith.addf %150, %14 : vector<8x128xf32>
    %152 = arith.mulf %140, %151 : vector<8x128xf32>
    %153 = arith.addf %149, %152 : vector<8x128xf32>
    %154 = math.tanh %153 : vector<8x128xf32>
    %cst_55 = arith.constant 1.000000e+00 : f32
    %155 = vector.broadcast %cst_55 : f32 to vector<8x128xf32>
    %156 = arith.subf %155, %148 : vector<8x128xf32>
    %157 = arith.mulf %156, %154 : vector<8x128xf32>
    %158 = arith.mulf %148, %122 : vector<8x128xf32>
    %159 = arith.addf %157, %158 : vector<8x128xf32>
    %160 = arith.index_cast %127 : i32 to index
    %c0_56 = arith.constant 0 : index
    %c0_57 = arith.constant 0 : index
    %161 = vector.load %arg8[%160, %c0_56, %c0_57] : memref<8x8x128xf32, #tpu.memory_space<vmem>>, vector<1x8x128xf32>
    %162 = vector.shape_cast %161 : vector<1x8x128xf32> to vector<8x128xf32>
    %163 = vector.shape_cast %159 : vector<8x128xf32> to vector<1x8x128xf32>
    tpu.vector_store %arg8[%160, %c0_56, %c0_57], %163 {strides = array<i32>} : memref<8x8x128xf32, #tpu.memory_space<vmem>>, vector<1x8x128xf32>,
    %c4_i32 = arith.constant 4 : i32
    %c7_i32_58 = arith.constant 7 : i32
    %164 = arith.subi %c7_i32_58, %c4_i32 : i32
    %165 = arith.index_cast %164 : i32 to index
    %c0_59 = arith.constant 0 : index
    %c0_60 = arith.constant 0 : index
    %166 = vector.load %arg10[%165, %c0_59, %c0_60] : memref<8x8x384xf32, #tpu.memory_space<vmem>>, vector<1x8x384xf32>
    %167 = vector.shape_cast %166 : vector<1x8x384xf32> to vector<8x384xf32>
    %c0_61 = arith.constant 0 : index
    %c0_62 = arith.constant 0 : index
    %168 = vector.load %arg6[%c0_61, %c0_62] : memref<128x384xf32, #tpu.memory_space<vmem>>, vector<128x384xf32>
    %cst_63 = arith.constant dense<0.000000e+00> : vector<8x384xf32>
    %169 = tpu.matmul %159, %168, %cst_63 {dimension_numbers = #tpu.dot_dimension_numbers<[1], [0], [0], [1], [0, 0, 1, 1], [], []>} : vector<8x128xf32>, vector<128x384xf32>, vector<8x384xf32> -> vector<8x384xf32>
    %170 = vector.extract_strided_slice %167 {offsets = [0, 0], sizes = [8, 128], strides = [1, 1]} : vector<8x384xf32> to vector<8x128xf32>
    %171 = vector.extract_strided_slice %169 {offsets = [0, 0], sizes = [8, 128], strides = [1, 1]} : vector<8x384xf32> to vector<8x128xf32>
    %172 = arith.addf %170, %171 : vector<8x128xf32>
    %173 = arith.negf %172 : vector<8x128xf32>
    %174 = math.exp %173 : vector<8x128xf32>
    %cst_64 = arith.constant 1.000000e+00 : f32
    %175 = vector.broadcast %cst_64 : f32 to vector<8x128xf32>
    %176 = arith.addf %175, %174 : vector<8x128xf32>
    %177 = arith.divf %175, %176 : vector<8x128xf32>
    %178 = vector.extract_strided_slice %167 {offsets = [0, 128], sizes = [8, 128], strides = [1, 1]} : vector<8x384xf32> to vector<8x128xf32>
    %179 = vector.extract_strided_slice %169 {offsets = [0, 128], sizes = [8, 128], strides = [1, 1]} : vector<8x384xf32> to vector<8x128xf32>
    %180 = arith.addf %178, %179 : vector<8x128xf32>
    %181 = arith.negf %180 : vector<8x128xf32>
    %182 = math.exp %181 : vector<8x128xf32>
    %cst_65 = arith.constant 1.000000e+00 : f32
    %183 = vector.broadcast %cst_65 : f32 to vector<8x128xf32>
    %184 = arith.addf %183, %182 : vector<8x128xf32>
    %185 = arith.divf %183, %184 : vector<8x128xf32>
    %186 = vector.extract_strided_slice %167 {offsets = [0, 256], sizes = [8, 128], strides = [1, 1]} : vector<8x384xf32> to vector<8x128xf32>
    %187 = vector.extract_strided_slice %169 {offsets = [0, 256], sizes = [8, 128], strides = [1, 1]} : vector<8x384xf32> to vector<8x128xf32>
    %188 = arith.addf %187, %14 : vector<8x128xf32>
    %189 = arith.mulf %177, %188 : vector<8x128xf32>
    %190 = arith.addf %186, %189 : vector<8x128xf32>
    %191 = math.tanh %190 : vector<8x128xf32>
    %cst_66 = arith.constant 1.000000e+00 : f32
    %192 = vector.broadcast %cst_66 : f32 to vector<8x128xf32>
    %193 = arith.subf %192, %185 : vector<8x128xf32>
    %194 = arith.mulf %193, %191 : vector<8x128xf32>
    %195 = arith.mulf %185, %159 : vector<8x128xf32>
    %196 = arith.addf %194, %195 : vector<8x128xf32>
    %197 = arith.index_cast %164 : i32 to index
    %c0_67 = arith.constant 0 : index
    %c0_68 = arith.constant 0 : index
    %198 = vector.load %arg8[%197, %c0_67, %c0_68] : memref<8x8x128xf32, #tpu.memory_space<vmem>>, vector<1x8x128xf32>
    %199 = vector.shape_cast %198 : vector<1x8x128xf32> to vector<8x128xf32>
    %200 = vector.shape_cast %196 : vector<8x128xf32> to vector<1x8x128xf32>
    tpu.vector_store %arg8[%197, %c0_67, %c0_68], %200 {strides = array<i32>} : memref<8x8x128xf32, #tpu.memory_space<vmem>>, vector<1x8x128xf32>,
    %c5_i32 = arith.constant 5 : i32
    %c7_i32_69 = arith.constant 7 : i32
    %201 = arith.subi %c7_i32_69, %c5_i32 : i32
    %202 = arith.index_cast %201 : i32 to index
    %c0_70 = arith.constant 0 : index
    %c0_71 = arith.constant 0 : index
    %203 = vector.load %arg10[%202, %c0_70, %c0_71] : memref<8x8x384xf32, #tpu.memory_space<vmem>>, vector<1x8x384xf32>
    %204 = vector.shape_cast %203 : vector<1x8x384xf32> to vector<8x384xf32>
    %c0_72 = arith.constant 0 : index
    %c0_73 = arith.constant 0 : index
    %205 = vector.load %arg6[%c0_72, %c0_73] : memref<128x384xf32, #tpu.memory_space<vmem>>, vector<128x384xf32>
    %cst_74 = arith.constant dense<0.000000e+00> : vector<8x384xf32>
    %206 = tpu.matmul %196, %205, %cst_74 {dimension_numbers = #tpu.dot_dimension_numbers<[1], [0], [0], [1], [0, 0, 1, 1], [], []>} : vector<8x128xf32>, vector<128x384xf32>, vector<8x384xf32> -> vector<8x384xf32>
    %207 = vector.extract_strided_slice %204 {offsets = [0, 0], sizes = [8, 128], strides = [1, 1]} : vector<8x384xf32> to vector<8x128xf32>
    %208 = vector.extract_strided_slice %206 {offsets = [0, 0], sizes = [8, 128], strides = [1, 1]} : vector<8x384xf32> to vector<8x128xf32>
    %209 = arith.addf %207, %208 : vector<8x128xf32>
    %210 = arith.negf %209 : vector<8x128xf32>
    %211 = math.exp %210 : vector<8x128xf32>
    %cst_75 = arith.constant 1.000000e+00 : f32
    %212 = vector.broadcast %cst_75 : f32 to vector<8x128xf32>
    %213 = arith.addf %212, %211 : vector<8x128xf32>
    %214 = arith.divf %212, %213 : vector<8x128xf32>
    %215 = vector.extract_strided_slice %204 {offsets = [0, 128], sizes = [8, 128], strides = [1, 1]} : vector<8x384xf32> to vector<8x128xf32>
    %216 = vector.extract_strided_slice %206 {offsets = [0, 128], sizes = [8, 128], strides = [1, 1]} : vector<8x384xf32> to vector<8x128xf32>
    %217 = arith.addf %215, %216 : vector<8x128xf32>
    %218 = arith.negf %217 : vector<8x128xf32>
    %219 = math.exp %218 : vector<8x128xf32>
    %cst_76 = arith.constant 1.000000e+00 : f32
    %220 = vector.broadcast %cst_76 : f32 to vector<8x128xf32>
    %221 = arith.addf %220, %219 : vector<8x128xf32>
    %222 = arith.divf %220, %221 : vector<8x128xf32>
    %223 = vector.extract_strided_slice %204 {offsets = [0, 256], sizes = [8, 128], strides = [1, 1]} : vector<8x384xf32> to vector<8x128xf32>
    %224 = vector.extract_strided_slice %206 {offsets = [0, 256], sizes = [8, 128], strides = [1, 1]} : vector<8x384xf32> to vector<8x128xf32>
    %225 = arith.addf %224, %14 : vector<8x128xf32>
    %226 = arith.mulf %214, %225 : vector<8x128xf32>
    %227 = arith.addf %223, %226 : vector<8x128xf32>
    %228 = math.tanh %227 : vector<8x128xf32>
    %cst_77 = arith.constant 1.000000e+00 : f32
    %229 = vector.broadcast %cst_77 : f32 to vector<8x128xf32>
    %230 = arith.subf %229, %222 : vector<8x128xf32>
    %231 = arith.mulf %230, %228 : vector<8x128xf32>
    %232 = arith.mulf %222, %196 : vector<8x128xf32>
    %233 = arith.addf %231, %232 : vector<8x128xf32>
    %234 = arith.index_cast %201 : i32 to index
    %c0_78 = arith.constant 0 : index
    %c0_79 = arith.constant 0 : index
    %235 = vector.load %arg8[%234, %c0_78, %c0_79] : memref<8x8x128xf32, #tpu.memory_space<vmem>>, vector<1x8x128xf32>
    %236 = vector.shape_cast %235 : vector<1x8x128xf32> to vector<8x128xf32>
    %237 = vector.shape_cast %233 : vector<8x128xf32> to vector<1x8x128xf32>
    tpu.vector_store %arg8[%234, %c0_78, %c0_79], %237 {strides = array<i32>} : memref<8x8x128xf32, #tpu.memory_space<vmem>>, vector<1x8x128xf32>,
    %c6_i32 = arith.constant 6 : i32
    %c7_i32_80 = arith.constant 7 : i32
    %238 = arith.subi %c7_i32_80, %c6_i32 : i32
    %239 = arith.index_cast %238 : i32 to index
    %c0_81 = arith.constant 0 : index
    %c0_82 = arith.constant 0 : index
    %240 = vector.load %arg10[%239, %c0_81, %c0_82] : memref<8x8x384xf32, #tpu.memory_space<vmem>>, vector<1x8x384xf32>
    %241 = vector.shape_cast %240 : vector<1x8x384xf32> to vector<8x384xf32>
    %c0_83 = arith.constant 0 : index
    %c0_84 = arith.constant 0 : index
    %242 = vector.load %arg6[%c0_83, %c0_84] : memref<128x384xf32, #tpu.memory_space<vmem>>, vector<128x384xf32>
    %cst_85 = arith.constant dense<0.000000e+00> : vector<8x384xf32>
    %243 = tpu.matmul %233, %242, %cst_85 {dimension_numbers = #tpu.dot_dimension_numbers<[1], [0], [0], [1], [0, 0, 1, 1], [], []>} : vector<8x128xf32>, vector<128x384xf32>, vector<8x384xf32> -> vector<8x384xf32>
    %244 = vector.extract_strided_slice %241 {offsets = [0, 0], sizes = [8, 128], strides = [1, 1]} : vector<8x384xf32> to vector<8x128xf32>
    %245 = vector.extract_strided_slice %243 {offsets = [0, 0], sizes = [8, 128], strides = [1, 1]} : vector<8x384xf32> to vector<8x128xf32>
    %246 = arith.addf %244, %245 : vector<8x128xf32>
    %247 = arith.negf %246 : vector<8x128xf32>
    %248 = math.exp %247 : vector<8x128xf32>
    %cst_86 = arith.constant 1.000000e+00 : f32
    %249 = vector.broadcast %cst_86 : f32 to vector<8x128xf32>
    %250 = arith.addf %249, %248 : vector<8x128xf32>
    %251 = arith.divf %249, %250 : vector<8x128xf32>
    %252 = vector.extract_strided_slice %241 {offsets = [0, 128], sizes = [8, 128], strides = [1, 1]} : vector<8x384xf32> to vector<8x128xf32>
    %253 = vector.extract_strided_slice %243 {offsets = [0, 128], sizes = [8, 128], strides = [1, 1]} : vector<8x384xf32> to vector<8x128xf32>
    %254 = arith.addf %252, %253 : vector<8x128xf32>
    %255 = arith.negf %254 : vector<8x128xf32>
    %256 = math.exp %255 : vector<8x128xf32>
    %cst_87 = arith.constant 1.000000e+00 : f32
    %257 = vector.broadcast %cst_87 : f32 to vector<8x128xf32>
    %258 = arith.addf %257, %256 : vector<8x128xf32>
    %259 = arith.divf %257, %258 : vector<8x128xf32>
    %260 = vector.extract_strided_slice %241 {offsets = [0, 256], sizes = [8, 128], strides = [1, 1]} : vector<8x384xf32> to vector<8x128xf32>
    %261 = vector.extract_strided_slice %243 {offsets = [0, 256], sizes = [8, 128], strides = [1, 1]} : vector<8x384xf32> to vector<8x128xf32>
    %262 = arith.addf %261, %14 : vector<8x128xf32>
    %263 = arith.mulf %251, %262 : vector<8x128xf32>
    %264 = arith.addf %260, %263 : vector<8x128xf32>
    %265 = math.tanh %264 : vector<8x128xf32>
    %cst_88 = arith.constant 1.000000e+00 : f32
    %266 = vector.broadcast %cst_88 : f32 to vector<8x128xf32>
    %267 = arith.subf %266, %259 : vector<8x128xf32>
    %268 = arith.mulf %267, %265 : vector<8x128xf32>
    %269 = arith.mulf %259, %233 : vector<8x128xf32>
    %270 = arith.addf %268, %269 : vector<8x128xf32>
    %271 = arith.index_cast %238 : i32 to index
    %c0_89 = arith.constant 0 : index
    %c0_90 = arith.constant 0 : index
    %272 = vector.load %arg8[%271, %c0_89, %c0_90] : memref<8x8x128xf32, #tpu.memory_space<vmem>>, vector<1x8x128xf32>
    %273 = vector.shape_cast %272 : vector<1x8x128xf32> to vector<8x128xf32>
    %274 = vector.shape_cast %270 : vector<8x128xf32> to vector<1x8x128xf32>
    tpu.vector_store %arg8[%271, %c0_89, %c0_90], %274 {strides = array<i32>} : memref<8x8x128xf32, #tpu.memory_space<vmem>>, vector<1x8x128xf32>,
    %c7_i32_91 = arith.constant 7 : i32
    %c7_i32_92 = arith.constant 7 : i32
    %275 = arith.subi %c7_i32_92, %c7_i32_91 : i32
    %276 = arith.index_cast %275 : i32 to index
    %c0_93 = arith.constant 0 : index
    %c0_94 = arith.constant 0 : index
    %277 = vector.load %arg10[%276, %c0_93, %c0_94] : memref<8x8x384xf32, #tpu.memory_space<vmem>>, vector<1x8x384xf32>
    %278 = vector.shape_cast %277 : vector<1x8x384xf32> to vector<8x384xf32>
    %c0_95 = arith.constant 0 : index
    %c0_96 = arith.constant 0 : index
    %279 = vector.load %arg6[%c0_95, %c0_96] : memref<128x384xf32, #tpu.memory_space<vmem>>, vector<128x384xf32>
    %cst_97 = arith.constant dense<0.000000e+00> : vector<8x384xf32>
    %280 = tpu.matmul %270, %279, %cst_97 {dimension_numbers = #tpu.dot_dimension_numbers<[1], [0], [0], [1], [0, 0, 1, 1], [], []>} : vector<8x128xf32>, vector<128x384xf32>, vector<8x384xf32> -> vector<8x384xf32>
    %281 = vector.extract_strided_slice %278 {offsets = [0, 0], sizes = [8, 128], strides = [1, 1]} : vector<8x384xf32> to vector<8x128xf32>
    %282 = vector.extract_strided_slice %280 {offsets = [0, 0], sizes = [8, 128], strides = [1, 1]} : vector<8x384xf32> to vector<8x128xf32>
    %283 = arith.addf %281, %282 : vector<8x128xf32>
    %284 = arith.negf %283 : vector<8x128xf32>
    %285 = math.exp %284 : vector<8x128xf32>
    %cst_98 = arith.constant 1.000000e+00 : f32
    %286 = vector.broadcast %cst_98 : f32 to vector<8x128xf32>
    %287 = arith.addf %286, %285 : vector<8x128xf32>
    %288 = arith.divf %286, %287 : vector<8x128xf32>
    %289 = vector.extract_strided_slice %278 {offsets = [0, 128], sizes = [8, 128], strides = [1, 1]} : vector<8x384xf32> to vector<8x128xf32>
    %290 = vector.extract_strided_slice %280 {offsets = [0, 128], sizes = [8, 128], strides = [1, 1]} : vector<8x384xf32> to vector<8x128xf32>
    %291 = arith.addf %289, %290 : vector<8x128xf32>
    %292 = arith.negf %291 : vector<8x128xf32>
    %293 = math.exp %292 : vector<8x128xf32>
    %cst_99 = arith.constant 1.000000e+00 : f32
    %294 = vector.broadcast %cst_99 : f32 to vector<8x128xf32>
    %295 = arith.addf %294, %293 : vector<8x128xf32>
    %296 = arith.divf %294, %295 : vector<8x128xf32>
    %297 = vector.extract_strided_slice %278 {offsets = [0, 256], sizes = [8, 128], strides = [1, 1]} : vector<8x384xf32> to vector<8x128xf32>
    %298 = vector.extract_strided_slice %280 {offsets = [0, 256], sizes = [8, 128], strides = [1, 1]} : vector<8x384xf32> to vector<8x128xf32>
    %299 = arith.addf %298, %14 : vector<8x128xf32>
    %300 = arith.mulf %288, %299 : vector<8x128xf32>
    %301 = arith.addf %297, %300 : vector<8x128xf32>
    %302 = math.tanh %301 : vector<8x128xf32>
    %cst_100 = arith.constant 1.000000e+00 : f32
    %303 = vector.broadcast %cst_100 : f32 to vector<8x128xf32>
    %304 = arith.subf %303, %296 : vector<8x128xf32>
    %305 = arith.mulf %304, %302 : vector<8x128xf32>
    %306 = arith.mulf %296, %270 : vector<8x128xf32>
    %307 = arith.addf %305, %306 : vector<8x128xf32>
    %308 = arith.index_cast %275 : i32 to index
    %c0_101 = arith.constant 0 : index
    %c0_102 = arith.constant 0 : index
    %309 = vector.load %arg8[%308, %c0_101, %c0_102] : memref<8x8x128xf32, #tpu.memory_space<vmem>>, vector<1x8x128xf32>
    %310 = vector.shape_cast %309 : vector<1x8x128xf32> to vector<8x128xf32>
    %311 = vector.shape_cast %307 : vector<8x128xf32> to vector<1x8x128xf32>
    tpu.vector_store %arg8[%308, %c0_101, %c0_102], %311 {strides = array<i32>} : memref<8x8x128xf32, #tpu.memory_space<vmem>>, vector<1x8x128xf32>,
    %c8_i32 = arith.constant 8 : i32
    %c0_103 = arith.constant 0 : index
    %c0_104 = arith.constant 0 : index
    %312 = vector.load %arg9[%c0_103, %c0_104] : memref<8x128xf32, #tpu.memory_space<vmem>>, vector<8x128xf32>
    tpu.vector_store %arg9[%c0_103, %c0_104], %307 {strides = array<i32>} : memref<8x128xf32, #tpu.memory_space<vmem>>, vector<8x128xf32>,
    return
  }
  func.func @transform_0(%arg0: i32, %arg1: i32) -> (i32, i32, i32) {
    %c0_i32 = arith.constant 0 : i32
    %0 = arith.subi %c0_i32, %arg1 : i32
    %c0_i32_0 = arith.constant 0 : i32
    %c0_i32_1 = arith.constant 0 : i32
    return %0, %arg0, %c0_i32_0 : i32, i32, i32
  }
  func.func @transform_1(%arg0: i32, %arg1: i32) -> (i32, i32) {
    %c0_i32 = arith.constant 0 : i32
    %c0_i32_0 = arith.constant 0 : i32
    return %arg0, %c0_i32 : i32, i32
  }
  func.func @transform_2(%arg0: i32, %arg1: i32) -> (i32, i32) {
    %c0_i32 = arith.constant 0 : i32
    %c0_i32_0 = arith.constant 0 : i32
    %c0_i32_1 = arith.constant 0 : i32
    return %c0_i32, %c0_i32_0 : i32, i32
  }
  func.func @transform_3(%arg0: i32, %arg1: i32) -> (i32, i32) {
    %c0_i32 = arith.constant 0 : i32
    %c0_i32_0 = arith.constant 0 : i32
    %c0_i32_1 = arith.constant 0 : i32
    return %c0_i32, %c0_i32_0 : i32, i32
  }
  func.func @transform_4(%arg0: i32, %arg1: i32) -> (i32, i32) {
    %c0_i32 = arith.constant 0 : i32
    %c0_i32_0 = arith.constant 0 : i32
    %c0_i32_1 = arith.constant 0 : i32
    return %c0_i32, %c0_i32_0 : i32, i32
  }
  func.func @transform_5(%arg0: i32, %arg1: i32) -> (i32, i32) {
    %c0_i32 = arith.constant 0 : i32
    %c0_i32_0 = arith.constant 0 : i32
    %c0_i32_1 = arith.constant 0 : i32
    return %c0_i32, %c0_i32_0 : i32, i32
  }
  func.func @transform_6(%arg0: i32, %arg1: i32) -> (i32, i32, i32) {
    %c0_i32 = arith.constant 0 : i32
    %0 = arith.subi %c0_i32, %arg1 : i32
    %c0_i32_0 = arith.constant 0 : i32
    %c0_i32_1 = arith.constant 0 : i32
    return %0, %arg0, %c0_i32_0 : i32, i32, i32
  }
}

</mosaic_0001>

<llo_original>
// kernel: encoder_forward.3
$region0: #{encoder_forward.3}
  #allocation0 [shape = 'u32[]', space=smem, size = 0x4, offset = 0x4, fixed_abs, tag = 'smem constant byte address 0x4 - core index']
  #allocation1 [shape = 'u32[144,128]{1,0:T(1,128)}', space=vmem, size = 0x12000, scoped, tag = 'internal scratch']
  #allocation2 [shape = 'f32[8,128]{1,0:T(8,128)}', space=vmem, size = 0x1000, scoped, tag = 'scratch operand']
  #allocation3 [shape = 'f32[8,8,384]{2,1,0:T(8,128)}', space=vmem, size = 0x18000, scoped, tag = 'scratch operand']
  %s0 = inlined_call_operand.hbm [shape: f32[8,8,16], index: 0, kind: input, shape index: {}]
  %s1 = inlined_call_operand.hbm [shape: f32[8,128], index: 1, kind: input, shape index: {}]
  %s2 = inlined_call_operand.hbm [shape: f32[16,384], index: 2, kind: input, shape index: {}]
  %s3 = inlined_call_operand.hbm [shape: f32[1,384], index: 3, kind: input, shape index: {}]
  %s4 = inlined_call_operand.hbm [shape: f32[128,384], index: 4, kind: input, shape index: {}]
  %s5 = inlined_call_operand.hbm [shape: f32[1,128], index: 5, kind: input, shape index: {}]
  %s6 = inlined_call_operand.hbm [shape: f32[8,8,128], index: 6, kind: output, shape index: {}]
  %s7 = sld [smem:[#allocation0]]
  $region62: #{encoder_forward.3} parent=0
    _
  %s9 = ssub.s32 1, %s7
  %s10 = scalar_select 0, %s9, %s7
  $region1: #{encoder_forward.3} parent=0
    #allocation4 [shape = 'u8[32768]{0}', space=vmem, size = 0x8000, scoped, tag = 'input window, operand 0, single buffered']
    #allocation5 [shape = 's32[1]{0}', space=sflag, size = 0x4, scoped, tag = 'scoped memory for encoder_forward.3']
    #allocation6 [shape = 's32[1]{0}', space=sflag, size = 0x4, scoped, tag = 'scoped memory for encoder_forward.3']
    #allocation7 [shape = 'u8[4096]{0}', space=vmem, size = 0x1000, scoped, tag = 'input window, operand 1, single buffered']
    #allocation8 [shape = 's32[1]{0}', space=sflag, size = 0x4, scoped, tag = 'scoped memory for encoder_forward.3']
    #allocation9 [shape = 'u8[24576]{0}', space=vmem, size = 0x6000, scoped, tag = 'input window, operand 2, single buffered']
    #allocation10 [shape = 'u8[1536]{0}', space=vmem, size = 0x800, scoped, tag = 'input window, operand 3, single buffered']
    #allocation11 [shape = 's32[1]{0}', space=sflag, size = 0x4, scoped, tag = 'scoped memory for encoder_forward.3']
    #allocation12 [shape = 'u8[196608]{0}', space=vmem, size = 0x30000, scoped, tag = 'input window, operand 4, single buffered']
    #allocation13 [shape = 'u8[512]{0}', space=vmem, size = 0x400, scoped, tag = 'input window, operand 5, single buffered']
    #allocation14 [shape = 's32[1]{0}', space=sflag, size = 0x4, scoped, tag = 'scoped memory for encoder_forward.3']
    #allocation15 [shape = 'u8[32768]{0}', space=vmem, size = 0x8000, scoped, tag = 'output window, operand 0, single buffered']
    %11 = vsyncpa [#allocation5], 0
    %12 = vsyncpa [#allocation8], 0
    %13 = vsyncpa [#allocation11], 0
    %14 = vsyncpa [#allocation14], 0
    %15 = vsyncpa [#allocation6], 0
    // Predicated region
    $region2: #{encoder_forward.3} parent=1 // pred_check
      _
    $region3: #{encoder_forward.3} parent=1 // pred_check_branch
      %17 = sbr.rel (0) target = $region5
    $region4: #{encoder_forward.3} parent=1 // pred_region
      %s18 = ssub.s32 0, 0
      %s19 = smul.u32 8, %s18
      %s21 = ssub.s32 1024, 1024
      %22 = vsyncadd [#allocation5], %s21
      %s23 = smul.addr %s19, 128
      %s24 = scalar_lea.hbm %s0, %s23
      %s25 = sshll.u32 [#allocation4], 4
      %s26 = int_to_ptr.vmem [resolvable:$true] %s25
      %31 = dma.hbm_to_vmem [thread:$0]  %s24, 1024, %s26, [#allocation5], 128, 128, 8
    $region5: #{encoder_forward.3} parent=1 // pred_fallthru
      _
    // Predicated region
    $region6: #{encoder_forward.3} parent=1 // pred_check
      _
    $region7: #{encoder_forward.3} parent=1 // pred_check_branch
      %33 = sbr.rel (0) target = $region9
    $region8: #{encoder_forward.3} parent=1 // pred_region
      %s35 = ssub.s32 128, 128
      %36 = vsyncadd [#allocation8], %s35
      %s38 = sshll.u32 [#allocation7], 4
      %s39 = int_to_ptr.vmem [resolvable:$true] %s38
      %41 = dma.hbm_to_vmem [thread:$0]  %s1, 128, %s39, [#allocation8]
    $region9: #{encoder_forward.3} parent=1 // pred_fallthru
      _
    // Predicated region
    $region10: #{encoder_forward.3} parent=1 // pred_check
      _
    $region11: #{encoder_forward.3} parent=1 // pred_check_branch
      %43 = sbr.rel (0) target = $region13
    $region12: #{encoder_forward.3} parent=1 // pred_region
      %s45 = ssub.s32 768, 768
      %46 = vsyncadd [#allocation8], %s45
      %s47 = sshll.u32 [#allocation9], 4
      %s48 = int_to_ptr.vmem [resolvable:$true] %s47
      %53 = dma.hbm_to_vmem [thread:$0]  %s2, 768, %s48, [#allocation8], 384, 384, 24
    $region13: #{encoder_forward.3} parent=1 // pred_fallthru
      _
    // Predicated region
    $region14: #{encoder_forward.3} parent=1 // pred_check
      _
    $region15: #{encoder_forward.3} parent=1 // pred_check_branch
      %55 = sbr.rel (0) target = $region17
    $region16: #{encoder_forward.3} parent=1 // pred_region
      %s57 = ssub.s32 48, 48
      %58 = vsyncadd [#allocation11], %s57
      %s60 = sshll.u32 [#allocation10], 4
      %s61 = int_to_ptr.vmem [resolvable:$true] %s60
      %63 = dma.hbm_to_vmem [thread:$0]  %s3, 48, %s61, [#allocation11]
    $region17: #{encoder_forward.3} parent=1 // pred_fallthru
      _
    // Predicated region
    $region18: #{encoder_forward.3} parent=1 // pred_check
      _
    $region19: #{encoder_forward.3} parent=1 // pred_check_branch
      %65 = sbr.rel (0) target = $region21
    $region20: #{encoder_forward.3} parent=1 // pred_region
      %s67 = ssub.s32 6144, 6144
      %68 = vsyncadd [#allocation11], %s67
      %s69 = sshll.u32 [#allocation12], 4
      %s70 = int_to_ptr.vmem [resolvable:$true] %s69
      %75 = dma.hbm_to_vmem [thread:$0]  %s4, 6144, %s70, [#allocation11], 384, 384, 24
    $region21: #{encoder_forward.3} parent=1 // pred_fallthru
      _
    // Predicated region
    $region22: #{encoder_forward.3} parent=1 // pred_check
      _
    $region23: #{encoder_forward.3} parent=1 // pred_check_branch
      %77 = sbr.rel (0) target = $region25
    $region24: #{encoder_forward.3} parent=1 // pred_region
      %s79 = ssub.s32 16, 16
      %80 = vsyncadd [#allocation14], %s79
      %s82 = sshll.u32 [#allocation13], 4
      %s83 = int_to_ptr.vmem [resolvable:$true] %s82
      %85 = dma.hbm_to_vmem [thread:$0]  %s5, 16, %s83, [#allocation14]
    $region25: #{encoder_forward.3} parent=1 // pred_fallthru
      _
    // Predicated region
    $region26: #{encoder_forward.3} parent=1 // pred_check
      _
    $region27: #{encoder_forward.3} parent=1 // pred_check_branch
      %87 = sbr.rel (0) target = $region29
    $region28: #{encoder_forward.3} parent=1 // pred_region
      %88 = dma.done [#allocation5], 1024
    $region29: #{encoder_forward.3} parent=1 // pred_fallthru
      _
    // Predicated region
    $region30: #{encoder_forward.3} parent=1 // pred_check
      _
    $region31: #{encoder_forward.3} parent=1 // pred_check_branch
      %90 = sbr.rel (0) target = $region33
    $region32: #{encoder_forward.3} parent=1 // pred_region
      %91 = dma.done [#allocation8], 128
    $region33: #{encoder_forward.3} parent=1 // pred_fallthru
      _
    // Predicated region
    $region34: #{encoder_forward.3} parent=1 // pred_check
      _
    $region35: #{encoder_forward.3} parent=1 // pred_check_branch
      %93 = sbr.rel (0) target = $region37
    $region36: #{encoder_forward.3} parent=1 // pred_region
      %94 = dma.done [#allocation8], 768
    $region37: #{encoder_forward.3} parent=1 // pred_fallthru
      _
    // Predicated region
    $region38: #{encoder_forward.3} parent=1 // pred_check
      _
    $region39: #{encoder_forward.3} parent=1 // pred_check_branch
      %96 = sbr.rel (0) target = $region41
    $region40: #{encoder_forward.3} parent=1 // pred_region
      %97 = dma.done [#allocation11], 48
    $region41: #{encoder_forward.3} parent=1 // pred_fallthru
      _
    // Predicated region
    $region42: #{encoder_forward.3} parent=1 // pred_check
      _
    $region43: #{encoder_forward.3} parent=1 // pred_check_branch
      %99 = sbr.rel (0) target = $region45
    $region44: #{encoder_forward.3} parent=1 // pred_region
      %100 = dma.done [#allocation11], 6144
    $region45: #{encoder_forward.3} parent=1 // pred_fallthru
      _
    // Predicated region
    $region46: #{encoder_forward.3} parent=1 // pred_check
      _
    $region47: #{encoder_forward.3} parent=1 // pred_check_branch
      %102 = sbr.rel (0) target = $region49
    $region48: #{encoder_forward.3} parent=1 // pred_region
      %103 = dma.done [#allocation14], 16
    $region49: #{encoder_forward.3} parent=1 // pred_fallthru
      _
    %s104 = ssub.s32 0, 0
    %s105 = smul.u32 8, %s104
    %s106 = ssub.s32 0, 0
    %s107 = smul.u32 8, %s106
    %p108 = scmp.eq.s32.totalorder 0, 0
    // Predicated region
    $region50: #{encoder_forward.3} parent=1 // pred_check
      %p109 = pneg %p108
    $region51: #{encoder_forward.3} parent=1 // pred_check_branch
      %111 = sbr.rel (%p109) target = $region53
    $region52: #{encoder_forward.3} parent=1 // pred_region
      %v112 = vld [vmem:[#allocation7] sm:$0xff]
      %113 = vst [vmem:[#allocation2] sm:$0xff] %v112
    $region53: #{encoder_forward.3} parent=1 // pred_fallthru
      _
    %v114 = vld [vmem:[#allocation4] sm:$0xff]
    %v115 = vld [vmem:[#allocation4 + $0x8] sm:$0xff]
    %v116 = vld [vmem:[#allocation4 + $0x10] sm:$0xff]
    %v117 = vld [vmem:[#allocation4 + $0x18] sm:$0xff]
    %v118 = vld [vmem:[#allocation4 + $0x20] sm:$0xff]
    %v119 = vld [vmem:[#allocation4 + $0x28] sm:$0xff]
    %v120 = vld [vmem:[#allocation4 + $0x30] sm:$0xff]
    %v121 = vld [vmem:[#allocation4 + $0x38] sm:$0xff]
    %v122 = vld [vmem:[#allocation9] sm:$0xff]
    %v123 = vld [vmem:[#allocation9 + $0x8] sm:$0xff]
    %v124 = vld [vmem:[#allocation9 + $0x10] sm:$0xff]
    %v125 = vld [vmem:[#allocation9 + $0x18] sm:$0xff]
    %v126 = vld [vmem:[#allocation9 + $0x20] sm:$0xff]
    %v127 = vld [vmem:[#allocation9 + $0x28] sm:$0xff]
    %v128 = vld [vmem:[#allocation10] sm:$0x7]
    %v130 = vlaneseq
    %v131 = vshrl.u32 %v130, 7
    %v132 = vsub.s32 0, %v131
    %v133 = vrot.slane %v128, %v132
    %v134 = vlaneseq
    %v135 = vshrl.u32 %v134, 7
    %v136 = vsub.s32 1, %v135
    %v137 = vrot.slane %v128, %v136
    %v138 = vlaneseq
    %v139 = vshrl.u32 %v138, 7
    %v140 = vsub.s32 2, %v139
    %v141 = vrot.slane %v128, %v140
    %vm145 = vcmask 130048
    %v147 = vsel %vm145, %v114, 0
    %v150 = vsel %vm145, %v115, 0
    %v153 = vsel %vm145, %v116, 0
    %v156 = vsel %vm145, %v117, 0
    %v159 = vsel %vm145, %v118, 0
    %v162 = vsel %vm145, %v119, 0
    %v165 = vsel %vm145, %v120, 0
    %v168 = vsel %vm145, %v121, 0
    %170 = vmatprep.subr.mxu0 %v123
    %171 = vmatpush1.msra.mxu0 %v122
    %172 = vmatprep.subr.mxu0 %v126
    %173 = vmatpush1.msra.mxu0 %v125
    %174 = vmatprep.subr.mxu0 0.0
    %175 = vmatpush1.msra.mxu0 0.0
    %176 = vmatprep.subr.mxu0 0.0
    %177 = vmatpush1.msra.mxu0 0.0
    %178 = vmatprep.subr.mxu0 0.0
    %179 = vmatpush1.msra.mxu0 0.0
    %180 = vmatprep.subr.mxu0 0.0
    %181 = vmatpush1.msra.mxu0 0.0
    %182 = vmatprep.subr.mxu0 0.0
    %183 = vmatpush1.msra.mxu0 0.0
    %184 = vmatprep.subr.mxu0 0.0
    %185 = vmatpush1.msra.mxu0 0.0
    %186 = vmatprep.subr.mxu0 0.0
    %187 = vmatpush1.msra.mxu0 0.0
    %188 = vmatprep.subr.mxu0 0.0
    %189 = vmatpush1.msra.mxu0 0.0
    %190 = vmatprep.subr.mxu0 0.0
    %191 = vmatpush1.msra.mxu0 0.0
    %192 = vmatprep.subr.mxu0 0.0
    %193 = vmatpush1.msra.mxu0 0.0
    %194 = vmatprep.subr.mxu0 0.0
    %195 = vmatpush1.msra.mxu0 0.0
    %196 = vmatprep.subr.mxu0 0.0
    %197 = vmatpush1.msra.mxu0 0.0
    %198 = vmatprep.subr.mxu0 0.0
    %199 = vmatpush1.msra.mxu0 0.0
    %200 = vmatprep.subr.mxu0 0.0
    %201 = vmatpush1.msra.mxu0 0.0
    %202 = vmatprep.subr.mxu0 0.0
    %203 = vmatpush1.msra.mxu0 0.0
    %204 = vmatprep.subr.mxu0 0.0
    %205 = vmatpush1.msra.mxu0 0.0
    %206 = vmatprep.subr.mxu0 0.0
    %207 = vmatpush1.msra.mxu0 0.0
    %208 = vmatprep.subr.mxu0 0.0
    %209 = vmatpush1.msra.mxu0 0.0
    %210 = vmatprep.subr.mxu0 0.0
    %211 = vmatpush1.msra.mxu0 0.0
    %212 = vmatprep.subr.mxu0 0.0
    %213 = vmatpush1.msra.mxu0 0.0
    %214 = vmatprep.subr.mxu0 0.0
    %215 = vmatpush1.msra.mxu0 0.0
    %216 = vmatprep.subr.mxu0 0.0
    %217 = vmatpush1.msra.mxu0 0.0
    %218 = vmatprep.subr.mxu0 0.0
    %219 = vmatpush1.msra.mxu0 0.0
    %220 = vmatprep.subr.mxu0 0.0
    %221 = vmatpush1.msra.mxu0 0.0
    %222 = vmatprep.subr.mxu0 0.0
    %223 = vmatpush1.msra.mxu0 0.0
    %224 = vmatprep.subr.mxu0 0.0
    %225 = vmatpush1.msra.mxu0 0.0
    %226 = vmatprep.subr.mxu0 0.0
    %227 = vmatpush1.msra.mxu0 0.0
    %228 = vmatprep.subr.mxu0 0.0
    %229 = vmatpush1.msra.mxu0 0.0
    %230 = vmatprep.subr.mxu0 0.0
    %231 = vmatpush1.msra.mxu0 0.0
    %232 = vmatprep.subr.mxu0 0.0
    %233 = vmatpush1.msra.mxu0 0.0
    %234 = vmatprep.mubr.f32.mxu0 0.0
    %235 = vmatmul.mubr.f32.gmra.mrb[0].mxu0 %v147
    %v236 = vpop.f32.mrb[0].mxu0
    %v237 = vadd.f32 %v133, %v236
    %v238 = vpop.f32.mrb[0].mxu0
    %v239 = vadd.f32 %v137, %v238
    %240 = vmatprep.mubr.f32.mxu0 0.0
    %241 = vmatmul.mubr.f32.gmra.mrb[0].mxu0 %v150
    %v242 = vpop.f32.mrb[0].mxu0
    %v243 = vadd.f32 %v133, %v242
    %v244 = vpop.f32.mrb[0].mxu0
    %v245 = vadd.f32 %v137, %v244
    %246 = vmatprep.mubr.f32.mxu0 0.0
    %247 = vmatmul.mubr.f32.gmra.mrb[0].mxu0 %v153
    %v248 = vpop.f32.mrb[0].mxu0
    %v249 = vadd.f32 %v133, %v248
    %v250 = vpop.f32.mrb[0].mxu0
    %v251 = vadd.f32 %v137, %v250
    %252 = vmatprep.mubr.f32.mxu0 0.0
    %253 = vmatmul.mubr.f32.gmra.mrb[0].mxu0 %v156
    %v254 = vpop.f32.mrb[0].mxu0
    %v255 = vadd.f32 %v133, %v254
    %v256 = vpop.f32.mrb[0].mxu0
    %v257 = vadd.f32 %v137, %v256
    %258 = vmatprep.mubr.f32.mxu0 0.0
    %259 = vmatmul.mubr.f32.gmra.mrb[0].mxu0 %v159
    %v260 = vpop.f32.mrb[0].mxu0
    %v261 = vadd.f32 %v133, %v260
    %v262 = vpop.f32.mrb[0].mxu0
    %v263 = vadd.f32 %v137, %v262
    %264 = vmatprep.mubr.f32.mxu0 0.0
    %265 = vmatmul.mubr.f32.gmra.mrb[0].mxu0 %v162
    %v266 = vpop.f32.mrb[0].mxu0
    %v267 = vadd.f32 %v133, %v266
    %v268 = vpop.f32.mrb[0].mxu0
    %v269 = vadd.f32 %v137, %v268
    %270 = vmatprep.mubr.f32.mxu0 0.0
    %271 = vmatmul.mubr.f32.gmra.mrb[0].mxu0 %v165
    %v272 = vpop.f32.mrb[0].mxu0
    %v273 = vadd.f32 %v133, %v272
    %v274 = vpop.f32.mrb[0].mxu0
    %v275 = vadd.f32 %v137, %v274
    %276 = vmatprep.mubr.f32.mxu0 0.0
    %277 = vmatmul.mubr.f32.gmra.mrb[0].mxu0 %v168
    %v278 = vpop.f32.mrb[0].mxu0
    %v279 = vadd.f32 %v133, %v278
    %v280 = vpop.f32.mrb[0].mxu0
    %v281 = vadd.f32 %v137, %v280
    %282 = vdwg.mxu0
    %283 = vmatprep.subr.mxu0 0.0
    %284 = vmatpush1.msra.mxu0 %v124
    %285 = vmatprep.subr.mxu0 0.0
    %286 = vmatpush1.msra.mxu0 %v127
    %287 = vmatprep.subr.mxu0 0.0
    %288 = vmatpush1.msra.mxu0 0.0
    %289 = vmatprep.subr.mxu0 0.0
    %290 = vmatpush1.msra.mxu0 0.0
    %291 = vmatprep.subr.mxu0 0.0
    %292 = vmatpush1.msra.mxu0 0.0
    %293 = vmatprep.subr.mxu0 0.0
    %294 = vmatpush1.msra.mxu0 0.0
    %295 = vmatprep.subr.mxu0 0.0
    %296 = vmatpush1.msra.mxu0 0.0
    %297 = vmatprep.subr.mxu0 0.0
    %298 = vmatpush1.msra.mxu0 0.0
    %299 = vmatprep.subr.mxu0 0.0
    %300 = vmatpush1.msra.mxu0 0.0
    %301 = vmatprep.subr.mxu0 0.0
    %302 = vmatpush1.msra.mxu0 0.0
    %303 = vmatprep.subr.mxu0 0.0
    %304 = vmatpush1.msra.mxu0 0.0
    %305 = vmatprep.subr.mxu0 0.0
    %306 = vmatpush1.msra.mxu0 0.0
    %307 = vmatprep.subr.mxu0 0.0
    %308 = vmatpush1.msra.mxu0 0.0
    %309 = vmatprep.subr.mxu0 0.0
    %310 = vmatpush1.msra.mxu0 0.0
    %311 = vmatprep.subr.mxu0 0.0
    %312 = vmatpush1.msra.mxu0 0.0
    %313 = vmatprep.subr.mxu0 0.0
    %314 = vmatpush1.msra.mxu0 0.0
    %315 = vmatprep.subr.mxu0 0.0
    %316 = vmatpush1.msra.mxu0 0.0
    %317 = vmatprep.subr.mxu0 0.0
    %318 = vmatpush1.msra.mxu0 0.0
    %319 = vmatprep.subr.mxu0 0.0
    %320 = vmatpush1.msra.mxu0 0.0
    %321 = vmatprep.subr.mxu0 0.0
    %322 = vmatpush1.msra.mxu0 0.0
    %323 = vmatprep.subr.mxu0 0.0
    %324 = vmatpush1.msra.mxu0 0.0
    %325 = vmatprep.subr.mxu0 0.0
    %326 = vmatpush1.msra.mxu0 0.0
    %327 = vmatprep.subr.mxu0 0.0
    %328 = vmatpush1.msra.mxu0 0.0
    %329 = vmatprep.subr.mxu0 0.0
    %330 = vmatpush1.msra.mxu0 0.0
    %331 = vmatprep.subr.mxu0 0.0
    %332 = vmatpush1.msra.mxu0 0.0
    %333 = vmatprep.subr.mxu0 0.0
    %334 = vmatpush1.msra.mxu0 0.0
    %335 = vmatprep.subr.mxu0 0.0
    %336 = vmatpush1.msra.mxu0 0.0
    %337 = vmatprep.subr.mxu0 0.0
    %338 = vmatpush1.msra.mxu0 0.0
    %339 = vmatprep.subr.mxu0 0.0
    %340 = vmatpush1.msra.mxu0 0.0
    %341 = vmatprep.subr.mxu0 0.0
    %342 = vmatpush1.msra.mxu0 0.0
    %343 = vmatprep.subr.mxu0 0.0
    %344 = vmatpush1.msra.mxu0 0.0
    %345 = vmatprep.subr.mxu0 0.0
    %346 = vmatpush1.msra.mxu0 0.0
    %347 = vmatprep.mubr.f32.mxu0 0.0
    %348 = vmatmul.mubr.f32.gmra.mrb[0].mxu0 %v147
    %v349 = vpop.f32.mrb[0].mxu0
    %v350 = vadd.f32 %v141, %v349
    %v351 = vpop.f32.mrb[0].mxu0
    %352 = vmatprep.mubr.f32.mxu0 0.0
    %353 = vmatmul.mubr.f32.gmra.mrb[0].mxu0 %v150
    %v354 = vpop.f32.mrb[0].mxu0
    %v355 = vadd.f32 %v141, %v354
    %v356 = vpop.f32.mrb[0].mxu0
    %357 = vmatprep.mubr.f32.mxu0 0.0
    %358 = vmatmul.mubr.f32.gmra.mrb[0].mxu0 %v153
    %v359 = vpop.f32.mrb[0].mxu0
    %v360 = vadd.f32 %v141, %v359
    %v361 = vpop.f32.mrb[0].mxu0
    %362 = vmatprep.mubr.f32.mxu0 0.0
    %363 = vmatmul.mubr.f32.gmra.mrb[0].mxu0 %v156
    %v364 = vpop.f32.mrb[0].mxu0
    %v365 = vadd.f32 %v141, %v364
    %v366 = vpop.f32.mrb[0].mxu0
    %367 = vmatprep.mubr.f32.mxu0 0.0
    %368 = vmatmul.mubr.f32.gmra.mrb[0].mxu0 %v159
    %v369 = vpop.f32.mrb[0].mxu0
    %v370 = vadd.f32 %v141, %v369
    %v371 = vpop.f32.mrb[0].mxu0
    %372 = vmatprep.mubr.f32.mxu0 0.0
    %373 = vmatmul.mubr.f32.gmra.mrb[0].mxu0 %v162
    %v374 = vpop.f32.mrb[0].mxu0
    %v375 = vadd.f32 %v141, %v374
    %v376 = vpop.f32.mrb[0].mxu0
    %377 = vmatprep.mubr.f32.mxu0 0.0
    %378 = vmatmul.mubr.f32.gmra.mrb[0].mxu0 %v165
    %v379 = vpop.f32.mrb[0].mxu0
    %v380 = vadd.f32 %v141, %v379
    %v381 = vpop.f32.mrb[0].mxu0
    %382 = vmatprep.mubr.f32.mxu0 0.0
    %383 = vmatmul.mubr.f32.gmra.mrb[0].mxu0 %v168
    %v384 = vpop.f32.mrb[0].mxu0
    %v385 = vadd.f32 %v141, %v384
    %v386 = vpop.f32.mrb[0].mxu0
    %387 = vdwg.mxu0
    %388 = vst [vmem:[#allocation3] sm:$0xff] %v237
    %389 = vst [vmem:[#allocation3 + $0x8] sm:$0xff] %v239
    %390 = vst [vmem:[#allocation3 + $0x10] sm:$0xff] %v350
    %391 = vst [vmem:[#allocation3 + $0x18] sm:$0xff] %v243
    %392 = vst [vmem:[#allocation3 + $0x20] sm:$0xff] %v245
    %393 = vst [vmem:[#allocation3 + $0x28] sm:$0xff] %v355
    %394 = vst [vmem:[#allocation3 + $0x30] sm:$0xff] %v249
    %395 = vst [vmem:[#allocation3 + $0x38] sm:$0xff] %v251
    %396 = vst [vmem:[#allocation3 + $0x40] sm:$0xff] %v360
    %397 = vst [vmem:[#allocation3 + $0x48] sm:$0xff] %v255
    %398 = vst [vmem:[#allocation3 + $0x50] sm:$0xff] %v257
    %399 = vst [vmem:[#allocation3 + $0x58] sm:$0xff] %v365
    %400 = vst [vmem:[#allocation3 + $0x60] sm:$0xff] %v261
    %401 = vst [vmem:[#allocation3 + $0x68] sm:$0xff] %v263
    %402 = vst [vmem:[#allocation3 + $0x70] sm:$0xff] %v370
    %403 = vst [vmem:[#allocation3 + $0x78] sm:$0xff] %v267
    %404 = vst [vmem:[#allocation3 + $0x80] sm:$0xff] %v269
    %405 = vst [vmem:[#allocation3 + $0x88] sm:$0xff] %v375
    %406 = vst [vmem:[#allocation3 + $0x90] sm:$0xff] %v273
    %407 = vst [vmem:[#allocation3 + $0x98] sm:$0xff] %v275
    %408 = vst [vmem:[#allocation3 + $0xa0] sm:$0xff] %v380
    %409 = vst [vmem:[#allocation3 + $0xa8] sm:$0xff] %v279
    %410 = vst [vmem:[#allocation3 + $0xb0] sm:$0xff] %v281
    %411 = vst [vmem:[#allocation3 + $0xb8] sm:$0xff] %v385
    %v412 = vld [vmem:[#allocation13] sm:$0x1]
    %v414 = vlaneseq
    %v415 = vshrl.u32 %v414, 7
    %v416 = vsub.s32 0, %v415
    %v417 = vrot.slane %v412, %v416
    %v419 = vld [vmem:[#allocation2] sm:$0xff]
    %s420 = scalar_lea.vmem [#allocation3], 168
    %v421 = vld [vmem:[%s420] sm:$0xff]
    %v422 = vld [vmem:[%s420 + $0x8] sm:$0xff]
    %v423 = vld [vmem:[%s420 + $0x10] sm:$0xff]
    %v424 = vld [vmem:[#allocation12] sm:$0xff]
    %v425 = vld [vmem:[#allocation12 + $0x8] sm:$0xff]
    %v426 = vld [vmem:[#allocation12 + $0x10] sm:$0xff]
    %v427 = vld [vmem:[#allocation12 + $0x18] sm:$0xff]
    %v428 = vld [vmem:[#allocation12 + $0x20] sm:$0xff]
    %v429 = vld [vmem:[#allocation12 + $0x28] sm:$0xff]
    %v430 = vld [vmem:[#allocation12 + $0x30] sm:$0xff]
    %v431 = vld [vmem:[#allocation12 + $0x38] sm:$0xff]
    %v432 = vld [vmem:[#allocation12 + $0x40] sm:$0xff]
    %v433 = vld [vmem:[#allocation12 + $0x48] sm:$0xff]
    %v434 = vld [vmem:[#allocation12 + $0x50] sm:$0xff]
    %v435 = vld [vmem:[#allocation12 + $0x58] sm:$0xff]
    %v436 = vld [vmem:[#allocation12 + $0x60] sm:$0xff]
    %v437 = vld [vmem:[#allocation12 + $0x68] sm:$0xff]
    %v438 = vld [vmem:[#allocation12 + $0x70] sm:$0xff]
    %v439 = vld [vmem:[#allocation12 + $0x78] sm:$0xff]
    %v440 = vld [vmem:[#allocation12 + $0x80] sm:$0xff]
    %v441 = vld [vmem:[#allocation12 + $0x88] sm:$0xff]
    %v442 = vld [vmem:[#allocation12 + $0x90] sm:$0xff]
    %v443 = vld [vmem:[#allocation12 + $0x98] sm:$0xff]
    %v444 = vld [vmem:[#allocation12 + $0xa0] sm:$0xff]
    %v445 = vld [vmem:[#allocation12 + $0xa8] sm:$0xff]
    %v446 = vld [vmem:[#allocation12 + $0xb0] sm:$0xff]
    %v447 = vld [vmem:[#allocation12 + $0xb8] sm:$0xff]
    %v448 = vld [vmem:[#allocation12 + $0xc0] sm:$0xff]
    %v449 = vld [vmem:[#allocation12 + $0xc8] sm:$0xff]
    %v450 = vld [vmem:[#allocation12 + $0xd0] sm:$0xff]
    %v451 = vld [vmem:[#allocation12 + $0xd8] sm:$0xff]
    %v452 = vld [vmem:[#allocation12 + $0xe0] sm:$0xff]
    %v453 = vld [vmem:[#allocation12 + $0xe8] sm:$0xff]
    %v454 = vld [vmem:[#allocation12 + $0xf0] sm:$0xff]
    %v455 = vld [vmem:[#allocation12 + $0xf8] sm:$0xff]
    %v456 = vld [vmem:[#allocation12 + $0x100] sm:$0xff]
    %v457 = vld [vmem:[#allocation12 + $0x108] sm:$0xff]
    %v458 = vld [vmem:[#allocation12 + $0x110] sm:$0xff]
    %v459 = vld [vmem:[#allocation12 + $0x118] sm:$0xff]
    %v460 = vld [vmem:[#allocation12 + $0x120] sm:$0xff]
    %v461 = vld [vmem:[#allocation12 + $0x128] sm:$0xff]
    %v462 = vld [vmem:[#allocation12 + $0x130] sm:$0xff]
    %v463 = vld [vmem:[#allocation12 + $0x138] sm:$0xff]
    %v464 = vld [vmem:[#allocation12 + $0x140] sm:$0xff]
    %v465 = vld [vmem:[#allocation12 + $0x148] sm:$0xff]
    %v466 = vld [vmem:[#allocation12 + $0x150] sm:$0xff]
    %v467 = vld [vmem:[#allocation12 + $0x158] sm:$0xff]
    %v468 = vld [vmem:[#allocation12 + $0x160] sm:$0xff]
    %v469 = vld [vmem:[#allocation12 + $0x168] sm:$0xff]
    %v470 = vld [vmem:[#allocation12 + $0x170] sm:$0xff]
    %v471 = vld [vmem:[#allocation12 + $0x178] sm:$0xff]
    %472 = vmatprep.subr.mxu0 %v425
    %473 = vmatpush1.msra.mxu0 %v424
    %474 = vmatprep.subr.mxu0 %v428
    %475 = vmatpush1.msra.mxu0 %v427
    %476 = vmatprep.subr.mxu0 %v431
    %477 = vmatpush1.msra.mxu0 %v430
    %478 = vmatprep.subr.mxu0 %v434
    %479 = vmatpush1.msra.mxu0 %v433
    %480 = vmatprep.subr.mxu0 %v437
    %481 = vmatpush1.msra.mxu0 %v436
    %482 = vmatprep.subr.mxu0 %v440
    %483 = vmatpush1.msra.mxu0 %v439
    %484 = vmatprep.subr.mxu0 %v443
    %485 = vmatpush1.msra.mxu0 %v442
    %486 = vmatprep.subr.mxu0 %v446
    %487 = vmatpush1.msra.mxu0 %v445
    %488 = vmatprep.subr.mxu0 %v449
    %489 = vmatpush1.msra.mxu0 %v448
    %490 = vmatprep.subr.mxu0 %v452
    %491 = vmatpush1.msra.mxu0 %v451
    %492 = vmatprep.subr.mxu0 %v455
    %493 = vmatpush1.msra.mxu0 %v454
    %494 = vmatprep.subr.mxu0 %v458
    %495 = vmatpush1.msra.mxu0 %v457
    %496 = vmatprep.subr.mxu0 %v461
    %497 = vmatpush1.msra.mxu0 %v460
    %498 = vmatprep.subr.mxu0 %v464
    %499 = vmatpush1.msra.mxu0 %v463
    %500 = vmatprep.subr.mxu0 %v467
    %501 = vmatpush1.msra.mxu0 %v466
    %502 = vmatprep.subr.mxu0 %v470
    %503 = vmatpush1.msra.mxu0 %v469
    %504 = vmatprep.subr.mxu0 0.0
    %505 = vmatpush1.msra.mxu0 0.0
    %506 = vmatprep.subr.mxu0 0.0
    %507 = vmatpush1.msra.mxu0 0.0
    %508 = vmatprep.subr.mxu0 0.0
    %509 = vmatpush1.msra.mxu0 0.0
    %510 = vmatprep.subr.mxu0 0.0
    %511 = vmatpush1.msra.mxu0 0.0
    %512 = vmatprep.subr.mxu0 0.0
    %513 = vmatpush1.msra.mxu0 0.0
    %514 = vmatprep.subr.mxu0 0.0
    %515 = vmatpush1.msra.mxu0 0.0
    %516 = vmatprep.subr.mxu0 0.0
    %517 = vmatpush1.msra.mxu0 0.0
    %518 = vmatprep.subr.mxu0 0.0
    %519 = vmatpush1.msra.mxu0 0.0
    %520 = vmatprep.subr.mxu0 0.0
    %521 = vmatpush1.msra.mxu0 0.0
    %522 = vmatprep.subr.mxu0 0.0
    %523 = vmatpush1.msra.mxu0 0.0
    %524 = vmatprep.subr.mxu0 0.0
    %525 = vmatpush1.msra.mxu0 0.0
    %526 = vmatprep.subr.mxu0 0.0
    %527 = vmatpush1.msra.mxu0 0.0
    %528 = vmatprep.subr.mxu0 0.0
    %529 = vmatpush1.msra.mxu0 0.0
    %530 = vmatprep.subr.mxu0 0.0
    %531 = vmatpush1.msra.mxu0 0.0
    %532 = vmatprep.subr.mxu0 0.0
    %533 = vmatpush1.msra.mxu0 0.0
    %534 = vmatprep.subr.mxu0 0.0
    %535 = vmatpush1.msra.mxu0 0.0
    %536 = vmatprep.mubr.f32.mxu0 0.0
    %537 = vmatmul.mubr.f32.gmra.mrb[0].mxu0 %v419
    %v538 = vpop.f32.mrb[0].mxu0
    %v539 = vadd.f32 0.0, %v538
    %v540 = vpop.f32.mrb[0].mxu0
    %v541 = vadd.f32 0.0, %v540
    %542 = vdwg.mxu0
    %543 = vmatprep.subr.mxu0 0.0
    %544 = vmatpush1.msra.mxu0 %v426
    %545 = vmatprep.subr.mxu0 0.0
    %546 = vmatpush1.msra.mxu0 %v429
    %547 = vmatprep.subr.mxu0 0.0
    %548 = vmatpush1.msra.mxu0 %v432
    %549 = vmatprep.subr.mxu0 0.0
    %550 = vmatpush1.msra.mxu0 %v435
    %551 = vmatprep.subr.mxu0 0.0
    %552 = vmatpush1.msra.mxu0 %v438
    %553 = vmatprep.subr.mxu0 0.0
    %554 = vmatpush1.msra.mxu0 %v441
    %555 = vmatprep.subr.mxu0 0.0
    %556 = vmatpush1.msra.mxu0 %v444
    %557 = vmatprep.subr.mxu0 0.0
    %558 = vmatpush1.msra.mxu0 %v447
    %559 = vmatprep.subr.mxu0 0.0
    %560 = vmatpush1.msra.mxu0 %v450
    %561 = vmatprep.subr.mxu0 0.0
    %562 = vmatpush1.msra.mxu0 %v453
    %563 = vmatprep.subr.mxu0 0.0
    %564 = vmatpush1.msra.mxu0 %v456
    %565 = vmatprep.subr.mxu0 0.0
    %566 = vmatpush1.msra.mxu0 %v459
    %567 = vmatprep.subr.mxu0 0.0
    %568 = vmatpush1.msra.mxu0 %v462
    %569 = vmatprep.subr.mxu0 0.0
    %570 = vmatpush1.msra.mxu0 %v465
    %571 = vmatprep.subr.mxu0 0.0
    %572 = vmatpush1.msra.mxu0 %v468
    %573 = vmatprep.subr.mxu0 0.0
    %574 = vmatpush1.msra.mxu0 %v471
    %575 = vmatprep.subr.mxu0 0.0
    %576 = vmatpush1.msra.mxu0 0.0
    %577 = vmatprep.subr.mxu0 0.0
    %578 = vmatpush1.msra.mxu0 0.0
    %579 = vmatprep.subr.mxu0 0.0
    %580 = vmatpush1.msra.mxu0 0.0
    %581 = vmatprep.subr.mxu0 0.0
    %582 = vmatpush1.msra.mxu0 0.0
    %583 = vmatprep.subr.mxu0 0.0
    %584 = vmatpush1.msra.mxu0 0.0
    %585 = vmatprep.subr.mxu0 0.0
    %586 = vmatpush1.msra.mxu0 0.0
    %587 = vmatprep.subr.mxu0 0.0
    %588 = vmatpush1.msra.mxu0 0.0
    %589 = vmatprep.subr.mxu0 0.0
    %590 = vmatpush1.msra.mxu0 0.0
    %591 = vmatprep.subr.mxu0 0.0
    %592 = vmatpush1.msra.mxu0 0.0
    %593 = vmatprep.subr.mxu0 0.0
    %594 = vmatpush1.msra.mxu0 0.0
    %595 = vmatprep.subr.mxu0 0.0
    %596 = vmatpush1.msra.mxu0 0.0
    %597 = vmatprep.subr.mxu0 0.0
    %598 = vmatpush1.msra.mxu0 0.0
    %599 = vmatprep.subr.mxu0 0.0
    %600 = vmatpush1.msra.mxu0 0.0
    %601 = vmatprep.subr.mxu0 0.0
    %602 = vmatpush1.msra.mxu0 0.0
    %603 = vmatprep.subr.mxu0 0.0
    %604 = vmatpush1.msra.mxu0 0.0
    %605 = vmatprep.subr.mxu0 0.0
    %606 = vmatpush1.msra.mxu0 0.0
    %607 = vmatprep.mubr.f32.mxu0 0.0
    %608 = vmatmul.mubr.f32.gmra.mrb[0].mxu0 %v419
    %v609 = vpop.f32.mrb[0].mxu0
    %v610 = vadd.f32 0.0, %v609
    %v611 = vpop.f32.mrb[0].mxu0
    %612 = vdwg.mxu0
    %v613 = vadd.f32 %v421, %v539
    %v614 = vxor.u32 %v613, 2147483648
    %v615 = vmul.f32 %v614, 1.442695
    %v616 = vpow.pop %v615
    %v617 = vadd.f32 %v616, 1.0
    %v618 = vrcp.pop %v617
    %v619 = vmul.f32 1.0, %v618
    %v620 = vadd.f32 %v422, %v541
    %v621 = vxor.u32 %v620, 2147483648
    %v622 = vmul.f32 %v621, 1.442695
    %v623 = vpow.pop %v622
    %v624 = vadd.f32 %v623, 1.0
    %v625 = vrcp.pop %v624
    %v626 = vmul.f32 1.0, %v625
    %v627 = vadd.f32 %v610, %v417
    %v628 = vmul.f32 %v619, %v627
    %v629 = vadd.f32 %v423, %v628
    %v630 = vtanh.pop %v629
    %v631 = vsub.f32 1.0, %v626
    %v632 = vmul.f32 %v631, %v630
    %v633 = vmul.f32 %v626, %v419
    %v634 = vadd.f32 %v632, %v633
    %s635 = scalar_lea.vmem [#allocation15], 56
    %636 = vst [vmem:[%s635] sm:$0xff] %v634
    %s637 = scalar_lea.vmem [#allocation3], 144
    %v638 = vld [vmem:[%s637] sm:$0xff]
    %v639 = vld [vmem:[%s637 + $0x8] sm:$0xff]
    %v640 = vld [vmem:[%s637 + $0x10] sm:$0xff]
    %v641 = vld [vmem:[#allocation12] sm:$0xff]
    %v642 = vld [vmem:[#allocation12 + $0x8] sm:$0xff]
    %v643 = vld [vmem:[#allocation12 + $0x10] sm:$0xff]
    %v644 = vld [vmem:[#allocation12 + $0x18] sm:$0xff]
    %v645 = vld [vmem:[#allocation12 + $0x20] sm:$0xff]
    %v646 = vld [vmem:[#allocation12 + $0x28] sm:$0xff]
    %v647 = vld [vmem:[#allocation12 + $0x30] sm:$0xff]
    %v648 = vld [vmem:[#allocation12 + $0x38] sm:$0xff]
    %v649 = vld [vmem:[#allocation12 + $0x40] sm:$0xff]
    %v650 = vld [vmem:[#allocation12 + $0x48] sm:$0xff]
    %v651 = vld [vmem:[#allocation12 + $0x50] sm:$0xff]
    %v652 = vld [vmem:[#allocation12 + $0x58] sm:$0xff]
    %v653 = vld [vmem:[#allocation12 + $0x60] sm:$0xff]
    %v654 = vld [vmem:[#allocation12 + $0x68] sm:$0xff]
    %v655 = vld [vmem:[#allocation12 + $0x70] sm:$0xff]
    %v656 = vld [vmem:[#allocation12 + $0x78] sm:$0xff]
    %v657 = vld [vmem:[#allocation12 + $0x80] sm:$0xff]
    %v658 = vld [vmem:[#allocation12 + $0x88] sm:$0xff]
    %v659 = vld [vmem:[#allocation12 + $0x90] sm:$0xff]
    %v660 = vld [vmem:[#allocation12 + $0x98] sm:$0xff]
    %v661 = vld [vmem:[#allocation12 + $0xa0] sm:$0xff]
    %v662 = vld [vmem:[#allocation12 + $0xa8] sm:$0xff]
    %v663 = vld [vmem:[#allocation12 + $0xb0] sm:$0xff]
    %v664 = vld [vmem:[#allocation12 + $0xb8] sm:$0xff]
    %v665 = vld [vmem:[#allocation12 + $0xc0] sm:$0xff]
    %v666 = vld [vmem:[#allocation12 + $0xc8] sm:$0xff]
    %v667 = vld [vmem:[#allocation12 + $0xd0] sm:$0xff]
    %v668 = vld [vmem:[#allocation12 + $0xd8] sm:$0xff]
    %v669 = vld [vmem:[#allocation12 + $0xe0] sm:$0xff]
    %v670 = vld [vmem:[#allocation12 + $0xe8] sm:$0xff]
    %v671 = vld [vmem:[#allocation12 + $0xf0] sm:$0xff]
    %v672 = vld [vmem:[#allocation12 + $0xf8] sm:$0xff]
    %v673 = vld [vmem:[#allocation12 + $0x100] sm:$0xff]
    %v674 = vld [vmem:[#allocation12 + $0x108] sm:$0xff]
    %v675 = vld [vmem:[#allocation12 + $0x110] sm:$0xff]
    %v676 = vld [vmem:[#allocation12 + $0x118] sm:$0xff]
    %v677 = vld [vmem:[#allocation12 + $0x120] sm:$0xff]
    %v678 = vld [vmem:[#allocation12 + $0x128] sm:$0xff]
    %v679 = vld [vmem:[#allocation12 + $0x130] sm:$0xff]
    %v680 = vld [vmem:[#allocation12 + $0x138] sm:$0xff]
    %v681 = vld [vmem:[#allocation12 + $0x140] sm:$0xff]
    %v682 = vld [vmem:[#allocation12 + $0x148] sm:$0xff]
    %v683 = vld [vmem:[#allocation12 + $0x150] sm:$0xff]
    %v684 = vld [vmem:[#allocation12 + $0x158] sm:$0xff]
    %v685 = vld [vmem:[#allocation12 + $0x160] sm:$0xff]
    %v686 = vld [vmem:[#allocation12 + $0x168] sm:$0xff]
    %v687 = vld [vmem:[#allocation12 + $0x170] sm:$0xff]
    %v688 = vld [vmem:[#allocation12 + $0x178] sm:$0xff]
    %689 = vmatprep.subr.mxu0 %v642
    %690 = vmatpush1.msra.mxu0 %v641
    %691 = vmatprep.subr.mxu0 %v645
    %692 = vmatpush1.msra.mxu0 %v644
    %693 = vmatprep.subr.mxu0 %v648
    %694 = vmatpush1.msra.mxu0 %v647
    %695 = vmatprep.subr.mxu0 %v651
    %696 = vmatpush1.msra.mxu0 %v650
    %697 = vmatprep.subr.mxu0 %v654
    %698 = vmatpush1.msra.mxu0 %v653
    %699 = vmatprep.subr.mxu0 %v657
    %700 = vmatpush1.msra.mxu0 %v656
    %701 = vmatprep.subr.mxu0 %v660
    %702 = vmatpush1.msra.mxu0 %v659
    %703 = vmatprep.subr.mxu0 %v663
    %704 = vmatpush1.msra.mxu0 %v662
    %705 = vmatprep.subr.mxu0 %v666
    %706 = vmatpush1.msra.mxu0 %v665
    %707 = vmatprep.subr.mxu0 %v669
    %708 = vmatpush1.msra.mxu0 %v668
    %709 = vmatprep.subr.mxu0 %v672
    %710 = vmatpush1.msra.mxu0 %v671
    %711 = vmatprep.subr.mxu0 %v675
    %712 = vmatpush1.msra.mxu0 %v674
    %713 = vmatprep.subr.mxu0 %v678
    %714 = vmatpush1.msra.mxu0 %v677
    %715 = vmatprep.subr.mxu0 %v681
    %716 = vmatpush1.msra.mxu0 %v680
    %717 = vmatprep.subr.mxu0 %v684
    %718 = vmatpush1.msra.mxu0 %v683
    %719 = vmatprep.subr.mxu0 %v687
    %720 = vmatpush1.msra.mxu0 %v686
    %721 = vmatprep.subr.mxu0 0.0
    %722 = vmatpush1.msra.mxu0 0.0
    %723 = vmatprep.subr.mxu0 0.0
    %724 = vmatpush1.msra.mxu0 0.0
    %725 = vmatprep.subr.mxu0 0.0
    %726 = vmatpush1.msra.mxu0 0.0
    %727 = vmatprep.subr.mxu0 0.0
    %728 = vmatpush1.msra.mxu0 0.0
    %729 = vmatprep.subr.mxu0 0.0
    %730 = vmatpush1.msra.mxu0 0.0
    %731 = vmatprep.subr.mxu0 0.0
    %732 = vmatpush1.msra.mxu0 0.0
    %733 = vmatprep.subr.mxu0 0.0
    %734 = vmatpush1.msra.mxu0 0.0
    %735 = vmatprep.subr.mxu0 0.0
    %736 = vmatpush1.msra.mxu0 0.0
    %737 = vmatprep.subr.mxu0 0.0
    %738 = vmatpush1.msra.mxu0 0.0
    %739 = vmatprep.subr.mxu0 0.0
    %740 = vmatpush1.msra.mxu0 0.0
    %741 = vmatprep.subr.mxu0 0.0
    %742 = vmatpush1.msra.mxu0 0.0
    %743 = vmatprep.subr.mxu0 0.0
    %744 = vmatpush1.msra.mxu0 0.0
    %745 = vmatprep.subr.mxu0 0.0
    %746 = vmatpush1.msra.mxu0 0.0
    %747 = vmatprep.subr.mxu0 0.0
    %748 = vmatpush1.msra.mxu0 0.0
    %749 = vmatprep.subr.mxu0 0.0
    %750 = vmatpush1.msra.mxu0 0.0
    %751 = vmatprep.subr.mxu0 0.0
    %752 = vmatpush1.msra.mxu0 0.0
    %753 = vmatprep.mubr.f32.mxu0 0.0
    %754 = vmatmul.mubr.f32.gmra.mrb[0].mxu0 %v634
    %v755 = vpop.f32.mrb[0].mxu0
    %v756 = vadd.f32 0.0, %v755
    %v757 = vpop.f32.mrb[0].mxu0
    %v758 = vadd.f32 0.0, %v757
    %759 = vdwg.mxu0
    %760 = vmatprep.subr.mxu0 0.0
    %761 = vmatpush1.msra.mxu0 %v643
    %762 = vmatprep.subr.mxu0 0.0
    %763 = vmatpush1.msra.mxu0 %v646
    %764 = vmatprep.subr.mxu0 0.0
    %765 = vmatpush1.msra.mxu0 %v649
    %766 = vmatprep.subr.mxu0 0.0
    %767 = vmatpush1.msra.mxu0 %v652
    %768 = vmatprep.subr.mxu0 0.0
    %769 = vmatpush1.msra.mxu0 %v655
    %770 = vmatprep.subr.mxu0 0.0
    %771 = vmatpush1.msra.mxu0 %v658
    %772 = vmatprep.subr.mxu0 0.0
    %773 = vmatpush1.msra.mxu0 %v661
    %774 = vmatprep.subr.mxu0 0.0
    %775 = vmatpush1.msra.mxu0 %v664
    %776 = vmatprep.subr.mxu0 0.0
    %777 = vmatpush1.msra.mxu0 %v667
    %778 = vmatprep.subr.mxu0 0.0
    %779 = vmatpush1.msra.mxu0 %v670
    %780 = vmatprep.subr.mxu0 0.0
    %781 = vmatpush1.msra.mxu0 %v673
    %782 = vmatprep.subr.mxu0 0.0
    %783 = vmatpush1.msra.mxu0 %v676
    %784 = vmatprep.subr.mxu0 0.0
    %785 = vmatpush1.msra.mxu0 %v679
    %786 = vmatprep.subr.mxu0 0.0
    %787 = vmatpush1.msra.mxu0 %v682
    %788 = vmatprep.subr.mxu0 0.0
    %789 = vmatpush1.msra.mxu0 %v685
    %790 = vmatprep.subr.mxu0 0.0
    %791 = vmatpush1.msra.mxu0 %v688
    %792 = vmatprep.subr.mxu0 0.0
    %793 = vmatpush1.msra.mxu0 0.0
    %794 = vmatprep.subr.mxu0 0.0
    %795 = vmatpush1.msra.mxu0 0.0
    %796 = vmatprep.subr.mxu0 0.0
    %797 = vmatpush1.msra.mxu0 0.0
    %798 = vmatprep.subr.mxu0 0.0
    %799 = vmatpush1.msra.mxu0 0.0
    %800 = vmatprep.subr.mxu0 0.0
    %801 = vmatpush1.msra.mxu0 0.0
    %802 = vmatprep.subr.mxu0 0.0
    %803 = vmatpush1.msra.mxu0 0.0
    %804 = vmatprep.subr.mxu0 0.0
    %805 = vmatpush1.msra.mxu0 0.0
    %806 = vmatprep.subr.mxu0 0.0
    %807 = vmatpush1.msra.mxu0 0.0
    %808 = vmatprep.subr.mxu0 0.0
    %809 = vmatpush1.msra.mxu0 0.0
    %810 = vmatprep.subr.mxu0 0.0
    %811 = vmatpush1.msra.mxu0 0.0
    %812 = vmatprep.subr.mxu0 0.0
    %813 = vmatpush1.msra.mxu0 0.0
    %814 = vmatprep.subr.mxu0 0.0
    %815 = vmatpush1.msra.mxu0 0.0
    %816 = vmatprep.subr.mxu0 0.0
    %817 = vmatpush1.msra.mxu0 0.0
    %818 = vmatprep.subr.mxu0 0.0
    %819 = vmatpush1.msra.mxu0 0.0
    %820 = vmatprep.subr.mxu0 0.0
    %821 = vmatpush1.msra.mxu0 0.0
    %822 = vmatprep.subr.mxu0 0.0
    %823 = vmatpush1.msra.mxu0 0.0
    %824 = vmatprep.mubr.f32.mxu0 0.0
    %825 = vmatmul.mubr.f32.gmra.mrb[0].mxu0 %v634
    %v826 = vpop.f32.mrb[0].mxu0
    %v827 = vadd.f32 0.0, %v826
    %v828 = vpop.f32.mrb[0].mxu0
    %829 = vdwg.mxu0
    %v830 = vadd.f32 %v638, %v756
    %v831 = vxor.u32 %v830, 2147483648
    %v832 = vmul.f32 %v831, 1.442695
    %v833 = vpow.pop %v832
    %v834 = vadd.f32 %v833, 1.0
    %v835 = vrcp.pop %v834
    %v836 = vmul.f32 1.0, %v835
    %v837 = vadd.f32 %v639, %v758
    %v838 = vxor.u32 %v837, 2147483648
    %v839 = vmul.f32 %v838, 1.442695
    %v840 = vpow.pop %v839
    %v841 = vadd.f32 %v840, 1.0
    %v842 = vrcp.pop %v841
    %v843 = vmul.f32 1.0, %v842
    %v844 = vadd.f32 %v827, %v417
    %v845 = vmul.f32 %v836, %v844
    %v846 = vadd.f32 %v640, %v845
    %v847 = vtanh.pop %v846
    %v848 = vsub.f32 1.0, %v843
    %v849 = vmul.f32 %v848, %v847
    %v850 = vmul.f32 %v843, %v634
    %v851 = vadd.f32 %v849, %v850
    %s852 = scalar_lea.vmem [#allocation15], 48
    %853 = vst [vmem:[%s852] sm:$0xff] %v851
    %s854 = scalar_lea.vmem [#allocation3], 120
    %v855 = vld [vmem:[%s854] sm:$0xff]
    %v856 = vld [vmem:[%s854 + $0x8] sm:$0xff]
    %v857 = vld [vmem:[%s854 + $0x10] sm:$0xff]
    %v858 = vld [vmem:[#allocation12] sm:$0xff]
    %v859 = vld [vmem:[#allocation12 + $0x8] sm:$0xff]
    %v860 = vld [vmem:[#allocation12 + $0x10] sm:$0xff]
    %v861 = vld [vmem:[#allocation12 + $0x18] sm:$0xff]
    %v862 = vld [vmem:[#allocation12 + $0x20] sm:$0xff]
    %v863 = vld [vmem:[#allocation12 + $0x28] sm:$0xff]
    %v864 = vld [vmem:[#allocation12 + $0x30] sm:$0xff]
    %v865 = vld [vmem:[#allocation12 + $0x38] sm:$0xff]
    %v866 = vld [vmem:[#allocation12 + $0x40] sm:$0xff]
    %v867 = vld [vmem:[#allocation12 + $0x48] sm:$0xff]
    %v868 = vld [vmem:[#allocation12 + $0x50] sm:$0xff]
    %v869 = vld [vmem:[#allocation12 + $0x58] sm:$0xff]
    %v870 = vld [vmem:[#allocation12 + $0x60] sm:$0xff]
    %v871 = vld [vmem:[#allocation12 + $0x68] sm:$0xff]
    %v872 = vld [vmem:[#allocation12 + $0x70] sm:$0xff]
    %v873 = vld [vmem:[#allocation12 + $0x78] sm:$0xff]
    %v874 = vld [vmem:[#allocation12 + $0x80] sm:$0xff]
    %v875 = vld [vmem:[#allocation12 + $0x88] sm:$0xff]
    %v876 = vld [vmem:[#allocation12 + $0x90] sm:$0xff]
    %v877 = vld [vmem:[#allocation12 + $0x98] sm:$0xff]
    %v878 = vld [vmem:[#allocation12 + $0xa0] sm:$0xff]
    %v879 = vld [vmem:[#allocation12 + $0xa8] sm:$0xff]
    %v880 = vld [vmem:[#allocation12 + $0xb0] sm:$0xff]
    %v881 = vld [vmem:[#allocation12 + $0xb8] sm:$0xff]
    %v882 = vld [vmem:[#allocation12 + $0xc0] sm:$0xff]
    %v883 = vld [vmem:[#allocation12 + $0xc8] sm:$0xff]
    %v884 = vld [vmem:[#allocation12 + $0xd0] sm:$0xff]
    %v885 = vld [vmem:[#allocation12 + $0xd8] sm:$0xff]
    %v886 = vld [vmem:[#allocation12 + $0xe0] sm:$0xff]
    %v887 = vld [vmem:[#allocation12 + $0xe8] sm:$0xff]
    %v888 = vld [vmem:[#allocation12 + $0xf0] sm:$0xff]
    %v889 = vld [vmem:[#allocation12 + $0xf8] sm:$0xff]
    %v890 = vld [vmem:[#allocation12 + $0x100] sm:$0xff]
    %v891 = vld [vmem:[#allocation12 + $0x108] sm:$0xff]
    %v892 = vld [vmem:[#allocation12 + $0x110] sm:$0xff]
    %v893 = vld [vmem:[#allocation12 + $0x118] sm:$0xff]
    %v894 = vld [vmem:[#allocation12 + $0x120] sm:$0xff]
    %v895 = vld [vmem:[#allocation12 + $0x128] sm:$0xff]
    %v896 = vld [vmem:[#allocation12 + $0x130] sm:$0xff]
    %v897 = vld [vmem:[#allocation12 + $0x138] sm:$0xff]
    %v898 = vld [vmem:[#allocation12 + $0x140] sm:$0xff]
    %v899 = vld [vmem:[#allocation12 + $0x148] sm:$0xff]
    %v900 = vld [vmem:[#allocation12 + $0x150] sm:$0xff]
    %v901 = vld [vmem:[#allocation12 + $0x158] sm:$0xff]
    %v902 = vld [vmem:[#allocation12 + $0x160] sm:$0xff]
    %v903 = vld [vmem:[#allocation12 + $0x168] sm:$0xff]
    %v904 = vld [vmem:[#allocation12 + $0x170] sm:$0xff]
    %v905 = vld [vmem:[#allocation12 + $0x178] sm:$0xff]
    %906 = vmatprep.subr.mxu0 %v859
    %907 = vmatpush1.msra.mxu0 %v858
    %908 = vmatprep.subr.mxu0 %v862
    %909 = vmatpush1.msra.mxu0 %v861
    %910 = vmatprep.subr.mxu0 %v865
    %911 = vmatpush1.msra.mxu0 %v864
    %912 = vmatprep.subr.mxu0 %v868
    %913 = vmatpush1.msra.mxu0 %v867
    %914 = vmatprep.subr.mxu0 %v871
    %915 = vmatpush1.msra.mxu0 %v870
    %916 = vmatprep.subr.mxu0 %v874
    %917 = vmatpush1.msra.mxu0 %v873
    %918 = vmatprep.subr.mxu0 %v877
    %919 = vmatpush1.msra.mxu0 %v876
    %920 = vmatprep.subr.mxu0 %v880
    %921 = vmatpush1.msra.mxu0 %v879
    %922 = vmatprep.subr.mxu0 %v883
    %923 = vmatpush1.msra.mxu0 %v882
    %924 = vmatprep.subr.mxu0 %v886
    %925 = vmatpush1.msra.mxu0 %v885
    %926 = vmatprep.subr.mxu0 %v889
    %927 = vmatpush1.msra.mxu0 %v888
    %928 = vmatprep.subr.mxu0 %v892
    %929 = vmatpush1.msra.mxu0 %v891
    %930 = vmatprep.subr.mxu0 %v895
    %931 = vmatpush1.msra.mxu0 %v894
    %932 = vmatprep.subr.mxu0 %v898
    %933 = vmatpush1.msra.mxu0 %v897
    %934 = vmatprep.subr.mxu0 %v901
    %935 = vmatpush1.msra.mxu0 %v900
    %936 = vmatprep.subr.mxu0 %v904
    %937 = vmatpush1.msra.mxu0 %v903
    %938 = vmatprep.subr.mxu0 0.0
    %939 = vmatpush1.msra.mxu0 0.0
    %940 = vmatprep.subr.mxu0 0.0
    %941 = vmatpush1.msra.mxu0 0.0
    %942 = vmatprep.subr.mxu0 0.0
    %943 = vmatpush1.msra.mxu0 0.0
    %944 = vmatprep.subr.mxu0 0.0
    %945 = vmatpush1.msra.mxu0 0.0
    %946 = vmatprep.subr.mxu0 0.0
    %947 = vmatpush1.msra.mxu0 0.0
    %948 = vmatprep.subr.mxu0 0.0
    %949 = vmatpush1.msra.mxu0 0.0
    %950 = vmatprep.subr.mxu0 0.0
    %951 = vmatpush1.msra.mxu0 0.0
    %952 = vmatprep.subr.mxu0 0.0
    %953 = vmatpush1.msra.mxu0 0.0
    %954 = vmatprep.subr.mxu0 0.0
    %955 = vmatpush1.msra.mxu0 0.0
    %956 = vmatprep.subr.mxu0 0.0
    %957 = vmatpush1.msra.mxu0 0.0
    %958 = vmatprep.subr.mxu0 0.0
    %959 = vmatpush1.msra.mxu0 0.0
    %960 = vmatprep.subr.mxu0 0.0
    %961 = vmatpush1.msra.mxu0 0.0
    %962 = vmatprep.subr.mxu0 0.0
    %963 = vmatpush1.msra.mxu0 0.0
    %964 = vmatprep.subr.mxu0 0.0
    %965 = vmatpush1.msra.mxu0 0.0
    %966 = vmatprep.subr.mxu0 0.0
    %967 = vmatpush1.msra.mxu0 0.0
    %968 = vmatprep.subr.mxu0 0.0
    %969 = vmatpush1.msra.mxu0 0.0
    %970 = vmatprep.mubr.f32.mxu0 0.0
    %971 = vmatmul.mubr.f32.gmra.mrb[0].mxu0 %v851
    %v972 = vpop.f32.mrb[0].mxu0
    %v973 = vadd.f32 0.0, %v972
    %v974 = vpop.f32.mrb[0].mxu0
    %v975 = vadd.f32 0.0, %v974
    %976 = vdwg.mxu0
    %977 = vmatprep.subr.mxu0 0.0
    %978 = vmatpush1.msra.mxu0 %v860
    %979 = vmatprep.subr.mxu0 0.0
    %980 = vmatpush1.msra.mxu0 %v863
    %981 = vmatprep.subr.mxu0 0.0
    %982 = vmatpush1.msra.mxu0 %v866
    %983 = vmatprep.subr.mxu0 0.0
    %984 = vmatpush1.msra.mxu0 %v869
    %985 = vmatprep.subr.mxu0 0.0
    %986 = vmatpush1.msra.mxu0 %v872
    %987 = vmatprep.subr.mxu0 0.0
    %988 = vmatpush1.msra.mxu0 %v875
    %989 = vmatprep.subr.mxu0 0.0
    %990 = vmatpush1.msra.mxu0 %v878
    %991 = vmatprep.subr.mxu0 0.0
    %992 = vmatpush1.msra.mxu0 %v881
    %993 = vmatprep.subr.mxu0 0.0
    %994 = vmatpush1.msra.mxu0 %v884
    %995 = vmatprep.subr.mxu0 0.0
    %996 = vmatpush1.msra.mxu0 %v887
    %997 = vmatprep.subr.mxu0 0.0
    %998 = vmatpush1.msra.mxu0 %v890
    %999 = vmatprep.subr.mxu0 0.0
    %1000 = vmatpush1.msra.mxu0 %v893
    %1001 = vmatprep.subr.mxu0 0.0
    %1002 = vmatpush1.msra.mxu0 %v896
    %1003 = vmatprep.subr.mxu0 0.0
    %1004 = vmatpush1.msra.mxu0 %v899
    %1005 = vmatprep.subr.mxu0 0.0
    %1006 = vmatpush1.msra.mxu0 %v902
    %1007 = vmatprep.subr.mxu0 0.0
    %1008 = vmatpush1.msra.mxu0 %v905
    %1009 = vmatprep.subr.mxu0 0.0
    %1010 = vmatpush1.msra.mxu0 0.0
    %1011 = vmatprep.subr.mxu0 0.0
    %1012 = vmatpush1.msra.mxu0 0.0
    %1013 = vmatprep.subr.mxu0 0.0
    %1014 = vmatpush1.msra.mxu0 0.0
    %1015 = vmatprep.subr.mxu0 0.0
    %1016 = vmatpush1.msra.mxu0 0.0
    %1017 = vmatprep.subr.mxu0 0.0
    %1018 = vmatpush1.msra.mxu0 0.0
    %1019 = vmatprep.subr.mxu0 0.0
    %1020 = vmatpush1.msra.mxu0 0.0
    %1021 = vmatprep.subr.mxu0 0.0
    %1022 = vmatpush1.msra.mxu0 0.0
    %1023 = vmatprep.subr.mxu0 0.0
    %1024 = vmatpush1.msra.mxu0 0.0
    %1025 = vmatprep.subr.mxu0 0.0
    %1026 = vmatpush1.msra.mxu0 0.0
    %1027 = vmatprep.subr.mxu0 0.0
    %1028 = vmatpush1.msra.mxu0 0.0
    %1029 = vmatprep.subr.mxu0 0.0
    %1030 = vmatpush1.msra.mxu0 0.0
    %1031 = vmatprep.subr.mxu0 0.0
    %1032 = vmatpush1.msra.mxu0 0.0
    %1033 = vmatprep.subr.mxu0 0.0
    %1034 = vmatpush1.msra.mxu0 0.0
    %1035 = vmatprep.subr.mxu0 0.0
    %1036 = vmatpush1.msra.mxu0 0.0
    %1037 = vmatprep.subr.mxu0 0.0
    %1038 = vmatpush1.msra.mxu0 0.0
    %1039 = vmatprep.subr.mxu0 0.0
    %1040 = vmatpush1.msra.mxu0 0.0
    %1041 = vmatprep.mubr.f32.mxu0 0.0
    %1042 = vmatmul.mubr.f32.gmra.mrb[0].mxu0 %v851
    %v1043 = vpop.f32.mrb[0].mxu0
    %v1044 = vadd.f32 0.0, %v1043
    %v1045 = vpop.f32.mrb[0].mxu0
    %1046 = vdwg.mxu0
    %v1047 = vadd.f32 %v855, %v973
    %v1048 = vxor.u32 %v1047, 2147483648
    %v1049 = vmul.f32 %v1048, 1.442695
    %v1050 = vpow.pop %v1049
    %v1051 = vadd.f32 %v1050, 1.0
    %v1052 = vrcp.pop %v1051
    %v1053 = vmul.f32 1.0, %v1052
    %v1054 = vadd.f32 %v856, %v975
    %v1055 = vxor.u32 %v1054, 2147483648
    %v1056 = vmul.f32 %v1055, 1.442695
    %v1057 = vpow.pop %v1056
    %v1058 = vadd.f32 %v1057, 1.0
    %v1059 = vrcp.pop %v1058
    %v1060 = vmul.f32 1.0, %v1059
    %v1061 = vadd.f32 %v1044, %v417
    %v1062 = vmul.f32 %v1053, %v1061
    %v1063 = vadd.f32 %v857, %v1062
    %v1064 = vtanh.pop %v1063
    %v1065 = vsub.f32 1.0, %v1060
    %v1066 = vmul.f32 %v1065, %v1064
    %v1067 = vmul.f32 %v1060, %v851
    %v1068 = vadd.f32 %v1066, %v1067
    %s1069 = scalar_lea.vmem [#allocation15], 40
    %1070 = vst [vmem:[%s1069] sm:$0xff] %v1068
    %s1071 = scalar_lea.vmem [#allocation3], 96
    %v1072 = vld [vmem:[%s1071] sm:$0xff]
    %v1073 = vld [vmem:[%s1071 + $0x8] sm:$0xff]
    %v1074 = vld [vmem:[%s1071 + $0x10] sm:$0xff]
    %v1075 = vld [vmem:[#allocation12] sm:$0xff]
    %v1076 = vld [vmem:[#allocation12 + $0x8] sm:$0xff]
    %v1077 = vld [vmem:[#allocation12 + $0x10] sm:$0xff]
    %v1078 = vld [vmem:[#allocation12 + $0x18] sm:$0xff]
    %v1079 = vld [vmem:[#allocation12 + $0x20] sm:$0xff]
    %v1080 = vld [vmem:[#allocation12 + $0x28] sm:$0xff]
    %v1081 = vld [vmem:[#allocation12 + $0x30] sm:$0xff]
    %v1082 = vld [vmem:[#allocation12 + $0x38] sm:$0xff]
    %v1083 = vld [vmem:[#allocation12 + $0x40] sm:$0xff]
    %v1084 = vld [vmem:[#allocation12 + $0x48] sm:$0xff]
    %v1085 = vld [vmem:[#allocation12 + $0x50] sm:$0xff]
    %v1086 = vld [vmem:[#allocation12 + $0x58] sm:$0xff]
    %v1087 = vld [vmem:[#allocation12 + $0x60] sm:$0xff]
    %v1088 = vld [vmem:[#allocation12 + $0x68] sm:$0xff]
    %v1089 = vld [vmem:[#allocation12 + $0x70] sm:$0xff]
    %v1090 = vld [vmem:[#allocation12 + $0x78] sm:$0xff]
    %v1091 = vld [vmem:[#allocation12 + $0x80] sm:$0xff]
    %v1092 = vld [vmem:[#allocation12 + $0x88] sm:$0xff]
    %v1093 = vld [vmem:[#allocation12 + $0x90] sm:$0xff]
    %v1094 = vld [vmem:[#allocation12 + $0x98] sm:$0xff]
    %v1095 = vld [vmem:[#allocation12 + $0xa0] sm:$0xff]
    %v1096 = vld [vmem:[#allocation12 + $0xa8] sm:$0xff]
    %v1097 = vld [vmem:[#allocation12 + $0xb0] sm:$0xff]
    %v1098 = vld [vmem:[#allocation12 + $0xb8] sm:$0xff]
    %v1099 = vld [vmem:[#allocation12 + $0xc0] sm:$0xff]
    %v1100 = vld [vmem:[#allocation12 + $0xc8] sm:$0xff]
    %v1101 = vld [vmem:[#allocation12 + $0xd0] sm:$0xff]
    %v1102 = vld [vmem:[#allocation12 + $0xd8] sm:$0xff]
    %v1103 = vld [vmem:[#allocation12 + $0xe0] sm:$0xff]
    %v1104 = vld [vmem:[#allocation12 + $0xe8] sm:$0xff]
    %v1105 = vld [vmem:[#allocation12 + $0xf0] sm:$0xff]
    %v1106 = vld [vmem:[#allocation12 + $0xf8] sm:$0xff]
    %v1107 = vld [vmem:[#allocation12 + $0x100] sm:$0xff]
    %v1108 = vld [vmem:[#allocation12 + $0x108] sm:$0xff]
    %v1109 = vld [vmem:[#allocation12 + $0x110] sm:$0xff]
    %v1110 = vld [vmem:[#allocation12 + $0x118] sm:$0xff]
    %v1111 = vld [vmem:[#allocation12 + $0x120] sm:$0xff]
    %v1112 = vld [vmem:[#allocation12 + $0x128] sm:$0xff]
    %v1113 = vld [vmem:[#allocation12 + $0x130] sm:$0xff]
    %v1114 = vld [vmem:[#allocation12 + $0x138] sm:$0xff]
    %v1115 = vld [vmem:[#allocation12 + $0x140] sm:$0xff]
    %v1116 = vld [vmem:[#allocation12 + $0x148] sm:$0xff]
    %v1117 = vld [vmem:[#allocation12 + $0x150] sm:$0xff]
    %v1118 = vld [vmem:[#allocation12 + $0x158] sm:$0xff]
    %v1119 = vld [vmem:[#allocation12 + $0x160] sm:$0xff]
    %v1120 = vld [vmem:[#allocation12 + $0x168] sm:$0xff]
    %v1121 = vld [vmem:[#allocation12 + $0x170] sm:$0xff]
    %v1122 = vld [vmem:[#allocation12 + $0x178] sm:$0xff]
    %1123 = vmatprep.subr.mxu0 %v1076
    %1124 = vmatpush1.msra.mxu0 %v1075
    %1125 = vmatprep.subr.mxu0 %v1079
    %1126 = vmatpush1.msra.mxu0 %v1078
    %1127 = vmatprep.subr.mxu0 %v1082
    %1128 = vmatpush1.msra.mxu0 %v1081
    %1129 = vmatprep.subr.mxu0 %v1085
    %1130 = vmatpush1.msra.mxu0 %v1084
    %1131 = vmatprep.subr.mxu0 %v1088
    %1132 = vmatpush1.msra.mxu0 %v1087
    %1133 = vmatprep.subr.mxu0 %v1091
    %1134 = vmatpush1.msra.mxu0 %v1090
    %1135 = vmatprep.subr.mxu0 %v1094
    %1136 = vmatpush1.msra.mxu0 %v1093
    %1137 = vmatprep.subr.mxu0 %v1097
    %1138 = vmatpush1.msra.mxu0 %v1096
    %1139 = vmatprep.subr.mxu0 %v1100
    %1140 = vmatpush1.msra.mxu0 %v1099
    %1141 = vmatprep.subr.mxu0 %v1103
    %1142 = vmatpush1.msra.mxu0 %v1102
    %1143 = vmatprep.subr.mxu0 %v1106
    %1144 = vmatpush1.msra.mxu0 %v1105
    %1145 = vmatprep.subr.mxu0 %v1109
    %1146 = vmatpush1.msra.mxu0 %v1108
    %1147 = vmatprep.subr.mxu0 %v1112
    %1148 = vmatpush1.msra.mxu0 %v1111
    %1149 = vmatprep.subr.mxu0 %v1115
    %1150 = vmatpush1.msra.mxu0 %v1114
    %1151 = vmatprep.subr.mxu0 %v1118
    %1152 = vmatpush1.msra.mxu0 %v1117
    %1153 = vmatprep.subr.mxu0 %v1121
    %1154 = vmatpush1.msra.mxu0 %v1120
    %1155 = vmatprep.subr.mxu0 0.0
    %1156 = vmatpush1.msra.mxu0 0.0
    %1157 = vmatprep.subr.mxu0 0.0
    %1158 = vmatpush1.msra.mxu0 0.0
    %1159 = vmatprep.subr.mxu0 0.0
    %1160 = vmatpush1.msra.mxu0 0.0
    %1161 = vmatprep.subr.mxu0 0.0
    %1162 = vmatpush1.msra.mxu0 0.0
    %1163 = vmatprep.subr.mxu0 0.0
    %1164 = vmatpush1.msra.mxu0 0.0
    %1165 = vmatprep.subr.mxu0 0.0
    %1166 = vmatpush1.msra.mxu0 0.0
    %1167 = vmatprep.subr.mxu0 0.0
    %1168 = vmatpush1.msra.mxu0 0.0
    %1169 = vmatprep.subr.mxu0 0.0
    %1170 = vmatpush1.msra.mxu0 0.0
    %1171 = vmatprep.subr.mxu0 0.0
    %1172 = vmatpush1.msra.mxu0 0.0
    %1173 = vmatprep.subr.mxu0 0.0
    %1174 = vmatpush1.msra.mxu0 0.0
    %1175 = vmatprep.subr.mxu0 0.0
    %1176 = vmatpush1.msra.mxu0 0.0
    %1177 = vmatprep.subr.mxu0 0.0
    %1178 = vmatpush1.msra.mxu0 0.0
    %1179 = vmatprep.subr.mxu0 0.0
    %1180 = vmatpush1.msra.mxu0 0.0
    %1181 = vmatprep.subr.mxu0 0.0
    %1182 = vmatpush1.msra.mxu0 0.0
    %1183 = vmatprep.subr.mxu0 0.0
    %1184 = vmatpush1.msra.mxu0 0.0
    %1185 = vmatprep.subr.mxu0 0.0
    %1186 = vmatpush1.msra.mxu0 0.0
    %1187 = vmatprep.mubr.f32.mxu0 0.0
    %1188 = vmatmul.mubr.f32.gmra.mrb[0].mxu0 %v1068
    %v1189 = vpop.f32.mrb[0].mxu0
    %v1190 = vadd.f32 0.0, %v1189
    %v1191 = vpop.f32.mrb[0].mxu0
    %v1192 = vadd.f32 0.0, %v1191
    %1193 = vdwg.mxu0
    %1194 = vmatprep.subr.mxu0 0.0
    %1195 = vmatpush1.msra.mxu0 %v1077
    %1196 = vmatprep.subr.mxu0 0.0
    %1197 = vmatpush1.msra.mxu0 %v1080
    %1198 = vmatprep.subr.mxu0 0.0
    %1199 = vmatpush1.msra.mxu0 %v1083
    %1200 = vmatprep.subr.mxu0 0.0
    %1201 = vmatpush1.msra.mxu0 %v1086
    %1202 = vmatprep.subr.mxu0 0.0
    %1203 = vmatpush1.msra.mxu0 %v1089
    %1204 = vmatprep.subr.mxu0 0.0
    %1205 = vmatpush1.msra.mxu0 %v1092
    %1206 = vmatprep.subr.mxu0 0.0
    %1207 = vmatpush1.msra.mxu0 %v1095
    %1208 = vmatprep.subr.mxu0 0.0
    %1209 = vmatpush1.msra.mxu0 %v1098
    %1210 = vmatprep.subr.mxu0 0.0
    %1211 = vmatpush1.msra.mxu0 %v1101
    %1212 = vmatprep.subr.mxu0 0.0
    %1213 = vmatpush1.msra.mxu0 %v1104
    %1214 = vmatprep.subr.mxu0 0.0
    %1215 = vmatpush1.msra.mxu0 %v1107
    %1216 = vmatprep.subr.mxu0 0.0
    %1217 = vmatpush1.msra.mxu0 %v1110
    %1218 = vmatprep.subr.mxu0 0.0
    %1219 = vmatpush1.msra.mxu0 %v1113
    %1220 = vmatprep.subr.mxu0 0.0
    %1221 = vmatpush1.msra.mxu0 %v1116
    %1222 = vmatprep.subr.mxu0 0.0
    %1223 = vmatpush1.msra.mxu0 %v1119
    %1224 = vmatprep.subr.mxu0 0.0
    %1225 = vmatpush1.msra.mxu0 %v1122
    %1226 = vmatprep.subr.mxu0 0.0
    %1227 = vmatpush1.msra.mxu0 0.0
    %1228 = vmatprep.subr.mxu0 0.0
    %1229 = vmatpush1.msra.mxu0 0.0
    %1230 = vmatprep.subr.mxu0 0.0
    %1231 = vmatpush1.msra.mxu0 0.0
    %1232 = vmatprep.subr.mxu0 0.0
    %1233 = vmatpush1.msra.mxu0 0.0
    %1234 = vmatprep.subr.mxu0 0.0
    %1235 = vmatpush1.msra.mxu0 0.0
    %1236 = vmatprep.subr.mxu0 0.0
    %1237 = vmatpush1.msra.mxu0 0.0
    %1238 = vmatprep.subr.mxu0 0.0
    %1239 = vmatpush1.msra.mxu0 0.0
    %1240 = vmatprep.subr.mxu0 0.0
    %1241 = vmatpush1.msra.mxu0 0.0
    %1242 = vmatprep.subr.mxu0 0.0
    %1243 = vmatpush1.msra.mxu0 0.0
    %1244 = vmatprep.subr.mxu0 0.0
    %1245 = vmatpush1.msra.mxu0 0.0
    %1246 = vmatprep.subr.mxu0 0.0
    %1247 = vmatpush1.msra.mxu0 0.0
    %1248 = vmatprep.subr.mxu0 0.0
    %1249 = vmatpush1.msra.mxu0 0.0
    %1250 = vmatprep.subr.mxu0 0.0
    %1251 = vmatpush1.msra.mxu0 0.0
    %1252 = vmatprep.subr.mxu0 0.0
    %1253 = vmatpush1.msra.mxu0 0.0
    %1254 = vmatprep.subr.mxu0 0.0
    %1255 = vmatpush1.msra.mxu0 0.0
    %1256 = vmatprep.subr.mxu0 0.0
    %1257 = vmatpush1.msra.mxu0 0.0
    %1258 = vmatprep.mubr.f32.mxu0 0.0
    %1259 = vmatmul.mubr.f32.gmra.mrb[0].mxu0 %v1068
    %v1260 = vpop.f32.mrb[0].mxu0
    %v1261 = vadd.f32 0.0, %v1260
    %v1262 = vpop.f32.mrb[0].mxu0
    %1263 = vdwg.mxu0
    %v1264 = vadd.f32 %v1072, %v1190
    %v1265 = vxor.u32 %v1264, 2147483648
    %v1266 = vmul.f32 %v1265, 1.442695
    %v1267 = vpow.pop %v1266
    %v1268 = vadd.f32 %v1267, 1.0
    %v1269 = vrcp.pop %v1268
    %v1270 = vmul.f32 1.0, %v1269
    %v1271 = vadd.f32 %v1073, %v1192
    %v1272 = vxor.u32 %v1271, 2147483648
    %v1273 = vmul.f32 %v1272, 1.442695
    %v1274 = vpow.pop %v1273
    %v1275 = vadd.f32 %v1274, 1.0
    %v1276 = vrcp.pop %v1275
    %v1277 = vmul.f32 1.0, %v1276
    %v1278 = vadd.f32 %v1261, %v417
    %v1279 = vmul.f32 %v1270, %v1278
    %v1280 = vadd.f32 %v1074, %v1279
    %v1281 = vtanh.pop %v1280
    %v1282 = vsub.f32 1.0, %v1277
    %v1283 = vmul.f32 %v1282, %v1281
    %v1284 = vmul.f32 %v1277, %v1068
    %v1285 = vadd.f32 %v1283, %v1284
    %s1286 = scalar_lea.vmem [#allocation15], 32
    %1287 = vst [vmem:[%s1286] sm:$0xff] %v1285
    %s1288 = scalar_lea.vmem [#allocation3], 72
    %v1289 = vld [vmem:[%s1288] sm:$0xff]
    %v1290 = vld [vmem:[%s1288 + $0x8] sm:$0xff]
    %v1291 = vld [vmem:[%s1288 + $0x10] sm:$0xff]
    %v1292 = vld [vmem:[#allocation12] sm:$0xff]
    %v1293 = vld [vmem:[#allocation12 + $0x8] sm:$0xff]
    %v1294 = vld [vmem:[#allocation12 + $0x10] sm:$0xff]
    %v1295 = vld [vmem:[#allocation12 + $0x18] sm:$0xff]
    %v1296 = vld [vmem:[#allocation12 + $0x20] sm:$0xff]
    %v1297 = vld [vmem:[#allocation12 + $0x28] sm:$0xff]
    %v1298 = vld [vmem:[#allocation12 + $0x30] sm:$0xff]
    %v1299 = vld [vmem:[#allocation12 + $0x38] sm:$0xff]
    %v1300 = vld [vmem:[#allocation12 + $0x40] sm:$0xff]
    %v1301 = vld [vmem:[#allocation12 + $0x48] sm:$0xff]
    %v1302 = vld [vmem:[#allocation12 + $0x50] sm:$0xff]
    %v1303 = vld [vmem:[#allocation12 + $0x58] sm:$0xff]
    %v1304 = vld [vmem:[#allocation12 + $0x60] sm:$0xff]
    %v1305 = vld [vmem:[#allocation12 + $0x68] sm:$0xff]
    %v1306 = vld [vmem:[#allocation12 + $0x70] sm:$0xff]
    %v1307 = vld [vmem:[#allocation12 + $0x78] sm:$0xff]
    %v1308 = vld [vmem:[#allocation12 + $0x80] sm:$0xff]
    %v1309 = vld [vmem:[#allocation12 + $0x88] sm:$0xff]
    %v1310 = vld [vmem:[#allocation12 + $0x90] sm:$0xff]
    %v1311 = vld [vmem:[#allocation12 + $0x98] sm:$0xff]
    %v1312 = vld [vmem:[#allocation12 + $0xa0] sm:$0xff]
    %v1313 = vld [vmem:[#allocation12 + $0xa8] sm:$0xff]
    %v1314 = vld [vmem:[#allocation12 + $0xb0] sm:$0xff]
    %v1315 = vld [vmem:[#allocation12 + $0xb8] sm:$0xff]
    %v1316 = vld [vmem:[#allocation12 + $0xc0] sm:$0xff]
    %v1317 = vld [vmem:[#allocation12 + $0xc8] sm:$0xff]
    %v1318 = vld [vmem:[#allocation12 + $0xd0] sm:$0xff]
    %v1319 = vld [vmem:[#allocation12 + $0xd8] sm:$0xff]
    %v1320 = vld [vmem:[#allocation12 + $0xe0] sm:$0xff]
    %v1321 = vld [vmem:[#allocation12 + $0xe8] sm:$0xff]
    %v1322 = vld [vmem:[#allocation12 + $0xf0] sm:$0xff]
    %v1323 = vld [vmem:[#allocation12 + $0xf8] sm:$0xff]
    %v1324 = vld [vmem:[#allocation12 + $0x100] sm:$0xff]
    %v1325 = vld [vmem:[#allocation12 + $0x108] sm:$0xff]
    %v1326 = vld [vmem:[#allocation12 + $0x110] sm:$0xff]
    %v1327 = vld [vmem:[#allocation12 + $0x118] sm:$0xff]
    %v1328 = vld [vmem:[#allocation12 + $0x120] sm:$0xff]
    %v1329 = vld [vmem:[#allocation12 + $0x128] sm:$0xff]
    %v1330 = vld [vmem:[#allocation12 + $0x130] sm:$0xff]
    %v1331 = vld [vmem:[#allocation12 + $0x138] sm:$0xff]
    %v1332 = vld [vmem:[#allocation12 + $0x140] sm:$0xff]
    %v1333 = vld [vmem:[#allocation12 + $0x148] sm:$0xff]
    %v1334 = vld [vmem:[#allocation12 + $0x150] sm:$0xff]
    %v1335 = vld [vmem:[#allocation12 + $0x158] sm:$0xff]
    %v1336 = vld [vmem:[#allocation12 + $0x160] sm:$0xff]
    %v1337 = vld [vmem:[#allocation12 + $0x168] sm:$0xff]
    %v1338 = vld [vmem:[#allocation12 + $0x170] sm:$0xff]
    %v1339 = vld [vmem:[#allocation12 + $0x178] sm:$0xff]
    %1340 = vmatprep.subr.mxu0 %v1293
    %1341 = vmatpush1.msra.mxu0 %v1292
    %1342 = vmatprep.subr.mxu0 %v1296
    %1343 = vmatpush1.msra.mxu0 %v1295
    %1344 = vmatprep.subr.mxu0 %v1299
    %1345 = vmatpush1.msra.mxu0 %v1298
    %1346 = vmatprep.subr.mxu0 %v1302
    %1347 = vmatpush1.msra.mxu0 %v1301
    %1348 = vmatprep.subr.mxu0 %v1305
    %1349 = vmatpush1.msra.mxu0 %v1304
    %1350 = vmatprep.subr.mxu0 %v1308
    %1351 = vmatpush1.msra.mxu0 %v1307
    %1352 = vmatprep.subr.mxu0 %v1311
    %1353 = vmatpush1.msra.mxu0 %v1310
    %1354 = vmatprep.subr.mxu0 %v1314
    %1355 = vmatpush1.msra.mxu0 %v1313
    %1356 = vmatprep.subr.mxu0 %v1317
    %1357 = vmatpush1.msra.mxu0 %v1316
    %1358 = vmatprep.subr.mxu0 %v1320
    %1359 = vmatpush1.msra.mxu0 %v1319
    %1360 = vmatprep.subr.mxu0 %v1323
    %1361 = vmatpush1.msra.mxu0 %v1322
    %1362 = vmatprep.subr.mxu0 %v1326
    %1363 = vmatpush1.msra.mxu0 %v1325
    %1364 = vmatprep.subr.mxu0 %v1329
    %1365 = vmatpush1.msra.mxu0 %v1328
    %1366 = vmatprep.subr.mxu0 %v1332
    %1367 = vmatpush1.msra.mxu0 %v1331
    %1368 = vmatprep.subr.mxu0 %v1335
    %1369 = vmatpush1.msra.mxu0 %v1334
    %1370 = vmatprep.subr.mxu0 %v1338
    %1371 = vmatpush1.msra.mxu0 %v1337
    %1372 = vmatprep.subr.mxu0 0.0
    %1373 = vmatpush1.msra.mxu0 0.0
    %1374 = vmatprep.subr.mxu0 0.0
    %1375 = vmatpush1.msra.mxu0 0.0
    %1376 = vmatprep.subr.mxu0 0.0
    %1377 = vmatpush1.msra.mxu0 0.0
    %1378 = vmatprep.subr.mxu0 0.0
    %1379 = vmatpush1.msra.mxu0 0.0
    %1380 = vmatprep.subr.mxu0 0.0
    %1381 = vmatpush1.msra.mxu0 0.0
    %1382 = vmatprep.subr.mxu0 0.0
    %1383 = vmatpush1.msra.mxu0 0.0
    %1384 = vmatprep.subr.mxu0 0.0
    %1385 = vmatpush1.msra.mxu0 0.0
    %1386 = vmatprep.subr.mxu0 0.0
    %1387 = vmatpush1.msra.mxu0 0.0
    %1388 = vmatprep.subr.mxu0 0.0
    %1389 = vmatpush1.msra.mxu0 0.0
    %1390 = vmatprep.subr.mxu0 0.0
    %1391 = vmatpush1.msra.mxu0 0.0
    %1392 = vmatprep.subr.mxu0 0.0
    %1393 = vmatpush1.msra.mxu0 0.0
    %1394 = vmatprep.subr.mxu0 0.0
    %1395 = vmatpush1.msra.mxu0 0.0
    %1396 = vmatprep.subr.mxu0 0.0
    %1397 = vmatpush1.msra.mxu0 0.0
    %1398 = vmatprep.subr.mxu0 0.0
    %1399 = vmatpush1.msra.mxu0 0.0
    %1400 = vmatprep.subr.mxu0 0.0
    %1401 = vmatpush1.msra.mxu0 0.0
    %1402 = vmatprep.subr.mxu0 0.0
    %1403 = vmatpush1.msra.mxu0 0.0
    %1404 = vmatprep.mubr.f32.mxu0 0.0
    %1405 = vmatmul.mubr.f32.gmra.mrb[0].mxu0 %v1285
    %v1406 = vpop.f32.mrb[0].mxu0
    %v1407 = vadd.f32 0.0, %v1406
    %v1408 = vpop.f32.mrb[0].mxu0
    %v1409 = vadd.f32 0.0, %v1408
    %1410 = vdwg.mxu0
    %1411 = vmatprep.subr.mxu0 0.0
    %1412 = vmatpush1.msra.mxu0 %v1294
    %1413 = vmatprep.subr.mxu0 0.0
    %1414 = vmatpush1.msra.mxu0 %v1297
    %1415 = vmatprep.subr.mxu0 0.0
    %1416 = vmatpush1.msra.mxu0 %v1300
    %1417 = vmatprep.subr.mxu0 0.0
    %1418 = vmatpush1.msra.mxu0 %v1303
    %1419 = vmatprep.subr.mxu0 0.0
    %1420 = vmatpush1.msra.mxu0 %v1306
    %1421 = vmatprep.subr.mxu0 0.0
    %1422 = vmatpush1.msra.mxu0 %v1309
    %1423 = vmatprep.subr.mxu0 0.0
    %1424 = vmatpush1.msra.mxu0 %v1312
    %1425 = vmatprep.subr.mxu0 0.0
    %1426 = vmatpush1.msra.mxu0 %v1315
    %1427 = vmatprep.subr.mxu0 0.0
    %1428 = vmatpush1.msra.mxu0 %v1318
    %1429 = vmatprep.subr.mxu0 0.0
    %1430 = vmatpush1.msra.mxu0 %v1321
    %1431 = vmatprep.subr.mxu0 0.0
    %1432 = vmatpush1.msra.mxu0 %v1324
    %1433 = vmatprep.subr.mxu0 0.0
    %1434 = vmatpush1.msra.mxu0 %v1327
    %1435 = vmatprep.subr.mxu0 0.0
    %1436 = vmatpush1.msra.mxu0 %v1330
    %1437 = vmatprep.subr.mxu0 0.0
    %1438 = vmatpush1.msra.mxu0 %v1333
    %1439 = vmatprep.subr.mxu0 0.0
    %1440 = vmatpush1.msra.mxu0 %v1336
    %1441 = vmatprep.subr.mxu0 0.0
    %1442 = vmatpush1.msra.mxu0 %v1339
    %1443 = vmatprep.subr.mxu0 0.0
    %1444 = vmatpush1.msra.mxu0 0.0
    %1445 = vmatprep.subr.mxu0 0.0
    %1446 = vmatpush1.msra.mxu0 0.0
    %1447 = vmatprep.subr.mxu0 0.0
    %1448 = vmatpush1.msra.mxu0 0.0
    %1449 = vmatprep.subr.mxu0 0.0
    %1450 = vmatpush1.msra.mxu0 0.0
    %1451 = vmatprep.subr.mxu0 0.0
    %1452 = vmatpush1.msra.mxu0 0.0
    %1453 = vmatprep.subr.mxu0 0.0
    %1454 = vmatpush1.msra.mxu0 0.0
    %1455 = vmatprep.subr.mxu0 0.0
    %1456 = vmatpush1.msra.mxu0 0.0
    %1457 = vmatprep.subr.mxu0 0.0
    %1458 = vmatpush1.msra.mxu0 0.0
    %1459 = vmatprep.subr.mxu0 0.0
    %1460 = vmatpush1.msra.mxu0 0.0
    %1461 = vmatprep.subr.mxu0 0.0
    %1462 = vmatpush1.msra.mxu0 0.0
    %1463 = vmatprep.subr.mxu0 0.0
    %1464 = vmatpush1.msra.mxu0 0.0
    %1465 = vmatprep.subr.mxu0 0.0
    %1466 = vmatpush1.msra.mxu0 0.0
    %1467 = vmatprep.subr.mxu0 0.0
    %1468 = vmatpush1.msra.mxu0 0.0
    %1469 = vmatprep.subr.mxu0 0.0
    %1470 = vmatpush1.msra.mxu0 0.0
    %1471 = vmatprep.subr.mxu0 0.0
    %1472 = vmatpush1.msra.mxu0 0.0
    %1473 = vmatprep.subr.mxu0 0.0
    %1474 = vmatpush1.msra.mxu0 0.0
    %1475 = vmatprep.mubr.f32.mxu0 0.0
    %1476 = vmatmul.mubr.f32.gmra.mrb[0].mxu0 %v1285
    %v1477 = vpop.f32.mrb[0].mxu0
    %v1478 = vadd.f32 0.0, %v1477
    %v1479 = vpop.f32.mrb[0].mxu0
    %1480 = vdwg.mxu0
    %v1481 = vadd.f32 %v1289, %v1407
    %v1482 = vxor.u32 %v1481, 2147483648
    %v1483 = vmul.f32 %v1482, 1.442695
    %v1484 = vpow.pop %v1483
    %v1485 = vadd.f32 %v1484, 1.0
    %v1486 = vrcp.pop %v1485
    %v1487 = vmul.f32 1.0, %v1486
    %v1488 = vadd.f32 %v1290, %v1409
    %v1489 = vxor.u32 %v1488, 2147483648
    %v1490 = vmul.f32 %v1489, 1.442695
    %v1491 = vpow.pop %v1490
    %v1492 = vadd.f32 %v1491, 1.0
    %v1493 = vrcp.pop %v1492
    %v1494 = vmul.f32 1.0, %v1493
    %v1495 = vadd.f32 %v1478, %v417
    %v1496 = vmul.f32 %v1487, %v1495
    %v1497 = vadd.f32 %v1291, %v1496
    %v1498 = vtanh.pop %v1497
    %v1499 = vsub.f32 1.0, %v1494
    %v1500 = vmul.f32 %v1499, %v1498
    %v1501 = vmul.f32 %v1494, %v1285
    %v1502 = vadd.f32 %v1500, %v1501
    %s1503 = scalar_lea.vmem [#allocation15], 24
    %1504 = vst [vmem:[%s1503] sm:$0xff] %v1502
    %s1505 = scalar_lea.vmem [#allocation3], 48
    %v1506 = vld [vmem:[%s1505] sm:$0xff]
    %v1507 = vld [vmem:[%s1505 + $0x8] sm:$0xff]
    %v1508 = vld [vmem:[%s1505 + $0x10] sm:$0xff]
    %v1509 = vld [vmem:[#allocation12] sm:$0xff]
    %v1510 = vld [vmem:[#allocation12 + $0x8] sm:$0xff]
    %v1511 = vld [vmem:[#allocation12 + $0x10] sm:$0xff]
    %v1512 = vld [vmem:[#allocation12 + $0x18] sm:$0xff]
    %v1513 = vld [vmem:[#allocation12 + $0x20] sm:$0xff]
    %v1514 = vld [vmem:[#allocation12 + $0x28] sm:$0xff]
    %v1515 = vld [vmem:[#allocation12 + $0x30] sm:$0xff]
    %v1516 = vld [vmem:[#allocation12 + $0x38] sm:$0xff]
    %v1517 = vld [vmem:[#allocation12 + $0x40] sm:$0xff]
    %v1518 = vld [vmem:[#allocation12 + $0x48] sm:$0xff]
    %v1519 = vld [vmem:[#allocation12 + $0x50] sm:$0xff]
    %v1520 = vld [vmem:[#allocation12 + $0x58] sm:$0xff]
    %v1521 = vld [vmem:[#allocation12 + $0x60] sm:$0xff]
    %v1522 = vld [vmem:[#allocation12 + $0x68] sm:$0xff]
    %v1523 = vld [vmem:[#allocation12 + $0x70] sm:$0xff]
    %v1524 = vld [vmem:[#allocation12 + $0x78] sm:$0xff]
    %v1525 = vld [vmem:[#allocation12 + $0x80] sm:$0xff]
    %v1526 = vld [vmem:[#allocation12 + $0x88] sm:$0xff]
    %v1527 = vld [vmem:[#allocation12 + $0x90] sm:$0xff]
    %v1528 = vld [vmem:[#allocation12 + $0x98] sm:$0xff]
    %v1529 = vld [vmem:[#allocation12 + $0xa0] sm:$0xff]
    %v1530 = vld [vmem:[#allocation12 + $0xa8] sm:$0xff]
    %v1531 = vld [vmem:[#allocation12 + $0xb0] sm:$0xff]
    %v1532 = vld [vmem:[#allocation12 + $0xb8] sm:$0xff]
    %v1533 = vld [vmem:[#allocation12 + $0xc0] sm:$0xff]
    %v1534 = vld [vmem:[#allocation12 + $0xc8] sm:$0xff]
    %v1535 = vld [vmem:[#allocation12 + $0xd0] sm:$0xff]
    %v1536 = vld [vmem:[#allocation12 + $0xd8] sm:$0xff]
    %v1537 = vld [vmem:[#allocation12 + $0xe0] sm:$0xff]
    %v1538 = vld [vmem:[#allocation12 + $0xe8] sm:$0xff]
    %v1539 = vld [vmem:[#allocation12 + $0xf0] sm:$0xff]
    %v1540 = vld [vmem:[#allocation12 + $0xf8] sm:$0xff]
    %v1541 = vld [vmem:[#allocation12 + $0x100] sm:$0xff]
    %v1542 = vld [vmem:[#allocation12 + $0x108] sm:$0xff]
    %v1543 = vld [vmem:[#allocation12 + $0x110] sm:$0xff]
    %v1544 = vld [vmem:[#allocation12 + $0x118] sm:$0xff]
    %v1545 = vld [vmem:[#allocation12 + $0x120] sm:$0xff]
    %v1546 = vld [vmem:[#allocation12 + $0x128] sm:$0xff]
    %v1547 = vld [vmem:[#allocation12 + $0x130] sm:$0xff]
    %v1548 = vld [vmem:[#allocation12 + $0x138] sm:$0xff]
    %v1549 = vld [vmem:[#allocation12 + $0x140] sm:$0xff]
    %v1550 = vld [vmem:[#allocation12 + $0x148] sm:$0xff]
    %v1551 = vld [vmem:[#allocation12 + $0x150] sm:$0xff]
    %v1552 = vld [vmem:[#allocation12 + $0x158] sm:$0xff]
    %v1553 = vld [vmem:[#allocation12 + $0x160] sm:$0xff]
    %v1554 = vld [vmem:[#allocation12 + $0x168] sm:$0xff]
    %v1555 = vld [vmem:[#allocation12 + $0x170] sm:$0xff]
    %v1556 = vld [vmem:[#allocation12 + $0x178] sm:$0xff]
    %1557 = vmatprep.subr.mxu0 %v1510
    %1558 = vmatpush1.msra.mxu0 %v1509
    %1559 = vmatprep.subr.mxu0 %v1513
    %1560 = vmatpush1.msra.mxu0 %v1512
    %1561 = vmatprep.subr.mxu0 %v1516
    %1562 = vmatpush1.msra.mxu0 %v1515
    %1563 = vmatprep.subr.mxu0 %v1519
    %1564 = vmatpush1.msra.mxu0 %v1518
    %1565 = vmatprep.subr.mxu0 %v1522
    %1566 = vmatpush1.msra.mxu0 %v1521
    %1567 = vmatprep.subr.mxu0 %v1525
    %1568 = vmatpush1.msra.mxu0 %v1524
    %1569 = vmatprep.subr.mxu0 %v1528
    %1570 = vmatpush1.msra.mxu0 %v1527
    %1571 = vmatprep.subr.mxu0 %v1531
    %1572 = vmatpush1.msra.mxu0 %v1530
    %1573 = vmatprep.subr.mxu0 %v1534
    %1574 = vmatpush1.msra.mxu0 %v1533
    %1575 = vmatprep.subr.mxu0 %v1537
    %1576 = vmatpush1.msra.mxu0 %v1536
    %1577 = vmatprep.subr.mxu0 %v1540
    %1578 = vmatpush1.msra.mxu0 %v1539
    %1579 = vmatprep.subr.mxu0 %v1543
    %1580 = vmatpush1.msra.mxu0 %v1542
    %1581 = vmatprep.subr.mxu0 %v1546
    %1582 = vmatpush1.msra.mxu0 %v1545
    %1583 = vmatprep.subr.mxu0 %v1549
    %1584 = vmatpush1.msra.mxu0 %v1548
    %1585 = vmatprep.subr.mxu0 %v1552
    %1586 = vmatpush1.msra.mxu0 %v1551
    %1587 = vmatprep.subr.mxu0 %v1555
    %1588 = vmatpush1.msra.mxu0 %v1554
    %1589 = vmatprep.subr.mxu0 0.0
    %1590 = vmatpush1.msra.mxu0 0.0
    %1591 = vmatprep.subr.mxu0 0.0
    %1592 = vmatpush1.msra.mxu0 0.0
    %1593 = vmatprep.subr.mxu0 0.0
    %1594 = vmatpush1.msra.mxu0 0.0
    %1595 = vmatprep.subr.mxu0 0.0
    %1596 = vmatpush1.msra.mxu0 0.0
    %1597 = vmatprep.subr.mxu0 0.0
    %1598 = vmatpush1.msra.mxu0 0.0
    %1599 = vmatprep.subr.mxu0 0.0
    %1600 = vmatpush1.msra.mxu0 0.0
    %1601 = vmatprep.subr.mxu0 0.0
    %1602 = vmatpush1.msra.mxu0 0.0
    %1603 = vmatprep.subr.mxu0 0.0
    %1604 = vmatpush1.msra.mxu0 0.0
    %1605 = vmatprep.subr.mxu0 0.0
    %1606 = vmatpush1.msra.mxu0 0.0
    %1607 = vmatprep.subr.mxu0 0.0
    %1608 = vmatpush1.msra.mxu0 0.0
    %1609 = vmatprep.subr.mxu0 0.0
    %1610 = vmatpush1.msra.mxu0 0.0
    %1611 = vmatprep.subr.mxu0 0.0
    %1612 = vmatpush1.msra.mxu0 0.0
    %1613 = vmatprep.subr.mxu0 0.0
    %1614 = vmatpush1.msra.mxu0 0.0
    %1615 = vmatprep.subr.mxu0 0.0
    %1616 = vmatpush1.msra.mxu0 0.0
    %1617 = vmatprep.subr.mxu0 0.0
    %1618 = vmatpush1.msra.mxu0 0.0
    %1619 = vmatprep.subr.mxu0 0.0
    %1620 = vmatpush1.msra.mxu0 0.0
    %1621 = vmatprep.mubr.f32.mxu0 0.0
    %1622 = vmatmul.mubr.f32.gmra.mrb[0].mxu0 %v1502
    %v1623 = vpop.f32.mrb[0].mxu0
    %v1624 = vadd.f32 0.0, %v1623
    %v1625 = vpop.f32.mrb[0].mxu0
    %v1626 = vadd.f32 0.0, %v1625
    %1627 = vdwg.mxu0
    %1628 = vmatprep.subr.mxu0 0.0
    %1629 = vmatpush1.msra.mxu0 %v1511
    %1630 = vmatprep.subr.mxu0 0.0
    %1631 = vmatpush1.msra.mxu0 %v1514
    %1632 = vmatprep.subr.mxu0 0.0
    %1633 = vmatpush1.msra.mxu0 %v1517
    %1634 = vmatprep.subr.mxu0 0.0
    %1635 = vmatpush1.msra.mxu0 %v1520
    %1636 = vmatprep.subr.mxu0 0.0
    %1637 = vmatpush1.msra.mxu0 %v1523
    %1638 = vmatprep.subr.mxu0 0.0
    %1639 = vmatpush1.msra.mxu0 %v1526
    %1640 = vmatprep.subr.mxu0 0.0
    %1641 = vmatpush1.msra.mxu0 %v1529
    %1642 = vmatprep.subr.mxu0 0.0
    %1643 = vmatpush1.msra.mxu0 %v1532
    %1644 = vmatprep.subr.mxu0 0.0
    %1645 = vmatpush1.msra.mxu0 %v1535
    %1646 = vmatprep.subr.mxu0 0.0
    %1647 = vmatpush1.msra.mxu0 %v1538
    %1648 = vmatprep.subr.mxu0 0.0
    %1649 = vmatpush1.msra.mxu0 %v1541
    %1650 = vmatprep.subr.mxu0 0.0
    %1651 = vmatpush1.msra.mxu0 %v1544
    %1652 = vmatprep.subr.mxu0 0.0
    %1653 = vmatpush1.msra.mxu0 %v1547
    %1654 = vmatprep.subr.mxu0 0.0
    %1655 = vmatpush1.msra.mxu0 %v1550
    %1656 = vmatprep.subr.mxu0 0.0
    %1657 = vmatpush1.msra.mxu0 %v1553
    %1658 = vmatprep.subr.mxu0 0.0
    %1659 = vmatpush1.msra.mxu0 %v1556
    %1660 = vmatprep.subr.mxu0 0.0
    %1661 = vmatpush1.msra.mxu0 0.0
    %1662 = vmatprep.subr.mxu0 0.0
    %1663 = vmatpush1.msra.mxu0 0.0
    %1664 = vmatprep.subr.mxu0 0.0
    %1665 = vmatpush1.msra.mxu0 0.0
    %1666 = vmatprep.subr.mxu0 0.0
    %1667 = vmatpush1.msra.mxu0 0.0
    %1668 = vmatprep.subr.mxu0 0.0
    %1669 = vmatpush1.msra.mxu0 0.0
    %1670 = vmatprep.subr.mxu0 0.0
    %1671 = vmatpush1.msra.mxu0 0.0
    %1672 = vmatprep.subr.mxu0 0.0
    %1673 = vmatpush1.msra.mxu0 0.0
    %1674 = vmatprep.subr.mxu0 0.0
    %1675 = vmatpush1.msra.mxu0 0.0
    %1676 = vmatprep.subr.mxu0 0.0
    %1677 = vmatpush1.msra.mxu0 0.0
    %1678 = vmatprep.subr.mxu0 0.0
    %1679 = vmatpush1.msra.mxu0 0.0
    %1680 = vmatprep.subr.mxu0 0.0
    %1681 = vmatpush1.msra.mxu0 0.0
    %1682 = vmatprep.subr.mxu0 0.0
    %1683 = vmatpush1.msra.mxu0 0.0
    %1684 = vmatprep.subr.mxu0 0.0
    %1685 = vmatpush1.msra.mxu0 0.0
    %1686 = vmatprep.subr.mxu0 0.0
    %1687 = vmatpush1.msra.mxu0 0.0
    %1688 = vmatprep.subr.mxu0 0.0
    %1689 = vmatpush1.msra.mxu0 0.0
    %1690 = vmatprep.subr.mxu0 0.0
    %1691 = vmatpush1.msra.mxu0 0.0
    %1692 = vmatprep.mubr.f32.mxu0 0.0
    %1693 = vmatmul.mubr.f32.gmra.mrb[0].mxu0 %v1502
    %v1694 = vpop.f32.mrb[0].mxu0
    %v1695 = vadd.f32 0.0, %v1694
    %v1696 = vpop.f32.mrb[0].mxu0
    %1697 = vdwg.mxu0
    %v1698 = vadd.f32 %v1506, %v1624
    %v1699 = vxor.u32 %v1698, 2147483648
    %v1700 = vmul.f32 %v1699, 1.442695
    %v1701 = vpow.pop %v1700
    %v1702 = vadd.f32 %v1701, 1.0
    %v1703 = vrcp.pop %v1702
    %v1704 = vmul.f32 1.0, %v1703
    %v1705 = vadd.f32 %v1507, %v1626
    %v1706 = vxor.u32 %v1705, 2147483648
    %v1707 = vmul.f32 %v1706, 1.442695
    %v1708 = vpow.pop %v1707
    %v1709 = vadd.f32 %v1708, 1.0
    %v1710 = vrcp.pop %v1709
    %v1711 = vmul.f32 1.0, %v1710
    %v1712 = vadd.f32 %v1695, %v417
    %v1713 = vmul.f32 %v1704, %v1712
    %v1714 = vadd.f32 %v1508, %v1713
    %v1715 = vtanh.pop %v1714
    %v1716 = vsub.f32 1.0, %v1711
    %v1717 = vmul.f32 %v1716, %v1715
    %v1718 = vmul.f32 %v1711, %v1502
    %v1719 = vadd.f32 %v1717, %v1718
    %s1720 = scalar_lea.vmem [#allocation15], 16
    %1721 = vst [vmem:[%s1720] sm:$0xff] %v1719
    %s1722 = scalar_lea.vmem [#allocation3], 24
    %v1723 = vld [vmem:[%s1722] sm:$0xff]
    %v1724 = vld [vmem:[%s1722 + $0x8] sm:$0xff]
    %v1725 = vld [vmem:[%s1722 + $0x10] sm:$0xff]
    %v1726 = vld [vmem:[#allocation12] sm:$0xff]
    %v1727 = vld [vmem:[#allocation12 + $0x8] sm:$0xff]
    %v1728 = vld [vmem:[#allocation12 + $0x10] sm:$0xff]
    %v1729 = vld [vmem:[#allocation12 + $0x18] sm:$0xff]
    %v1730 = vld [vmem:[#allocation12 + $0x20] sm:$0xff]
    %v1731 = vld [vmem:[#allocation12 + $0x28] sm:$0xff]
    %v1732 = vld [vmem:[#allocation12 + $0x30] sm:$0xff]
    %v1733 = vld [vmem:[#allocation12 + $0x38] sm:$0xff]
    %v1734 = vld [vmem:[#allocation12 + $0x40] sm:$0xff]
    %v1735 = vld [vmem:[#allocation12 + $0x48] sm:$0xff]
    %v1736 = vld [vmem:[#allocation12 + $0x50] sm:$0xff]
    %v1737 = vld [vmem:[#allocation12 + $0x58] sm:$0xff]
    %v1738 = vld [vmem:[#allocation12 + $0x60] sm:$0xff]
    %v1739 = vld [vmem:[#allocation12 + $0x68] sm:$0xff]
    %v1740 = vld [vmem:[#allocation12 + $0x70] sm:$0xff]
    %v1741 = vld [vmem:[#allocation12 + $0x78] sm:$0xff]
    %v1742 = vld [vmem:[#allocation12 + $0x80] sm:$0xff]
    %v1743 = vld [vmem:[#allocation12 + $0x88] sm:$0xff]
    %v1744 = vld [vmem:[#allocation12 + $0x90] sm:$0xff]
    %v1745 = vld [vmem:[#allocation12 + $0x98] sm:$0xff]
    %v1746 = vld [vmem:[#allocation12 + $0xa0] sm:$0xff]
    %v1747 = vld [vmem:[#allocation12 + $0xa8] sm:$0xff]
    %v1748 = vld [vmem:[#allocation12 + $0xb0] sm:$0xff]
    %v1749 = vld [vmem:[#allocation12 + $0xb8] sm:$0xff]
    %v1750 = vld [vmem:[#allocation12 + $0xc0] sm:$0xff]
    %v1751 = vld [vmem:[#allocation12 + $0xc8] sm:$0xff]
    %v1752 = vld [vmem:[#allocation12 + $0xd0] sm:$0xff]
    %v1753 = vld [vmem:[#allocation12 + $0xd8] sm:$0xff]
    %v1754 = vld [vmem:[#allocation12 + $0xe0] sm:$0xff]
    %v1755 = vld [vmem:[#allocation12 + $0xe8] sm:$0xff]
    %v1756 = vld [vmem:[#allocation12 + $0xf0] sm:$0xff]
    %v1757 = vld [vmem:[#allocation12 + $0xf8] sm:$0xff]
    %v1758 = vld [vmem:[#allocation12 + $0x100] sm:$0xff]
    %v1759 = vld [vmem:[#allocation12 + $0x108] sm:$0xff]
    %v1760 = vld [vmem:[#allocation12 + $0x110] sm:$0xff]
    %v1761 = vld [vmem:[#allocation12 + $0x118] sm:$0xff]
    %v1762 = vld [vmem:[#allocation12 + $0x120] sm:$0xff]
    %v1763 = vld [vmem:[#allocation12 + $0x128] sm:$0xff]
    %v1764 = vld [vmem:[#allocation12 + $0x130] sm:$0xff]
    %v1765 = vld [vmem:[#allocation12 + $0x138] sm:$0xff]
    %v1766 = vld [vmem:[#allocation12 + $0x140] sm:$0xff]
    %v1767 = vld [vmem:[#allocation12 + $0x148] sm:$0xff]
    %v1768 = vld [vmem:[#allocation12 + $0x150] sm:$0xff]
    %v1769 = vld [vmem:[#allocation12 + $0x158] sm:$0xff]
    %v1770 = vld [vmem:[#allocation12 + $0x160] sm:$0xff]
    %v1771 = vld [vmem:[#allocation12 + $0x168] sm:$0xff]
    %v1772 = vld [vmem:[#allocation12 + $0x170] sm:$0xff]
    %v1773 = vld [vmem:[#allocation12 + $0x178] sm:$0xff]
    %1774 = vmatprep.subr.mxu0 %v1727
    %1775 = vmatpush1.msra.mxu0 %v1726
    %1776 = vmatprep.subr.mxu0 %v1730
    %1777 = vmatpush1.msra.mxu0 %v1729
    %1778 = vmatprep.subr.mxu0 %v1733
    %1779 = vmatpush1.msra.mxu0 %v1732
    %1780 = vmatprep.subr.mxu0 %v1736
    %1781 = vmatpush1.msra.mxu0 %v1735
    %1782 = vmatprep.subr.mxu0 %v1739
    %1783 = vmatpush1.msra.mxu0 %v1738
    %1784 = vmatprep.subr.mxu0 %v1742
    %1785 = vmatpush1.msra.mxu0 %v1741
    %1786 = vmatprep.subr.mxu0 %v1745
    %1787 = vmatpush1.msra.mxu0 %v1744
    %1788 = vmatprep.subr.mxu0 %v1748
    %1789 = vmatpush1.msra.mxu0 %v1747
    %1790 = vmatprep.subr.mxu0 %v1751
    %1791 = vmatpush1.msra.mxu0 %v1750
    %1792 = vmatprep.subr.mxu0 %v1754
    %1793 = vmatpush1.msra.mxu0 %v1753
    %1794 = vmatprep.subr.mxu0 %v1757
    %1795 = vmatpush1.msra.mxu0 %v1756
    %1796 = vmatprep.subr.mxu0 %v1760
    %1797 = vmatpush1.msra.mxu0 %v1759
    %1798 = vmatprep.subr.mxu0 %v1763
    %1799 = vmatpush1.msra.mxu0 %v1762
    %1800 = vmatprep.subr.mxu0 %v1766
    %1801 = vmatpush1.msra.mxu0 %v1765
    %1802 = vmatprep.subr.mxu0 %v1769
    %1803 = vmatpush1.msra.mxu0 %v1768
    %1804 = vmatprep.subr.mxu0 %v1772
    %1805 = vmatpush1.msra.mxu0 %v1771
    %1806 = vmatprep.subr.mxu0 0.0
    %1807 = vmatpush1.msra.mxu0 0.0
    %1808 = vmatprep.subr.mxu0 0.0
    %1809 = vmatpush1.msra.mxu0 0.0
    %1810 = vmatprep.subr.mxu0 0.0
    %1811 = vmatpush1.msra.mxu0 0.0
    %1812 = vmatprep.subr.mxu0 0.0
    %1813 = vmatpush1.msra.mxu0 0.0
    %1814 = vmatprep.subr.mxu0 0.0
    %1815 = vmatpush1.msra.mxu0 0.0
    %1816 = vmatprep.subr.mxu0 0.0
    %1817 = vmatpush1.msra.mxu0 0.0
    %1818 = vmatprep.subr.mxu0 0.0
    %1819 = vmatpush1.msra.mxu0 0.0
    %1820 = vmatprep.subr.mxu0 0.0
    %1821 = vmatpush1.msra.mxu0 0.0
    %1822 = vmatprep.subr.mxu0 0.0
    %1823 = vmatpush1.msra.mxu0 0.0
    %1824 = vmatprep.subr.mxu0 0.0
    %1825 = vmatpush1.msra.mxu0 0.0
    %1826 = vmatprep.subr.mxu0 0.0
    %1827 = vmatpush1.msra.mxu0 0.0
    %1828 = vmatprep.subr.mxu0 0.0
    %1829 = vmatpush1.msra.mxu0 0.0
    %1830 = vmatprep.subr.mxu0 0.0
    %1831 = vmatpush1.msra.mxu0 0.0
    %1832 = vmatprep.subr.mxu0 0.0
    %1833 = vmatpush1.msra.mxu0 0.0
    %1834 = vmatprep.subr.mxu0 0.0
    %1835 = vmatpush1.msra.mxu0 0.0
    %1836 = vmatprep.subr.mxu0 0.0
    %1837 = vmatpush1.msra.mxu0 0.0
    %1838 = vmatprep.mubr.f32.mxu0 0.0
    %1839 = vmatmul.mubr.f32.gmra.mrb[0].mxu0 %v1719
    %v1840 = vpop.f32.mrb[0].mxu0
    %v1841 = vadd.f32 0.0, %v1840
    %v1842 = vpop.f32.mrb[0].mxu0
    %v1843 = vadd.f32 0.0, %v1842
    %1844 = vdwg.mxu0
    %1845 = vmatprep.subr.mxu0 0.0
    %1846 = vmatpush1.msra.mxu0 %v1728
    %1847 = vmatprep.subr.mxu0 0.0
    %1848 = vmatpush1.msra.mxu0 %v1731
    %1849 = vmatprep.subr.mxu0 0.0
    %1850 = vmatpush1.msra.mxu0 %v1734
    %1851 = vmatprep.subr.mxu0 0.0
    %1852 = vmatpush1.msra.mxu0 %v1737
    %1853 = vmatprep.subr.mxu0 0.0
    %1854 = vmatpush1.msra.mxu0 %v1740
    %1855 = vmatprep.subr.mxu0 0.0
    %1856 = vmatpush1.msra.mxu0 %v1743
    %1857 = vmatprep.subr.mxu0 0.0
    %1858 = vmatpush1.msra.mxu0 %v1746
    %1859 = vmatprep.subr.mxu0 0.0
    %1860 = vmatpush1.msra.mxu0 %v1749
    %1861 = vmatprep.subr.mxu0 0.0
    %1862 = vmatpush1.msra.mxu0 %v1752
    %1863 = vmatprep.subr.mxu0 0.0
    %1864 = vmatpush1.msra.mxu0 %v1755
    %1865 = vmatprep.subr.mxu0 0.0
    %1866 = vmatpush1.msra.mxu0 %v1758
    %1867 = vmatprep.subr.mxu0 0.0
    %1868 = vmatpush1.msra.mxu0 %v1761
    %1869 = vmatprep.subr.mxu0 0.0
    %1870 = vmatpush1.msra.mxu0 %v1764
    %1871 = vmatprep.subr.mxu0 0.0
    %1872 = vmatpush1.msra.mxu0 %v1767
    %1873 = vmatprep.subr.mxu0 0.0
    %1874 = vmatpush1.msra.mxu0 %v1770
    %1875 = vmatprep.subr.mxu0 0.0
    %1876 = vmatpush1.msra.mxu0 %v1773
    %1877 = vmatprep.subr.mxu0 0.0
    %1878 = vmatpush1.msra.mxu0 0.0
    %1879 = vmatprep.subr.mxu0 0.0
    %1880 = vmatpush1.msra.mxu0 0.0
    %1881 = vmatprep.subr.mxu0 0.0
    %1882 = vmatpush1.msra.mxu0 0.0
    %1883 = vmatprep.subr.mxu0 0.0
    %1884 = vmatpush1.msra.mxu0 0.0
    %1885 = vmatprep.subr.mxu0 0.0
    %1886 = vmatpush1.msra.mxu0 0.0
    %1887 = vmatprep.subr.mxu0 0.0
    %1888 = vmatpush1.msra.mxu0 0.0
    %1889 = vmatprep.subr.mxu0 0.0
    %1890 = vmatpush1.msra.mxu0 0.0
    %1891 = vmatprep.subr.mxu0 0.0
    %1892 = vmatpush1.msra.mxu0 0.0
    %1893 = vmatprep.subr.mxu0 0.0
    %1894 = vmatpush1.msra.mxu0 0.0
    %1895 = vmatprep.subr.mxu0 0.0
    %1896 = vmatpush1.msra.mxu0 0.0
    %1897 = vmatprep.subr.mxu0 0.0
    %1898 = vmatpush1.msra.mxu0 0.0
    %1899 = vmatprep.subr.mxu0 0.0
    %1900 = vmatpush1.msra.mxu0 0.0
    %1901 = vmatprep.subr.mxu0 0.0
    %1902 = vmatpush1.msra.mxu0 0.0
    %1903 = vmatprep.subr.mxu0 0.0
    %1904 = vmatpush1.msra.mxu0 0.0
    %1905 = vmatprep.subr.mxu0 0.0
    %1906 = vmatpush1.msra.mxu0 0.0
    %1907 = vmatprep.subr.mxu0 0.0
    %1908 = vmatpush1.msra.mxu0 0.0
    %1909 = vmatprep.mubr.f32.mxu0 0.0
    %1910 = vmatmul.mubr.f32.gmra.mrb[0].mxu0 %v1719
    %v1911 = vpop.f32.mrb[0].mxu0
    %v1912 = vadd.f32 0.0, %v1911
    %v1913 = vpop.f32.mrb[0].mxu0
    %1914 = vdwg.mxu0
    %v1915 = vadd.f32 %v1723, %v1841
    %v1916 = vxor.u32 %v1915, 2147483648
    %v1917 = vmul.f32 %v1916, 1.442695
    %v1918 = vpow.pop %v1917
    %v1919 = vadd.f32 %v1918, 1.0
    %v1920 = vrcp.pop %v1919
    %v1921 = vmul.f32 1.0, %v1920
    %v1922 = vadd.f32 %v1724, %v1843
    %v1923 = vxor.u32 %v1922, 2147483648
    %v1924 = vmul.f32 %v1923, 1.442695
    %v1925 = vpow.pop %v1924
    %v1926 = vadd.f32 %v1925, 1.0
    %v1927 = vrcp.pop %v1926
    %v1928 = vmul.f32 1.0, %v1927
    %v1929 = vadd.f32 %v1912, %v417
    %v1930 = vmul.f32 %v1921, %v1929
    %v1931 = vadd.f32 %v1725, %v1930
    %v1932 = vtanh.pop %v1931
    %v1933 = vsub.f32 1.0, %v1928
    %v1934 = vmul.f32 %v1933, %v1932
    %v1935 = vmul.f32 %v1928, %v1719
    %v1936 = vadd.f32 %v1934, %v1935
    %s1937 = scalar_lea.vmem [#allocation15], 8
    %1938 = vst [vmem:[%s1937] sm:$0xff] %v1936
    %v1939 = vld [vmem:[#allocation3] sm:$0xff]
    %v1940 = vld [vmem:[#allocation3 + $0x8] sm:$0xff]
    %v1941 = vld [vmem:[#allocation3 + $0x10] sm:$0xff]
    %v1942 = vld [vmem:[#allocation12] sm:$0xff]
    %v1943 = vld [vmem:[#allocation12 + $0x8] sm:$0xff]
    %v1944 = vld [vmem:[#allocation12 + $0x10] sm:$0xff]
    %v1945 = vld [vmem:[#allocation12 + $0x18] sm:$0xff]
    %v1946 = vld [vmem:[#allocation12 + $0x20] sm:$0xff]
    %v1947 = vld [vmem:[#allocation12 + $0x28] sm:$0xff]
    %v1948 = vld [vmem:[#allocation12 + $0x30] sm:$0xff]
    %v1949 = vld [vmem:[#allocation12 + $0x38] sm:$0xff]
    %v1950 = vld [vmem:[#allocation12 + $0x40] sm:$0xff]
    %v1951 = vld [vmem:[#allocation12 + $0x48] sm:$0xff]
    %v1952 = vld [vmem:[#allocation12 + $0x50] sm:$0xff]
    %v1953 = vld [vmem:[#allocation12 + $0x58] sm:$0xff]
    %v1954 = vld [vmem:[#allocation12 + $0x60] sm:$0xff]
    %v1955 = vld [vmem:[#allocation12 + $0x68] sm:$0xff]
    %v1956 = vld [vmem:[#allocation12 + $0x70] sm:$0xff]
    %v1957 = vld [vmem:[#allocation12 + $0x78] sm:$0xff]
    %v1958 = vld [vmem:[#allocation12 + $0x80] sm:$0xff]
    %v1959 = vld [vmem:[#allocation12 + $0x88] sm:$0xff]
    %v1960 = vld [vmem:[#allocation12 + $0x90] sm:$0xff]
    %v1961 = vld [vmem:[#allocation12 + $0x98] sm:$0xff]
    %v1962 = vld [vmem:[#allocation12 + $0xa0] sm:$0xff]
    %v1963 = vld [vmem:[#allocation12 + $0xa8] sm:$0xff]
    %v1964 = vld [vmem:[#allocation12 + $0xb0] sm:$0xff]
    %v1965 = vld [vmem:[#allocation12 + $0xb8] sm:$0xff]
    %v1966 = vld [vmem:[#allocation12 + $0xc0] sm:$0xff]
    %v1967 = vld [vmem:[#allocation12 + $0xc8] sm:$0xff]
    %v1968 = vld [vmem:[#allocation12 + $0xd0] sm:$0xff]
    %v1969 = vld [vmem:[#allocation12 + $0xd8] sm:$0xff]
    %v1970 = vld [vmem:[#allocation12 + $0xe0] sm:$0xff]
    %v1971 = vld [vmem:[#allocation12 + $0xe8] sm:$0xff]
    %v1972 = vld [vmem:[#allocation12 + $0xf0] sm:$0xff]
    %v1973 = vld [vmem:[#allocation12 + $0xf8] sm:$0xff]
    %v1974 = vld [vmem:[#allocation12 + $0x100] sm:$0xff]
    %v1975 = vld [vmem:[#allocation12 + $0x108] sm:$0xff]
    %v1976 = vld [vmem:[#allocation12 + $0x110] sm:$0xff]
    %v1977 = vld [vmem:[#allocation12 + $0x118] sm:$0xff]
    %v1978 = vld [vmem:[#allocation12 + $0x120] sm:$0xff]
    %v1979 = vld [vmem:[#allocation12 + $0x128] sm:$0xff]
    %v1980 = vld [vmem:[#allocation12 + $0x130] sm:$0xff]
    %v1981 = vld [vmem:[#allocation12 + $0x138] sm:$0xff]
    %v1982 = vld [vmem:[#allocation12 + $0x140] sm:$0xff]
    %v1983 = vld [vmem:[#allocation12 + $0x148] sm:$0xff]
    %v1984 = vld [vmem:[#allocation12 + $0x150] sm:$0xff]
    %v1985 = vld [vmem:[#allocation12 + $0x158] sm:$0xff]
    %v1986 = vld [vmem:[#allocation12 + $0x160] sm:$0xff]
    %v1987 = vld [vmem:[#allocation12 + $0x168] sm:$0xff]
    %v1988 = vld [vmem:[#allocation12 + $0x170] sm:$0xff]
    %v1989 = vld [vmem:[#allocation12 + $0x178] sm:$0xff]
    %1990 = vmatprep.subr.mxu0 %v1943
    %1991 = vmatpush1.msra.mxu0 %v1942
    %1992 = vmatprep.subr.mxu0 %v1946
    %1993 = vmatpush1.msra.mxu0 %v1945
    %1994 = vmatprep.subr.mxu0 %v1949
    %1995 = vmatpush1.msra.mxu0 %v1948
    %1996 = vmatprep.subr.mxu0 %v1952
    %1997 = vmatpush1.msra.mxu0 %v1951
    %1998 = vmatprep.subr.mxu0 %v1955
    %1999 = vmatpush1.msra.mxu0 %v1954
    %2000 = vmatprep.subr.mxu0 %v1958
    %2001 = vmatpush1.msra.mxu0 %v1957
    %2002 = vmatprep.subr.mxu0 %v1961
    %2003 = vmatpush1.msra.mxu0 %v1960
    %2004 = vmatprep.subr.mxu0 %v1964
    %2005 = vmatpush1.msra.mxu0 %v1963
    %2006 = vmatprep.subr.mxu0 %v1967
    %2007 = vmatpush1.msra.mxu0 %v1966
    %2008 = vmatprep.subr.mxu0 %v1970
    %2009 = vmatpush1.msra.mxu0 %v1969
    %2010 = vmatprep.subr.mxu0 %v1973
    %2011 = vmatpush1.msra.mxu0 %v1972
    %2012 = vmatprep.subr.mxu0 %v1976
    %2013 = vmatpush1.msra.mxu0 %v1975
    %2014 = vmatprep.subr.mxu0 %v1979
    %2015 = vmatpush1.msra.mxu0 %v1978
    %2016 = vmatprep.subr.mxu0 %v1982
    %2017 = vmatpush1.msra.mxu0 %v1981
    %2018 = vmatprep.subr.mxu0 %v1985
    %2019 = vmatpush1.msra.mxu0 %v1984
    %2020 = vmatprep.subr.mxu0 %v1988
    %2021 = vmatpush1.msra.mxu0 %v1987
    %2022 = vmatprep.subr.mxu0 0.0
    %2023 = vmatpush1.msra.mxu0 0.0
    %2024 = vmatprep.subr.mxu0 0.0
    %2025 = vmatpush1.msra.mxu0 0.0
    %2026 = vmatprep.subr.mxu0 0.0
    %2027 = vmatpush1.msra.mxu0 0.0
    %2028 = vmatprep.subr.mxu0 0.0
    %2029 = vmatpush1.msra.mxu0 0.0
    %2030 = vmatprep.subr.mxu0 0.0
    %2031 = vmatpush1.msra.mxu0 0.0
    %2032 = vmatprep.subr.mxu0 0.0
    %2033 = vmatpush1.msra.mxu0 0.0
    %2034 = vmatprep.subr.mxu0 0.0
    %2035 = vmatpush1.msra.mxu0 0.0
    %2036 = vmatprep.subr.mxu0 0.0
    %2037 = vmatpush1.msra.mxu0 0.0
    %2038 = vmatprep.subr.mxu0 0.0
    %2039 = vmatpush1.msra.mxu0 0.0
    %2040 = vmatprep.subr.mxu0 0.0
    %2041 = vmatpush1.msra.mxu0 0.0
    %2042 = vmatprep.subr.mxu0 0.0
    %2043 = vmatpush1.msra.mxu0 0.0
    %2044 = vmatprep.subr.mxu0 0.0
    %2045 = vmatpush1.msra.mxu0 0.0
    %2046 = vmatprep.subr.mxu0 0.0
    %2047 = vmatpush1.msra.mxu0 0.0
    %2048 = vmatprep.subr.mxu0 0.0
    %2049 = vmatpush1.msra.mxu0 0.0
    %2050 = vmatprep.subr.mxu0 0.0
    %2051 = vmatpush1.msra.mxu0 0.0
    %2052 = vmatprep.subr.mxu0 0.0
    %2053 = vmatpush1.msra.mxu0 0.0
    %2054 = vmatprep.mubr.f32.mxu0 0.0
    %2055 = vmatmul.mubr.f32.gmra.mrb[0].mxu0 %v1936
    %v2056 = vpop.f32.mrb[0].mxu0
    %v2057 = vadd.f32 0.0, %v2056
    %v2058 = vpop.f32.mrb[0].mxu0
    %v2059 = vadd.f32 0.0, %v2058
    %2060 = vdwg.mxu0
    %2061 = vmatprep.subr.mxu0 0.0
    %2062 = vmatpush1.msra.mxu0 %v1944
    %2063 = vmatprep.subr.mxu0 0.0
    %2064 = vmatpush1.msra.mxu0 %v1947
    %2065 = vmatprep.subr.mxu0 0.0
    %2066 = vmatpush1.msra.mxu0 %v1950
    %2067 = vmatprep.subr.mxu0 0.0
    %2068 = vmatpush1.msra.mxu0 %v1953
    %2069 = vmatprep.subr.mxu0 0.0
    %2070 = vmatpush1.msra.mxu0 %v1956
    %2071 = vmatprep.subr.mxu0 0.0
    %2072 = vmatpush1.msra.mxu0 %v1959
    %2073 = vmatprep.subr.mxu0 0.0
    %2074 = vmatpush1.msra.mxu0 %v1962
    %2075 = vmatprep.subr.mxu0 0.0
    %2076 = vmatpush1.msra.mxu0 %v1965
    %2077 = vmatprep.subr.mxu0 0.0
    %2078 = vmatpush1.msra.mxu0 %v1968
    %2079 = vmatprep.subr.mxu0 0.0
    %2080 = vmatpush1.msra.mxu0 %v1971
    %2081 = vmatprep.subr.mxu0 0.0
    %2082 = vmatpush1.msra.mxu0 %v1974
    %2083 = vmatprep.subr.mxu0 0.0
    %2084 = vmatpush1.msra.mxu0 %v1977
    %2085 = vmatprep.subr.mxu0 0.0
    %2086 = vmatpush1.msra.mxu0 %v1980
    %2087 = vmatprep.subr.mxu0 0.0
    %2088 = vmatpush1.msra.mxu0 %v1983
    %2089 = vmatprep.subr.mxu0 0.0
    %2090 = vmatpush1.msra.mxu0 %v1986
    %2091 = vmatprep.subr.mxu0 0.0
    %2092 = vmatpush1.msra.mxu0 %v1989
    %2093 = vmatprep.subr.mxu0 0.0
    %2094 = vmatpush1.msra.mxu0 0.0
    %2095 = vmatprep.subr.mxu0 0.0
    %2096 = vmatpush1.msra.mxu0 0.0
    %2097 = vmatprep.subr.mxu0 0.0
    %2098 = vmatpush1.msra.mxu0 0.0
    %2099 = vmatprep.subr.mxu0 0.0
    %2100 = vmatpush1.msra.mxu0 0.0
    %2101 = vmatprep.subr.mxu0 0.0
    %2102 = vmatpush1.msra.mxu0 0.0
    %2103 = vmatprep.subr.mxu0 0.0
    %2104 = vmatpush1.msra.mxu0 0.0
    %2105 = vmatprep.subr.mxu0 0.0
    %2106 = vmatpush1.msra.mxu0 0.0
    %2107 = vmatprep.subr.mxu0 0.0
    %2108 = vmatpush1.msra.mxu0 0.0
    %2109 = vmatprep.subr.mxu0 0.0
    %2110 = vmatpush1.msra.mxu0 0.0
    %2111 = vmatprep.subr.mxu0 0.0
    %2112 = vmatpush1.msra.mxu0 0.0
    %2113 = vmatprep.subr.mxu0 0.0
    %2114 = vmatpush1.msra.mxu0 0.0
    %2115 = vmatprep.subr.mxu0 0.0
    %2116 = vmatpush1.msra.mxu0 0.0
    %2117 = vmatprep.subr.mxu0 0.0
    %2118 = vmatpush1.msra.mxu0 0.0
    %2119 = vmatprep.subr.mxu0 0.0
    %2120 = vmatpush1.msra.mxu0 0.0
    %2121 = vmatprep.subr.mxu0 0.0
    %2122 = vmatpush1.msra.mxu0 0.0
    %2123 = vmatprep.subr.mxu0 0.0
    %2124 = vmatpush1.msra.mxu0 0.0
    %2125 = vmatprep.mubr.f32.mxu0 0.0
    %2126 = vmatmul.mubr.f32.gmra.mrb[0].mxu0 %v1936
    %v2127 = vpop.f32.mrb[0].mxu0
    %v2128 = vadd.f32 0.0, %v2127
    %v2129 = vpop.f32.mrb[0].mxu0
    %2130 = vdwg.mxu0
    %v2131 = vadd.f32 %v1939, %v2057
    %v2132 = vxor.u32 %v2131, 2147483648
    %v2133 = vmul.f32 %v2132, 1.442695
    %v2134 = vpow.pop %v2133
    %v2135 = vadd.f32 %v2134, 1.0
    %v2136 = vrcp.pop %v2135
    %v2137 = vmul.f32 1.0, %v2136
    %v2138 = vadd.f32 %v1940, %v2059
    %v2139 = vxor.u32 %v2138, 2147483648
    %v2140 = vmul.f32 %v2139, 1.442695
    %v2141 = vpow.pop %v2140
    %v2142 = vadd.f32 %v2141, 1.0
    %v2143 = vrcp.pop %v2142
    %v2144 = vmul.f32 1.0, %v2143
    %v2145 = vadd.f32 %v2128, %v417
    %v2146 = vmul.f32 %v2137, %v2145
    %v2147 = vadd.f32 %v1941, %v2146
    %v2148 = vtanh.pop %v2147
    %v2149 = vsub.f32 1.0, %v2144
    %v2150 = vmul.f32 %v2149, %v2148
    %v2151 = vmul.f32 %v2144, %v1936
    %v2152 = vadd.f32 %v2150, %v2151
    %2153 = vst [vmem:[#allocation15] sm:$0xff] %v2152
    %2154 = vst [vmem:[#allocation2] sm:$0xff] %v2152
    // Predicated region
    $region54: #{encoder_forward.3} parent=1 // pred_check
      _
    $region55: #{encoder_forward.3} parent=1 // pred_check_branch
      %2156 = sbr.rel (0) target = $region57
    $region56: #{encoder_forward.3} parent=1 // pred_region
      %s2157 = ssub.s32 0, 0
      %s2158 = smul.u32 8, %s2157
      %s2160 = ssub.s32 1024, 1024
      %2161 = vsyncadd [#allocation6], %s2160
      %s2162 = smul.addr %s2158, 128
      %s2163 = scalar_lea.hbm %s6, %s2162
      %s2164 = sshll.u32 [#allocation15], 4
      %s2165 = int_to_ptr.vmem [resolvable:$true] %s2164
      %2170 = dma.vmem_to_hbm [thread:$0]  %s2165, 1024, %s2163, [#allocation6], 128, 128, 8
    $region57: #{encoder_forward.3} parent=1 // pred_fallthru
      _
    // Predicated region
    $region58: #{encoder_forward.3} parent=1 // pred_check
      _
    $region59: #{encoder_forward.3} parent=1 // pred_check_branch
      %2172 = sbr.rel (0) target = $region61
    $region60: #{encoder_forward.3} parent=1 // pred_region
      %2173 = dma.done [#allocation6], 1024
    $region61: #{encoder_forward.3} parent=1 // pred_fallthru
      _
    %2174 = vsyncpa [#allocation5], 1
    %2175 = vsyncpa [#allocation8], 1
    %2176 = vsyncpa [#allocation11], 1
    %2177 = vsyncpa [#allocation14], 1
    %2178 = vsyncpa [#allocation6], 1

// kernel: encoder_forward.2
$region0: #{encoder_forward.2}
  #allocation0 [shape = 'u32[]', space=smem, size = 0x4, offset = 0x4, fixed_abs, tag = 'smem constant byte address 0x4 - core index']
  #allocation1 [shape = 'u32[144,128]{1,0:T(1,128)}', space=vmem, size = 0x12000, scoped, tag = 'internal scratch']
  #allocation2 [shape = 'f32[8,128]{1,0:T(8,128)}', space=vmem, size = 0x1000, scoped, tag = 'scratch operand']
  #allocation3 [shape = 'f32[8,8,384]{2,1,0:T(8,128)}', space=vmem, size = 0x18000, scoped, tag = 'scratch operand']
  %s0 = inlined_call_operand.hbm [shape: f32[8,8,16], index: 0, kind: input, shape index: {}]
  %s1 = inlined_call_operand.hbm [shape: f32[8,128], index: 1, kind: input, shape index: {}]
  %s2 = inlined_call_operand.hbm [shape: f32[16,384], index: 2, kind: input, shape index: {}]
  %s3 = inlined_call_operand.hbm [shape: f32[1,384], index: 3, kind: input, shape index: {}]
  %s4 = inlined_call_operand.hbm [shape: f32[128,384], index: 4, kind: input, shape index: {}]
  %s5 = inlined_call_operand.hbm [shape: f32[1,128], index: 5, kind: input, shape index: {}]
  %s6 = inlined_call_operand.hbm [shape: f32[8,8,128], index: 6, kind: output, shape index: {}]
  %s7 = sld [smem:[#allocation0]]
  $region62: #{encoder_forward.2} parent=0
    _
  %s9 = ssub.s32 1, %s7
  %s10 = scalar_select 0, %s9, %s7
  $region1: #{encoder_forward.2} parent=0
    #allocation4 [shape = 'u8[32768]{0}', space=vmem, size = 0x8000, scoped, tag = 'input window, operand 0, single buffered']
    #allocation5 [shape = 's32[1]{0}', space=sflag, size = 0x4, scoped, tag = 'scoped memory for encoder_forward.2']
    #allocation6 [shape = 's32[1]{0}', space=sflag, size = 0x4, scoped, tag = 'scoped memory for encoder_forward.2']
    #allocation7 [shape = 'u8[4096]{0}', space=vmem, size = 0x1000, scoped, tag = 'input window, operand 1, single buffered']
    #allocation8 [shape = 's32[1]{0}', space=sflag, size = 0x4, scoped, tag = 'scoped memory for encoder_forward.2']
    #allocation9 [shape = 'u8[24576]{0}', space=vmem, size = 0x6000, scoped, tag = 'input window, operand 2, single buffered']
    #allocation10 [shape = 'u8[1536]{0}', space=vmem, size = 0x800, scoped, tag = 'input window, operand 3, single buffered']
    #allocation11 [shape = 's32[1]{0}', space=sflag, size = 0x4, scoped, tag = 'scoped memory for encoder_forward.2']
    #allocation12 [shape = 'u8[196608]{0}', space=vmem, size = 0x30000, scoped, tag = 'input window, operand 4, single buffered']
    #allocation13 [shape = 'u8[512]{0}', space=vmem, size = 0x400, scoped, tag = 'input window, operand 5, single buffered']
    #allocation14 [shape = 's32[1]{0}', space=sflag, size = 0x4, scoped, tag = 'scoped memory for encoder_forward.2']
    #allocation15 [shape = 'u8[32768]{0}', space=vmem, size = 0x8000, scoped, tag = 'output window, operand 0, single buffered']
    %11 = vsyncpa [#allocation5], 0
    %12 = vsyncpa [#allocation8], 0
    %13 = vsyncpa [#allocation11], 0
    %14 = vsyncpa [#allocation14], 0
    %15 = vsyncpa [#allocation6], 0
    // Predicated region
    $region2: #{encoder_forward.2} parent=1 // pred_check
      _
    $region3: #{encoder_forward.2} parent=1 // pred_check_branch
      %17 = sbr.rel (0) target = $region5
    $region4: #{encoder_forward.2} parent=1 // pred_region
      %s19 = ssub.s32 1024, 1024
      %20 = vsyncadd [#allocation5], %s19
      %s21 = sshll.u32 [#allocation4], 4
      %s22 = int_to_ptr.vmem [resolvable:$true] %s21
      %27 = dma.hbm_to_vmem [thread:$0]  %s0, 1024, %s22, [#allocation5], 128, 128, 8
    $region5: #{encoder_forward.2} parent=1 // pred_fallthru
      _
    // Predicated region
    $region6: #{encoder_forward.2} parent=1 // pred_check
      _
    $region7: #{encoder_forward.2} parent=1 // pred_check_branch
      %29 = sbr.rel (0) target = $region9
    $region8: #{encoder_forward.2} parent=1 // pred_region
      %s31 = ssub.s32 128, 128
      %32 = vsyncadd [#allocation8], %s31
      %s34 = sshll.u32 [#allocation7], 4
      %s35 = int_to_ptr.vmem [resolvable:$true] %s34
      %37 = dma.hbm_to_vmem [thread:$0]  %s1, 128, %s35, [#allocation8]
    $region9: #{encoder_forward.2} parent=1 // pred_fallthru
      _
    // Predicated region
    $region10: #{encoder_forward.2} parent=1 // pred_check
      _
    $region11: #{encoder_forward.2} parent=1 // pred_check_branch
      %39 = sbr.rel (0) target = $region13
    $region12: #{encoder_forward.2} parent=1 // pred_region
      %s41 = ssub.s32 768, 768
      %42 = vsyncadd [#allocation8], %s41
      %s43 = sshll.u32 [#allocation9], 4
      %s44 = int_to_ptr.vmem [resolvable:$true] %s43
      %49 = dma.hbm_to_vmem [thread:$0]  %s2, 768, %s44, [#allocation8], 384, 384, 24
    $region13: #{encoder_forward.2} parent=1 // pred_fallthru
      _
    // Predicated region
    $region14: #{encoder_forward.2} parent=1 // pred_check
      _
    $region15: #{encoder_forward.2} parent=1 // pred_check_branch
      %51 = sbr.rel (0) target = $region17
    $region16: #{encoder_forward.2} parent=1 // pred_region
      %s53 = ssub.s32 48, 48
      %54 = vsyncadd [#allocation11], %s53
      %s56 = sshll.u32 [#allocation10], 4
      %s57 = int_to_ptr.vmem [resolvable:$true] %s56
      %59 = dma.hbm_to_vmem [thread:$0]  %s3, 48, %s57, [#allocation11]
    $region17: #{encoder_forward.2} parent=1 // pred_fallthru
      _
    // Predicated region
    $region18: #{encoder_forward.2} parent=1 // pred_check
      _
    $region19: #{encoder_forward.2} parent=1 // pred_check_branch
      %61 = sbr.rel (0) target = $region21
    $region20: #{encoder_forward.2} parent=1 // pred_region
      %s63 = ssub.s32 6144, 6144
      %64 = vsyncadd [#allocation11], %s63
      %s65 = sshll.u32 [#allocation12], 4
      %s66 = int_to_ptr.vmem [resolvable:$true] %s65
      %71 = dma.hbm_to_vmem [thread:$0]  %s4, 6144, %s66, [#allocation11], 384, 384, 24
    $region21: #{encoder_forward.2} parent=1 // pred_fallthru
      _
    // Predicated region
    $region22: #{encoder_forward.2} parent=1 // pred_check
      _
    $region23: #{encoder_forward.2} parent=1 // pred_check_branch
      %73 = sbr.rel (0) target = $region25
    $region24: #{encoder_forward.2} parent=1 // pred_region
      %s75 = ssub.s32 16, 16
      %76 = vsyncadd [#allocation14], %s75
      %s78 = sshll.u32 [#allocation13], 4
      %s79 = int_to_ptr.vmem [resolvable:$true] %s78
      %81 = dma.hbm_to_vmem [thread:$0]  %s5, 16, %s79, [#allocation14]
    $region25: #{encoder_forward.2} parent=1 // pred_fallthru
      _
    // Predicated region
    $region26: #{encoder_forward.2} parent=1 // pred_check
      _
    $region27: #{encoder_forward.2} parent=1 // pred_check_branch
      %83 = sbr.rel (0) target = $region29
    $region28: #{encoder_forward.2} parent=1 // pred_region
      %84 = dma.done [#allocation5], 1024
    $region29: #{encoder_forward.2} parent=1 // pred_fallthru
      _
    // Predicated region
    $region30: #{encoder_forward.2} parent=1 // pred_check
      _
    $region31: #{encoder_forward.2} parent=1 // pred_check_branch
      %86 = sbr.rel (0) target = $region33
    $region32: #{encoder_forward.2} parent=1 // pred_region
      %87 = dma.done [#allocation8], 128
    $region33: #{encoder_forward.2} parent=1 // pred_fallthru
      _
    // Predicated region
    $region34: #{encoder_forward.2} parent=1 // pred_check
      _
    $region35: #{encoder_forward.2} parent=1 // pred_check_branch
      %89 = sbr.rel (0) target = $region37
    $region36: #{encoder_forward.2} parent=1 // pred_region
      %90 = dma.done [#allocation8], 768
    $region37: #{encoder_forward.2} parent=1 // pred_fallthru
      _
    // Predicated region
    $region38: #{encoder_forward.2} parent=1 // pred_check
      _
    $region39: #{encoder_forward.2} parent=1 // pred_check_branch
      %92 = sbr.rel (0) target = $region41
    $region40: #{encoder_forward.2} parent=1 // pred_region
      %93 = dma.done [#allocation11], 48
    $region41: #{encoder_forward.2} parent=1 // pred_fallthru
      _
    // Predicated region
    $region42: #{encoder_forward.2} parent=1 // pred_check
      _
    $region43: #{encoder_forward.2} parent=1 // pred_check_branch
      %95 = sbr.rel (0) target = $region45
    $region44: #{encoder_forward.2} parent=1 // pred_region
      %96 = dma.done [#allocation11], 6144
    $region45: #{encoder_forward.2} parent=1 // pred_fallthru
      _
    // Predicated region
    $region46: #{encoder_forward.2} parent=1 // pred_check
      _
    $region47: #{encoder_forward.2} parent=1 // pred_check_branch
      %98 = sbr.rel (0) target = $region49
    $region48: #{encoder_forward.2} parent=1 // pred_region
      %99 = dma.done [#allocation14], 16
    $region49: #{encoder_forward.2} parent=1 // pred_fallthru
      _
    %p100 = scmp.eq.s32.totalorder 0, 0
    // Predicated region
    $region50: #{encoder_forward.2} parent=1 // pred_check
      %p101 = pneg %p100
    $region51: #{encoder_forward.2} parent=1 // pred_check_branch
      %103 = sbr.rel (%p101) target = $region53
    $region52: #{encoder_forward.2} parent=1 // pred_region
      %v104 = vld [vmem:[#allocation7] sm:$0xff]
      %105 = vst [vmem:[#allocation2] sm:$0xff] %v104
    $region53: #{encoder_forward.2} parent=1 // pred_fallthru
      _
    %v106 = vld [vmem:[#allocation4] sm:$0xff]
    %v107 = vld [vmem:[#allocation4 + $0x8] sm:$0xff]
    %v108 = vld [vmem:[#allocation4 + $0x10] sm:$0xff]
    %v109 = vld [vmem:[#allocation4 + $0x18] sm:$0xff]
    %v110 = vld [vmem:[#allocation4 + $0x20] sm:$0xff]
    %v111 = vld [vmem:[#allocation4 + $0x28] sm:$0xff]
    %v112 = vld [vmem:[#allocation4 + $0x30] sm:$0xff]
    %v113 = vld [vmem:[#allocation4 + $0x38] sm:$0xff]
    %v114 = vld [vmem:[#allocation9] sm:$0xff]
    %v115 = vld [vmem:[#allocation9 + $0x8] sm:$0xff]
    %v116 = vld [vmem:[#allocation9 + $0x10] sm:$0xff]
    %v117 = vld [vmem:[#allocation9 + $0x18] sm:$0xff]
    %v118 = vld [vmem:[#allocation9 + $0x20] sm:$0xff]
    %v119 = vld [vmem:[#allocation9 + $0x28] sm:$0xff]
    %v120 = vld [vmem:[#allocation10] sm:$0x7]
    %v122 = vlaneseq
    %v123 = vshrl.u32 %v122, 7
    %v124 = vsub.s32 0, %v123
    %v125 = vrot.slane %v120, %v124
    %v126 = vlaneseq
    %v127 = vshrl.u32 %v126, 7
    %v128 = vsub.s32 1, %v127
    %v129 = vrot.slane %v120, %v128
    %v130 = vlaneseq
    %v131 = vshrl.u32 %v130, 7
    %v132 = vsub.s32 2, %v131
    %v133 = vrot.slane %v120, %v132
    %vm137 = vcmask 130048
    %v139 = vsel %vm137, %v106, 0
    %v142 = vsel %vm137, %v107, 0
    %v145 = vsel %vm137, %v108, 0
    %v148 = vsel %vm137, %v109, 0
    %v151 = vsel %vm137, %v110, 0
    %v154 = vsel %vm137, %v111, 0
    %v157 = vsel %vm137, %v112, 0
    %v160 = vsel %vm137, %v113, 0
    %162 = vmatprep.subr.mxu0 %v115
    %163 = vmatpush1.msra.mxu0 %v114
    %164 = vmatprep.subr.mxu0 %v118
    %165 = vmatpush1.msra.mxu0 %v117
    %166 = vmatprep.subr.mxu0 0.0
    %167 = vmatpush1.msra.mxu0 0.0
    %168 = vmatprep.subr.mxu0 0.0
    %169 = vmatpush1.msra.mxu0 0.0
    %170 = vmatprep.subr.mxu0 0.0
    %171 = vmatpush1.msra.mxu0 0.0
    %172 = vmatprep.subr.mxu0 0.0
    %173 = vmatpush1.msra.mxu0 0.0
    %174 = vmatprep.subr.mxu0 0.0
    %175 = vmatpush1.msra.mxu0 0.0
    %176 = vmatprep.subr.mxu0 0.0
    %177 = vmatpush1.msra.mxu0 0.0
    %178 = vmatprep.subr.mxu0 0.0
    %179 = vmatpush1.msra.mxu0 0.0
    %180 = vmatprep.subr.mxu0 0.0
    %181 = vmatpush1.msra.mxu0 0.0
    %182 = vmatprep.subr.mxu0 0.0
    %183 = vmatpush1.msra.mxu0 0.0
    %184 = vmatprep.subr.mxu0 0.0
    %185 = vmatpush1.msra.mxu0 0.0
    %186 = vmatprep.subr.mxu0 0.0
    %187 = vmatpush1.msra.mxu0 0.0
    %188 = vmatprep.subr.mxu0 0.0
    %189 = vmatpush1.msra.mxu0 0.0
    %190 = vmatprep.subr.mxu0 0.0
    %191 = vmatpush1.msra.mxu0 0.0
    %192 = vmatprep.subr.mxu0 0.0
    %193 = vmatpush1.msra.mxu0 0.0
    %194 = vmatprep.subr.mxu0 0.0
    %195 = vmatpush1.msra.mxu0 0.0
    %196 = vmatprep.subr.mxu0 0.0
    %197 = vmatpush1.msra.mxu0 0.0
    %198 = vmatprep.subr.mxu0 0.0
    %199 = vmatpush1.msra.mxu0 0.0
    %200 = vmatprep.subr.mxu0 0.0
    %201 = vmatpush1.msra.mxu0 0.0
    %202 = vmatprep.subr.mxu0 0.0
    %203 = vmatpush1.msra.mxu0 0.0
    %204 = vmatprep.subr.mxu0 0.0
    %205 = vmatpush1.msra.mxu0 0.0
    %206 = vmatprep.subr.mxu0 0.0
    %207 = vmatpush1.msra.mxu0 0.0
    %208 = vmatprep.subr.mxu0 0.0
    %209 = vmatpush1.msra.mxu0 0.0
    %210 = vmatprep.subr.mxu0 0.0
    %211 = vmatpush1.msra.mxu0 0.0
    %212 = vmatprep.subr.mxu0 0.0
    %213 = vmatpush1.msra.mxu0 0.0
    %214 = vmatprep.subr.mxu0 0.0
    %215 = vmatpush1.msra.mxu0 0.0
    %216 = vmatprep.subr.mxu0 0.0
    %217 = vmatpush1.msra.mxu0 0.0
    %218 = vmatprep.subr.mxu0 0.0
    %219 = vmatpush1.msra.mxu0 0.0
    %220 = vmatprep.subr.mxu0 0.0
    %221 = vmatpush1.msra.mxu0 0.0
    %222 = vmatprep.subr.mxu0 0.0
    %223 = vmatpush1.msra.mxu0 0.0
    %224 = vmatprep.subr.mxu0 0.0
    %225 = vmatpush1.msra.mxu0 0.0
    %226 = vmatprep.mubr.f32.mxu0 0.0
    %227 = vmatmul.mubr.f32.gmra.mrb[0].mxu0 %v139
    %v228 = vpop.f32.mrb[0].mxu0
    %v229 = vadd.f32 %v125, %v228
    %v230 = vpop.f32.mrb[0].mxu0
    %v231 = vadd.f32 %v129, %v230
    %232 = vmatprep.mubr.f32.mxu0 0.0
    %233 = vmatmul.mubr.f32.gmra.mrb[0].mxu0 %v142
    %v234 = vpop.f32.mrb[0].mxu0
    %v235 = vadd.f32 %v125, %v234
    %v236 = vpop.f32.mrb[0].mxu0
    %v237 = vadd.f32 %v129, %v236
    %238 = vmatprep.mubr.f32.mxu0 0.0
    %239 = vmatmul.mubr.f32.gmra.mrb[0].mxu0 %v145
    %v240 = vpop.f32.mrb[0].mxu0
    %v241 = vadd.f32 %v125, %v240
    %v242 = vpop.f32.mrb[0].mxu0
    %v243 = vadd.f32 %v129, %v242
    %244 = vmatprep.mubr.f32.mxu0 0.0
    %245 = vmatmul.mubr.f32.gmra.mrb[0].mxu0 %v148
    %v246 = vpop.f32.mrb[0].mxu0
    %v247 = vadd.f32 %v125, %v246
    %v248 = vpop.f32.mrb[0].mxu0
    %v249 = vadd.f32 %v129, %v248
    %250 = vmatprep.mubr.f32.mxu0 0.0
    %251 = vmatmul.mubr.f32.gmra.mrb[0].mxu0 %v151
    %v252 = vpop.f32.mrb[0].mxu0
    %v253 = vadd.f32 %v125, %v252
    %v254 = vpop.f32.mrb[0].mxu0
    %v255 = vadd.f32 %v129, %v254
    %256 = vmatprep.mubr.f32.mxu0 0.0
    %257 = vmatmul.mubr.f32.gmra.mrb[0].mxu0 %v154
    %v258 = vpop.f32.mrb[0].mxu0
    %v259 = vadd.f32 %v125, %v258
    %v260 = vpop.f32.mrb[0].mxu0
    %v261 = vadd.f32 %v129, %v260
    %262 = vmatprep.mubr.f32.mxu0 0.0
    %263 = vmatmul.mubr.f32.gmra.mrb[0].mxu0 %v157
    %v264 = vpop.f32.mrb[0].mxu0
    %v265 = vadd.f32 %v125, %v264
    %v266 = vpop.f32.mrb[0].mxu0
    %v267 = vadd.f32 %v129, %v266
    %268 = vmatprep.mubr.f32.mxu0 0.0
    %269 = vmatmul.mubr.f32.gmra.mrb[0].mxu0 %v160
    %v270 = vpop.f32.mrb[0].mxu0
    %v271 = vadd.f32 %v125, %v270
    %v272 = vpop.f32.mrb[0].mxu0
    %v273 = vadd.f32 %v129, %v272
    %274 = vdwg.mxu0
    %275 = vmatprep.subr.mxu0 0.0
    %276 = vmatpush1.msra.mxu0 %v116
    %277 = vmatprep.subr.mxu0 0.0
    %278 = vmatpush1.msra.mxu0 %v119
    %279 = vmatprep.subr.mxu0 0.0
    %280 = vmatpush1.msra.mxu0 0.0
    %281 = vmatprep.subr.mxu0 0.0
    %282 = vmatpush1.msra.mxu0 0.0
    %283 = vmatprep.subr.mxu0 0.0
    %284 = vmatpush1.msra.mxu0 0.0
    %285 = vmatprep.subr.mxu0 0.0
    %286 = vmatpush1.msra.mxu0 0.0
    %287 = vmatprep.subr.mxu0 0.0
    %288 = vmatpush1.msra.mxu0 0.0
    %289 = vmatprep.subr.mxu0 0.0
    %290 = vmatpush1.msra.mxu0 0.0
    %291 = vmatprep.subr.mxu0 0.0
    %292 = vmatpush1.msra.mxu0 0.0
    %293 = vmatprep.subr.mxu0 0.0
    %294 = vmatpush1.msra.mxu0 0.0
    %295 = vmatprep.subr.mxu0 0.0
    %296 = vmatpush1.msra.mxu0 0.0
    %297 = vmatprep.subr.mxu0 0.0
    %298 = vmatpush1.msra.mxu0 0.0
    %299 = vmatprep.subr.mxu0 0.0
    %300 = vmatpush1.msra.mxu0 0.0
    %301 = vmatprep.subr.mxu0 0.0
    %302 = vmatpush1.msra.mxu0 0.0
    %303 = vmatprep.subr.mxu0 0.0
    %304 = vmatpush1.msra.mxu0 0.0
    %305 = vmatprep.subr.mxu0 0.0
    %306 = vmatpush1.msra.mxu0 0.0
    %307 = vmatprep.subr.mxu0 0.0
    %308 = vmatpush1.msra.mxu0 0.0
    %309 = vmatprep.subr.mxu0 0.0
    %310 = vmatpush1.msra.mxu0 0.0
    %311 = vmatprep.subr.mxu0 0.0
    %312 = vmatpush1.msra.mxu0 0.0
    %313 = vmatprep.subr.mxu0 0.0
    %314 = vmatpush1.msra.mxu0 0.0
    %315 = vmatprep.subr.mxu0 0.0
    %316 = vmatpush1.msra.mxu0 0.0
    %317 = vmatprep.subr.mxu0 0.0
    %318 = vmatpush1.msra.mxu0 0.0
    %319 = vmatprep.subr.mxu0 0.0
    %320 = vmatpush1.msra.mxu0 0.0
    %321 = vmatprep.subr.mxu0 0.0
    %322 = vmatpush1.msra.mxu0 0.0
    %323 = vmatprep.subr.mxu0 0.0
    %324 = vmatpush1.msra.mxu0 0.0
    %325 = vmatprep.subr.mxu0 0.0
    %326 = vmatpush1.msra.mxu0 0.0
    %327 = vmatprep.subr.mxu0 0.0
    %328 = vmatpush1.msra.mxu0 0.0
    %329 = vmatprep.subr.mxu0 0.0
    %330 = vmatpush1.msra.mxu0 0.0
    %331 = vmatprep.subr.mxu0 0.0
    %332 = vmatpush1.msra.mxu0 0.0
    %333 = vmatprep.subr.mxu0 0.0
    %334 = vmatpush1.msra.mxu0 0.0
    %335 = vmatprep.subr.mxu0 0.0
    %336 = vmatpush1.msra.mxu0 0.0
    %337 = vmatprep.subr.mxu0 0.0
    %338 = vmatpush1.msra.mxu0 0.0
    %339 = vmatprep.mubr.f32.mxu0 0.0
    %340 = vmatmul.mubr.f32.gmra.mrb[0].mxu0 %v139
    %v341 = vpop.f32.mrb[0].mxu0
    %v342 = vadd.f32 %v133, %v341
    %v343 = vpop.f32.mrb[0].mxu0
    %344 = vmatprep.mubr.f32.mxu0 0.0
    %345 = vmatmul.mubr.f32.gmra.mrb[0].mxu0 %v142
    %v346 = vpop.f32.mrb[0].mxu0
    %v347 = vadd.f32 %v133, %v346
    %v348 = vpop.f32.mrb[0].mxu0
    %349 = vmatprep.mubr.f32.mxu0 0.0
    %350 = vmatmul.mubr.f32.gmra.mrb[0].mxu0 %v145
    %v351 = vpop.f32.mrb[0].mxu0
    %v352 = vadd.f32 %v133, %v351
    %v353 = vpop.f32.mrb[0].mxu0
    %354 = vmatprep.mubr.f32.mxu0 0.0
    %355 = vmatmul.mubr.f32.gmra.mrb[0].mxu0 %v148
    %v356 = vpop.f32.mrb[0].mxu0
    %v357 = vadd.f32 %v133, %v356
    %v358 = vpop.f32.mrb[0].mxu0
    %359 = vmatprep.mubr.f32.mxu0 0.0
    %360 = vmatmul.mubr.f32.gmra.mrb[0].mxu0 %v151
    %v361 = vpop.f32.mrb[0].mxu0
    %v362 = vadd.f32 %v133, %v361
    %v363 = vpop.f32.mrb[0].mxu0
    %364 = vmatprep.mubr.f32.mxu0 0.0
    %365 = vmatmul.mubr.f32.gmra.mrb[0].mxu0 %v154
    %v366 = vpop.f32.mrb[0].mxu0
    %v367 = vadd.f32 %v133, %v366
    %v368 = vpop.f32.mrb[0].mxu0
    %369 = vmatprep.mubr.f32.mxu0 0.0
    %370 = vmatmul.mubr.f32.gmra.mrb[0].mxu0 %v157
    %v371 = vpop.f32.mrb[0].mxu0
    %v372 = vadd.f32 %v133, %v371
    %v373 = vpop.f32.mrb[0].mxu0
    %374 = vmatprep.mubr.f32.mxu0 0.0
    %375 = vmatmul.mubr.f32.gmra.mrb[0].mxu0 %v160
    %v376 = vpop.f32.mrb[0].mxu0
    %v377 = vadd.f32 %v133, %v376
    %v378 = vpop.f32.mrb[0].mxu0
    %379 = vdwg.mxu0
    %380 = vst [vmem:[#allocation3] sm:$0xff] %v229
    %381 = vst [vmem:[#allocation3 + $0x8] sm:$0xff] %v231
    %382 = vst [vmem:[#allocation3 + $0x10] sm:$0xff] %v342
    %383 = vst [vmem:[#allocation3 + $0x18] sm:$0xff] %v235
    %384 = vst [vmem:[#allocation3 + $0x20] sm:$0xff] %v237
    %385 = vst [vmem:[#allocation3 + $0x28] sm:$0xff] %v347
    %386 = vst [vmem:[#allocation3 + $0x30] sm:$0xff] %v241
    %387 = vst [vmem:[#allocation3 + $0x38] sm:$0xff] %v243
    %388 = vst [vmem:[#allocation3 + $0x40] sm:$0xff] %v352
    %389 = vst [vmem:[#allocation3 + $0x48] sm:$0xff] %v247
    %390 = vst [vmem:[#allocation3 + $0x50] sm:$0xff] %v249
    %391 = vst [vmem:[#allocation3 + $0x58] sm:$0xff] %v357
    %392 = vst [vmem:[#allocation3 + $0x60] sm:$0xff] %v253
    %393 = vst [vmem:[#allocation3 + $0x68] sm:$0xff] %v255
    %394 = vst [vmem:[#allocation3 + $0x70] sm:$0xff] %v362
    %395 = vst [vmem:[#allocation3 + $0x78] sm:$0xff] %v259
    %396 = vst [vmem:[#allocation3 + $0x80] sm:$0xff] %v261
    %397 = vst [vmem:[#allocation3 + $0x88] sm:$0xff] %v367
    %398 = vst [vmem:[#allocation3 + $0x90] sm:$0xff] %v265
    %399 = vst [vmem:[#allocation3 + $0x98] sm:$0xff] %v267
    %400 = vst [vmem:[#allocation3 + $0xa0] sm:$0xff] %v372
    %401 = vst [vmem:[#allocation3 + $0xa8] sm:$0xff] %v271
    %402 = vst [vmem:[#allocation3 + $0xb0] sm:$0xff] %v273
    %403 = vst [vmem:[#allocation3 + $0xb8] sm:$0xff] %v377
    %v404 = vld [vmem:[#allocation13] sm:$0x1]
    %v406 = vlaneseq
    %v407 = vshrl.u32 %v406, 7
    %v408 = vsub.s32 0, %v407
    %v409 = vrot.slane %v404, %v408
    %v411 = vld [vmem:[#allocation2] sm:$0xff]
    %v412 = vld [vmem:[#allocation3] sm:$0xff]
    %v413 = vld [vmem:[#allocation3 + $0x8] sm:$0xff]
    %v414 = vld [vmem:[#allocation3 + $0x10] sm:$0xff]
    %v415 = vld [vmem:[#allocation12] sm:$0xff]
    %v416 = vld [vmem:[#allocation12 + $0x8] sm:$0xff]
    %v417 = vld [vmem:[#allocation12 + $0x10] sm:$0xff]
    %v418 = vld [vmem:[#allocation12 + $0x18] sm:$0xff]
    %v419 = vld [vmem:[#allocation12 + $0x20] sm:$0xff]
    %v420 = vld [vmem:[#allocation12 + $0x28] sm:$0xff]
    %v421 = vld [vmem:[#allocation12 + $0x30] sm:$0xff]
    %v422 = vld [vmem:[#allocation12 + $0x38] sm:$0xff]
    %v423 = vld [vmem:[#allocation12 + $0x40] sm:$0xff]
    %v424 = vld [vmem:[#allocation12 + $0x48] sm:$0xff]
    %v425 = vld [vmem:[#allocation12 + $0x50] sm:$0xff]
    %v426 = vld [vmem:[#allocation12 + $0x58] sm:$0xff]
    %v427 = vld [vmem:[#allocation12 + $0x60] sm:$0xff]
    %v428 = vld [vmem:[#allocation12 + $0x68] sm:$0xff]
    %v429 = vld [vmem:[#allocation12 + $0x70] sm:$0xff]
    %v430 = vld [vmem:[#allocation12 + $0x78] sm:$0xff]
    %v431 = vld [vmem:[#allocation12 + $0x80] sm:$0xff]
    %v432 = vld [vmem:[#allocation12 + $0x88] sm:$0xff]
    %v433 = vld [vmem:[#allocation12 + $0x90] sm:$0xff]
    %v434 = vld [vmem:[#allocation12 + $0x98] sm:$0xff]
    %v435 = vld [vmem:[#allocation12 + $0xa0] sm:$0xff]
    %v436 = vld [vmem:[#allocation12 + $0xa8] sm:$0xff]
    %v437 = vld [vmem:[#allocation12 + $0xb0] sm:$0xff]
    %v438 = vld [vmem:[#allocation12 + $0xb8] sm:$0xff]
    %v439 = vld [vmem:[#allocation12 + $0xc0] sm:$0xff]
    %v440 = vld [vmem:[#allocation12 + $0xc8] sm:$0xff]
    %v441 = vld [vmem:[#allocation12 + $0xd0] sm:$0xff]
    %v442 = vld [vmem:[#allocation12 + $0xd8] sm:$0xff]
    %v443 = vld [vmem:[#allocation12 + $0xe0] sm:$0xff]
    %v444 = vld [vmem:[#allocation12 + $0xe8] sm:$0xff]
    %v445 = vld [vmem:[#allocation12 + $0xf0] sm:$0xff]
    %v446 = vld [vmem:[#allocation12 + $0xf8] sm:$0xff]
    %v447 = vld [vmem:[#allocation12 + $0x100] sm:$0xff]
    %v448 = vld [vmem:[#allocation12 + $0x108] sm:$0xff]
    %v449 = vld [vmem:[#allocation12 + $0x110] sm:$0xff]
    %v450 = vld [vmem:[#allocation12 + $0x118] sm:$0xff]
    %v451 = vld [vmem:[#allocation12 + $0x120] sm:$0xff]
    %v452 = vld [vmem:[#allocation12 + $0x128] sm:$0xff]
    %v453 = vld [vmem:[#allocation12 + $0x130] sm:$0xff]
    %v454 = vld [vmem:[#allocation12 + $0x138] sm:$0xff]
    %v455 = vld [vmem:[#allocation12 + $0x140] sm:$0xff]
    %v456 = vld [vmem:[#allocation12 + $0x148] sm:$0xff]
    %v457 = vld [vmem:[#allocation12 + $0x150] sm:$0xff]
    %v458 = vld [vmem:[#allocation12 + $0x158] sm:$0xff]
    %v459 = vld [vmem:[#allocation12 + $0x160] sm:$0xff]
    %v460 = vld [vmem:[#allocation12 + $0x168] sm:$0xff]
    %v461 = vld [vmem:[#allocation12 + $0x170] sm:$0xff]
    %v462 = vld [vmem:[#allocation12 + $0x178] sm:$0xff]
    %463 = vmatprep.subr.mxu0 %v416
    %464 = vmatpush1.msra.mxu0 %v415
    %465 = vmatprep.subr.mxu0 %v419
    %466 = vmatpush1.msra.mxu0 %v418
    %467 = vmatprep.subr.mxu0 %v422
    %468 = vmatpush1.msra.mxu0 %v421
    %469 = vmatprep.subr.mxu0 %v425
    %470 = vmatpush1.msra.mxu0 %v424
    %471 = vmatprep.subr.mxu0 %v428
    %472 = vmatpush1.msra.mxu0 %v427
    %473 = vmatprep.subr.mxu0 %v431
    %474 = vmatpush1.msra.mxu0 %v430
    %475 = vmatprep.subr.mxu0 %v434
    %476 = vmatpush1.msra.mxu0 %v433
    %477 = vmatprep.subr.mxu0 %v437
    %478 = vmatpush1.msra.mxu0 %v436
    %479 = vmatprep.subr.mxu0 %v440
    %480 = vmatpush1.msra.mxu0 %v439
    %481 = vmatprep.subr.mxu0 %v443
    %482 = vmatpush1.msra.mxu0 %v442
    %483 = vmatprep.subr.mxu0 %v446
    %484 = vmatpush1.msra.mxu0 %v445
    %485 = vmatprep.subr.mxu0 %v449
    %486 = vmatpush1.msra.mxu0 %v448
    %487 = vmatprep.subr.mxu0 %v452
    %488 = vmatpush1.msra.mxu0 %v451
    %489 = vmatprep.subr.mxu0 %v455
    %490 = vmatpush1.msra.mxu0 %v454
    %491 = vmatprep.subr.mxu0 %v458
    %492 = vmatpush1.msra.mxu0 %v457
    %493 = vmatprep.subr.mxu0 %v461
    %494 = vmatpush1.msra.mxu0 %v460
    %495 = vmatprep.subr.mxu0 0.0
    %496 = vmatpush1.msra.mxu0 0.0
    %497 = vmatprep.subr.mxu0 0.0
    %498 = vmatpush1.msra.mxu0 0.0
    %499 = vmatprep.subr.mxu0 0.0
    %500 = vmatpush1.msra.mxu0 0.0
    %501 = vmatprep.subr.mxu0 0.0
    %502 = vmatpush1.msra.mxu0 0.0
    %503 = vmatprep.subr.mxu0 0.0
    %504 = vmatpush1.msra.mxu0 0.0
    %505 = vmatprep.subr.mxu0 0.0
    %506 = vmatpush1.msra.mxu0 0.0
    %507 = vmatprep.subr.mxu0 0.0
    %508 = vmatpush1.msra.mxu0 0.0
    %509 = vmatprep.subr.mxu0 0.0
    %510 = vmatpush1.msra.mxu0 0.0
    %511 = vmatprep.subr.mxu0 0.0
    %512 = vmatpush1.msra.mxu0 0.0
    %513 = vmatprep.subr.mxu0 0.0
    %514 = vmatpush1.msra.mxu0 0.0
    %515 = vmatprep.subr.mxu0 0.0
    %516 = vmatpush1.msra.mxu0 0.0
    %517 = vmatprep.subr.mxu0 0.0
    %518 = vmatpush1.msra.mxu0 0.0
    %519 = vmatprep.subr.mxu0 0.0
    %520 = vmatpush1.msra.mxu0 0.0
    %521 = vmatprep.subr.mxu0 0.0
    %522 = vmatpush1.msra.mxu0 0.0
    %523 = vmatprep.subr.mxu0 0.0
    %524 = vmatpush1.msra.mxu0 0.0
    %525 = vmatprep.subr.mxu0 0.0
    %526 = vmatpush1.msra.mxu0 0.0
    %527 = vmatprep.mubr.f32.mxu0 0.0
    %528 = vmatmul.mubr.f32.gmra.mrb[0].mxu0 %v411
    %v529 = vpop.f32.mrb[0].mxu0
    %v530 = vadd.f32 0.0, %v529
    %v531 = vpop.f32.mrb[0].mxu0
    %v532 = vadd.f32 0.0, %v531
    %533 = vdwg.mxu0
    %534 = vmatprep.subr.mxu0 0.0
    %535 = vmatpush1.msra.mxu0 %v417
    %536 = vmatprep.subr.mxu0 0.0
    %537 = vmatpush1.msra.mxu0 %v420
    %538 = vmatprep.subr.mxu0 0.0
    %539 = vmatpush1.msra.mxu0 %v423
    %540 = vmatprep.subr.mxu0 0.0
    %541 = vmatpush1.msra.mxu0 %v426
    %542 = vmatprep.subr.mxu0 0.0
    %543 = vmatpush1.msra.mxu0 %v429
    %544 = vmatprep.subr.mxu0 0.0
    %545 = vmatpush1.msra.mxu0 %v432
    %546 = vmatprep.subr.mxu0 0.0
    %547 = vmatpush1.msra.mxu0 %v435
    %548 = vmatprep.subr.mxu0 0.0
    %549 = vmatpush1.msra.mxu0 %v438
    %550 = vmatprep.subr.mxu0 0.0
    %551 = vmatpush1.msra.mxu0 %v441
    %552 = vmatprep.subr.mxu0 0.0
    %553 = vmatpush1.msra.mxu0 %v444
    %554 = vmatprep.subr.mxu0 0.0
    %555 = vmatpush1.msra.mxu0 %v447
    %556 = vmatprep.subr.mxu0 0.0
    %557 = vmatpush1.msra.mxu0 %v450
    %558 = vmatprep.subr.mxu0 0.0
    %559 = vmatpush1.msra.mxu0 %v453
    %560 = vmatprep.subr.mxu0 0.0
    %561 = vmatpush1.msra.mxu0 %v456
    %562 = vmatprep.subr.mxu0 0.0
    %563 = vmatpush1.msra.mxu0 %v459
    %564 = vmatprep.subr.mxu0 0.0
    %565 = vmatpush1.msra.mxu0 %v462
    %566 = vmatprep.subr.mxu0 0.0
    %567 = vmatpush1.msra.mxu0 0.0
    %568 = vmatprep.subr.mxu0 0.0
    %569 = vmatpush1.msra.mxu0 0.0
    %570 = vmatprep.subr.mxu0 0.0
    %571 = vmatpush1.msra.mxu0 0.0
    %572 = vmatprep.subr.mxu0 0.0
    %573 = vmatpush1.msra.mxu0 0.0
    %574 = vmatprep.subr.mxu0 0.0
    %575 = vmatpush1.msra.mxu0 0.0
    %576 = vmatprep.subr.mxu0 0.0
    %577 = vmatpush1.msra.mxu0 0.0
    %578 = vmatprep.subr.mxu0 0.0
    %579 = vmatpush1.msra.mxu0 0.0
    %580 = vmatprep.subr.mxu0 0.0
    %581 = vmatpush1.msra.mxu0 0.0
    %582 = vmatprep.subr.mxu0 0.0
    %583 = vmatpush1.msra.mxu0 0.0
    %584 = vmatprep.subr.mxu0 0.0
    %585 = vmatpush1.msra.mxu0 0.0
    %586 = vmatprep.subr.mxu0 0.0
    %587 = vmatpush1.msra.mxu0 0.0
    %588 = vmatprep.subr.mxu0 0.0
    %589 = vmatpush1.msra.mxu0 0.0
    %590 = vmatprep.subr.mxu0 0.0
    %591 = vmatpush1.msra.mxu0 0.0
    %592 = vmatprep.subr.mxu0 0.0
    %593 = vmatpush1.msra.mxu0 0.0
    %594 = vmatprep.subr.mxu0 0.0
    %595 = vmatpush1.msra.mxu0 0.0
    %596 = vmatprep.subr.mxu0 0.0
    %597 = vmatpush1.msra.mxu0 0.0
    %598 = vmatprep.mubr.f32.mxu0 0.0
    %599 = vmatmul.mubr.f32.gmra.mrb[0].mxu0 %v411
    %v600 = vpop.f32.mrb[0].mxu0
    %v601 = vadd.f32 0.0, %v600
    %v602 = vpop.f32.mrb[0].mxu0
    %603 = vdwg.mxu0
    %v604 = vadd.f32 %v412, %v530
    %v605 = vxor.u32 %v604, 2147483648
    %v606 = vmul.f32 %v605, 1.442695
    %v607 = vpow.pop %v606
    %v608 = vadd.f32 %v607, 1.0
    %v609 = vrcp.pop %v608
    %v610 = vmul.f32 1.0, %v609
    %v611 = vadd.f32 %v413, %v532
    %v612 = vxor.u32 %v611, 2147483648
    %v613 = vmul.f32 %v612, 1.442695
    %v614 = vpow.pop %v613
    %v615 = vadd.f32 %v614, 1.0
    %v616 = vrcp.pop %v615
    %v617 = vmul.f32 1.0, %v616
    %v618 = vadd.f32 %v601, %v409
    %v619 = vmul.f32 %v610, %v618
    %v620 = vadd.f32 %v414, %v619
    %v621 = vtanh.pop %v620
    %v622 = vsub.f32 1.0, %v617
    %v623 = vmul.f32 %v622, %v621
    %v624 = vmul.f32 %v617, %v411
    %v625 = vadd.f32 %v623, %v624
    %626 = vst [vmem:[#allocation15] sm:$0xff] %v625
    %s627 = scalar_lea.vmem [#allocation3], 24
    %v628 = vld [vmem:[%s627] sm:$0xff]
    %v629 = vld [vmem:[%s627 + $0x8] sm:$0xff]
    %v630 = vld [vmem:[%s627 + $0x10] sm:$0xff]
    %v631 = vld [vmem:[#allocation12] sm:$0xff]
    %v632 = vld [vmem:[#allocation12 + $0x8] sm:$0xff]
    %v633 = vld [vmem:[#allocation12 + $0x10] sm:$0xff]
    %v634 = vld [vmem:[#allocation12 + $0x18] sm:$0xff]
    %v635 = vld [vmem:[#allocation12 + $0x20] sm:$0xff]
    %v636 = vld [vmem:[#allocation12 + $0x28] sm:$0xff]
    %v637 = vld [vmem:[#allocation12 + $0x30] sm:$0xff]
    %v638 = vld [vmem:[#allocation12 + $0x38] sm:$0xff]
    %v639 = vld [vmem:[#allocation12 + $0x40] sm:$0xff]
    %v640 = vld [vmem:[#allocation12 + $0x48] sm:$0xff]
    %v641 = vld [vmem:[#allocation12 + $0x50] sm:$0xff]
    %v642 = vld [vmem:[#allocation12 + $0x58] sm:$0xff]
    %v643 = vld [vmem:[#allocation12 + $0x60] sm:$0xff]
    %v644 = vld [vmem:[#allocation12 + $0x68] sm:$0xff]
    %v645 = vld [vmem:[#allocation12 + $0x70] sm:$0xff]
    %v646 = vld [vmem:[#allocation12 + $0x78] sm:$0xff]
    %v647 = vld [vmem:[#allocation12 + $0x80] sm:$0xff]
    %v648 = vld [vmem:[#allocation12 + $0x88] sm:$0xff]
    %v649 = vld [vmem:[#allocation12 + $0x90] sm:$0xff]
    %v650 = vld [vmem:[#allocation12 + $0x98] sm:$0xff]
    %v651 = vld [vmem:[#allocation12 + $0xa0] sm:$0xff]
    %v652 = vld [vmem:[#allocation12 + $0xa8] sm:$0xff]
    %v653 = vld [vmem:[#allocation12 + $0xb0] sm:$0xff]
    %v654 = vld [vmem:[#allocation12 + $0xb8] sm:$0xff]
    %v655 = vld [vmem:[#allocation12 + $0xc0] sm:$0xff]
    %v656 = vld [vmem:[#allocation12 + $0xc8] sm:$0xff]
    %v657 = vld [vmem:[#allocation12 + $0xd0] sm:$0xff]
    %v658 = vld [vmem:[#allocation12 + $0xd8] sm:$0xff]
    %v659 = vld [vmem:[#allocation12 + $0xe0] sm:$0xff]
    %v660 = vld [vmem:[#allocation12 + $0xe8] sm:$0xff]
    %v661 = vld [vmem:[#allocation12 + $0xf0] sm:$0xff]
    %v662 = vld [vmem:[#allocation12 + $0xf8] sm:$0xff]
    %v663 = vld [vmem:[#allocation12 + $0x100] sm:$0xff]
    %v664 = vld [vmem:[#allocation12 + $0x108] sm:$0xff]
    %v665 = vld [vmem:[#allocation12 + $0x110] sm:$0xff]
    %v666 = vld [vmem:[#allocation12 + $0x118] sm:$0xff]
    %v667 = vld [vmem:[#allocation12 + $0x120] sm:$0xff]
    %v668 = vld [vmem:[#allocation12 + $0x128] sm:$0xff]
    %v669 = vld [vmem:[#allocation12 + $0x130] sm:$0xff]
    %v670 = vld [vmem:[#allocation12 + $0x138] sm:$0xff]
    %v671 = vld [vmem:[#allocation12 + $0x140] sm:$0xff]
    %v672 = vld [vmem:[#allocation12 + $0x148] sm:$0xff]
    %v673 = vld [vmem:[#allocation12 + $0x150] sm:$0xff]
    %v674 = vld [vmem:[#allocation12 + $0x158] sm:$0xff]
    %v675 = vld [vmem:[#allocation12 + $0x160] sm:$0xff]
    %v676 = vld [vmem:[#allocation12 + $0x168] sm:$0xff]
    %v677 = vld [vmem:[#allocation12 + $0x170] sm:$0xff]
    %v678 = vld [vmem:[#allocation12 + $0x178] sm:$0xff]
    %679 = vmatprep.subr.mxu0 %v632
    %680 = vmatpush1.msra.mxu0 %v631
    %681 = vmatprep.subr.mxu0 %v635
    %682 = vmatpush1.msra.mxu0 %v634
    %683 = vmatprep.subr.mxu0 %v638
    %684 = vmatpush1.msra.mxu0 %v637
    %685 = vmatprep.subr.mxu0 %v641
    %686 = vmatpush1.msra.mxu0 %v640
    %687 = vmatprep.subr.mxu0 %v644
    %688 = vmatpush1.msra.mxu0 %v643
    %689 = vmatprep.subr.mxu0 %v647
    %690 = vmatpush1.msra.mxu0 %v646
    %691 = vmatprep.subr.mxu0 %v650
    %692 = vmatpush1.msra.mxu0 %v649
    %693 = vmatprep.subr.mxu0 %v653
    %694 = vmatpush1.msra.mxu0 %v652
    %695 = vmatprep.subr.mxu0 %v656
    %696 = vmatpush1.msra.mxu0 %v655
    %697 = vmatprep.subr.mxu0 %v659
    %698 = vmatpush1.msra.mxu0 %v658
    %699 = vmatprep.subr.mxu0 %v662
    %700 = vmatpush1.msra.mxu0 %v661
    %701 = vmatprep.subr.mxu0 %v665
    %702 = vmatpush1.msra.mxu0 %v664
    %703 = vmatprep.subr.mxu0 %v668
    %704 = vmatpush1.msra.mxu0 %v667
    %705 = vmatprep.subr.mxu0 %v671
    %706 = vmatpush1.msra.mxu0 %v670
    %707 = vmatprep.subr.mxu0 %v674
    %708 = vmatpush1.msra.mxu0 %v673
    %709 = vmatprep.subr.mxu0 %v677
    %710 = vmatpush1.msra.mxu0 %v676
    %711 = vmatprep.subr.mxu0 0.0
    %712 = vmatpush1.msra.mxu0 0.0
    %713 = vmatprep.subr.mxu0 0.0
    %714 = vmatpush1.msra.mxu0 0.0
    %715 = vmatprep.subr.mxu0 0.0
    %716 = vmatpush1.msra.mxu0 0.0
    %717 = vmatprep.subr.mxu0 0.0
    %718 = vmatpush1.msra.mxu0 0.0
    %719 = vmatprep.subr.mxu0 0.0
    %720 = vmatpush1.msra.mxu0 0.0
    %721 = vmatprep.subr.mxu0 0.0
    %722 = vmatpush1.msra.mxu0 0.0
    %723 = vmatprep.subr.mxu0 0.0
    %724 = vmatpush1.msra.mxu0 0.0
    %725 = vmatprep.subr.mxu0 0.0
    %726 = vmatpush1.msra.mxu0 0.0
    %727 = vmatprep.subr.mxu0 0.0
    %728 = vmatpush1.msra.mxu0 0.0
    %729 = vmatprep.subr.mxu0 0.0
    %730 = vmatpush1.msra.mxu0 0.0
    %731 = vmatprep.subr.mxu0 0.0
    %732 = vmatpush1.msra.mxu0 0.0
    %733 = vmatprep.subr.mxu0 0.0
    %734 = vmatpush1.msra.mxu0 0.0
    %735 = vmatprep.subr.mxu0 0.0
    %736 = vmatpush1.msra.mxu0 0.0
    %737 = vmatprep.subr.mxu0 0.0
    %738 = vmatpush1.msra.mxu0 0.0
    %739 = vmatprep.subr.mxu0 0.0
    %740 = vmatpush1.msra.mxu0 0.0
    %741 = vmatprep.subr.mxu0 0.0
    %742 = vmatpush1.msra.mxu0 0.0
    %743 = vmatprep.mubr.f32.mxu0 0.0
    %744 = vmatmul.mubr.f32.gmra.mrb[0].mxu0 %v625
    %v745 = vpop.f32.mrb[0].mxu0
    %v746 = vadd.f32 0.0, %v745
    %v747 = vpop.f32.mrb[0].mxu0
    %v748 = vadd.f32 0.0, %v747
    %749 = vdwg.mxu0
    %750 = vmatprep.subr.mxu0 0.0
    %751 = vmatpush1.msra.mxu0 %v633
    %752 = vmatprep.subr.mxu0 0.0
    %753 = vmatpush1.msra.mxu0 %v636
    %754 = vmatprep.subr.mxu0 0.0
    %755 = vmatpush1.msra.mxu0 %v639
    %756 = vmatprep.subr.mxu0 0.0
    %757 = vmatpush1.msra.mxu0 %v642
    %758 = vmatprep.subr.mxu0 0.0
    %759 = vmatpush1.msra.mxu0 %v645
    %760 = vmatprep.subr.mxu0 0.0
    %761 = vmatpush1.msra.mxu0 %v648
    %762 = vmatprep.subr.mxu0 0.0
    %763 = vmatpush1.msra.mxu0 %v651
    %764 = vmatprep.subr.mxu0 0.0
    %765 = vmatpush1.msra.mxu0 %v654
    %766 = vmatprep.subr.mxu0 0.0
    %767 = vmatpush1.msra.mxu0 %v657
    %768 = vmatprep.subr.mxu0 0.0
    %769 = vmatpush1.msra.mxu0 %v660
    %770 = vmatprep.subr.mxu0 0.0
    %771 = vmatpush1.msra.mxu0 %v663
    %772 = vmatprep.subr.mxu0 0.0
    %773 = vmatpush1.msra.mxu0 %v666
    %774 = vmatprep.subr.mxu0 0.0
    %775 = vmatpush1.msra.mxu0 %v669
    %776 = vmatprep.subr.mxu0 0.0
    %777 = vmatpush1.msra.mxu0 %v672
    %778 = vmatprep.subr.mxu0 0.0
    %779 = vmatpush1.msra.mxu0 %v675
    %780 = vmatprep.subr.mxu0 0.0
    %781 = vmatpush1.msra.mxu0 %v678
    %782 = vmatprep.subr.mxu0 0.0
    %783 = vmatpush1.msra.mxu0 0.0
    %784 = vmatprep.subr.mxu0 0.0
    %785 = vmatpush1.msra.mxu0 0.0
    %786 = vmatprep.subr.mxu0 0.0
    %787 = vmatpush1.msra.mxu0 0.0
    %788 = vmatprep.subr.mxu0 0.0
    %789 = vmatpush1.msra.mxu0 0.0
    %790 = vmatprep.subr.mxu0 0.0
    %791 = vmatpush1.msra.mxu0 0.0
    %792 = vmatprep.subr.mxu0 0.0
    %793 = vmatpush1.msra.mxu0 0.0
    %794 = vmatprep.subr.mxu0 0.0
    %795 = vmatpush1.msra.mxu0 0.0
    %796 = vmatprep.subr.mxu0 0.0
    %797 = vmatpush1.msra.mxu0 0.0
    %798 = vmatprep.subr.mxu0 0.0
    %799 = vmatpush1.msra.mxu0 0.0
    %800 = vmatprep.subr.mxu0 0.0
    %801 = vmatpush1.msra.mxu0 0.0
    %802 = vmatprep.subr.mxu0 0.0
    %803 = vmatpush1.msra.mxu0 0.0
    %804 = vmatprep.subr.mxu0 0.0
    %805 = vmatpush1.msra.mxu0 0.0
    %806 = vmatprep.subr.mxu0 0.0
    %807 = vmatpush1.msra.mxu0 0.0
    %808 = vmatprep.subr.mxu0 0.0
    %809 = vmatpush1.msra.mxu0 0.0
    %810 = vmatprep.subr.mxu0 0.0
    %811 = vmatpush1.msra.mxu0 0.0
    %812 = vmatprep.subr.mxu0 0.0
    %813 = vmatpush1.msra.mxu0 0.0
    %814 = vmatprep.mubr.f32.mxu0 0.0
    %815 = vmatmul.mubr.f32.gmra.mrb[0].mxu0 %v625
    %v816 = vpop.f32.mrb[0].mxu0
    %v817 = vadd.f32 0.0, %v816
    %v818 = vpop.f32.mrb[0].mxu0
    %819 = vdwg.mxu0
    %v820 = vadd.f32 %v628, %v746
    %v821 = vxor.u32 %v820, 2147483648
    %v822 = vmul.f32 %v821, 1.442695
    %v823 = vpow.pop %v822
    %v824 = vadd.f32 %v823, 1.0
    %v825 = vrcp.pop %v824
    %v826 = vmul.f32 1.0, %v825
    %v827 = vadd.f32 %v629, %v748
    %v828 = vxor.u32 %v827, 2147483648
    %v829 = vmul.f32 %v828, 1.442695
    %v830 = vpow.pop %v829
    %v831 = vadd.f32 %v830, 1.0
    %v832 = vrcp.pop %v831
    %v833 = vmul.f32 1.0, %v832
    %v834 = vadd.f32 %v817, %v409
    %v835 = vmul.f32 %v826, %v834
    %v836 = vadd.f32 %v630, %v835
    %v837 = vtanh.pop %v836
    %v838 = vsub.f32 1.0, %v833
    %v839 = vmul.f32 %v838, %v837
    %v840 = vmul.f32 %v833, %v625
    %v841 = vadd.f32 %v839, %v840
    %s842 = scalar_lea.vmem [#allocation15], 8
    %843 = vst [vmem:[%s842] sm:$0xff] %v841
    %s844 = scalar_lea.vmem [#allocation3], 48
    %v845 = vld [vmem:[%s844] sm:$0xff]
    %v846 = vld [vmem:[%s844 + $0x8] sm:$0xff]
    %v847 = vld [vmem:[%s844 + $0x10] sm:$0xff]
    %v848 = vld [vmem:[#allocation12] sm:$0xff]
    %v849 = vld [vmem:[#allocation12 + $0x8] sm:$0xff]
    %v850 = vld [vmem:[#allocation12 + $0x10] sm:$0xff]
    %v851 = vld [vmem:[#allocation12 + $0x18] sm:$0xff]
    %v852 = vld [vmem:[#allocation12 + $0x20] sm:$0xff]
    %v853 = vld [vmem:[#allocation12 + $0x28] sm:$0xff]
    %v854 = vld [vmem:[#allocation12 + $0x30] sm:$0xff]
    %v855 = vld [vmem:[#allocation12 + $0x38] sm:$0xff]
    %v856 = vld [vmem:[#allocation12 + $0x40] sm:$0xff]
    %v857 = vld [vmem:[#allocation12 + $0x48] sm:$0xff]
    %v858 = vld [vmem:[#allocation12 + $0x50] sm:$0xff]
    %v859 = vld [vmem:[#allocation12 + $0x58] sm:$0xff]
    %v860 = vld [vmem:[#allocation12 + $0x60] sm:$0xff]
    %v861 = vld [vmem:[#allocation12 + $0x68] sm:$0xff]
    %v862 = vld [vmem:[#allocation12 + $0x70] sm:$0xff]
    %v863 = vld [vmem:[#allocation12 + $0x78] sm:$0xff]
    %v864 = vld [vmem:[#allocation12 + $0x80] sm:$0xff]
    %v865 = vld [vmem:[#allocation12 + $0x88] sm:$0xff]
    %v866 = vld [vmem:[#allocation12 + $0x90] sm:$0xff]
    %v867 = vld [vmem:[#allocation12 + $0x98] sm:$0xff]
    %v868 = vld [vmem:[#allocation12 + $0xa0] sm:$0xff]
    %v869 = vld [vmem:[#allocation12 + $0xa8] sm:$0xff]
    %v870 = vld [vmem:[#allocation12 + $0xb0] sm:$0xff]
    %v871 = vld [vmem:[#allocation12 + $0xb8] sm:$0xff]
    %v872 = vld [vmem:[#allocation12 + $0xc0] sm:$0xff]
    %v873 = vld [vmem:[#allocation12 + $0xc8] sm:$0xff]
    %v874 = vld [vmem:[#allocation12 + $0xd0] sm:$0xff]
    %v875 = vld [vmem:[#allocation12 + $0xd8] sm:$0xff]
    %v876 = vld [vmem:[#allocation12 + $0xe0] sm:$0xff]
    %v877 = vld [vmem:[#allocation12 + $0xe8] sm:$0xff]
    %v878 = vld [vmem:[#allocation12 + $0xf0] sm:$0xff]
    %v879 = vld [vmem:[#allocation12 + $0xf8] sm:$0xff]
    %v880 = vld [vmem:[#allocation12 + $0x100] sm:$0xff]
    %v881 = vld [vmem:[#allocation12 + $0x108] sm:$0xff]
    %v882 = vld [vmem:[#allocation12 + $0x110] sm:$0xff]
    %v883 = vld [vmem:[#allocation12 + $0x118] sm:$0xff]
    %v884 = vld [vmem:[#allocation12 + $0x120] sm:$0xff]
    %v885 = vld [vmem:[#allocation12 + $0x128] sm:$0xff]
    %v886 = vld [vmem:[#allocation12 + $0x130] sm:$0xff]
    %v887 = vld [vmem:[#allocation12 + $0x138] sm:$0xff]
    %v888 = vld [vmem:[#allocation12 + $0x140] sm:$0xff]
    %v889 = vld [vmem:[#allocation12 + $0x148] sm:$0xff]
    %v890 = vld [vmem:[#allocation12 + $0x150] sm:$0xff]
    %v891 = vld [vmem:[#allocation12 + $0x158] sm:$0xff]
    %v892 = vld [vmem:[#allocation12 + $0x160] sm:$0xff]
    %v893 = vld [vmem:[#allocation12 + $0x168] sm:$0xff]
    %v894 = vld [vmem:[#allocation12 + $0x170] sm:$0xff]
    %v895 = vld [vmem:[#allocation12 + $0x178] sm:$0xff]
    %896 = vmatprep.subr.mxu0 %v849
    %897 = vmatpush1.msra.mxu0 %v848
    %898 = vmatprep.subr.mxu0 %v852
    %899 = vmatpush1.msra.mxu0 %v851
    %900 = vmatprep.subr.mxu0 %v855
    %901 = vmatpush1.msra.mxu0 %v854
    %902 = vmatprep.subr.mxu0 %v858
    %903 = vmatpush1.msra.mxu0 %v857
    %904 = vmatprep.subr.mxu0 %v861
    %905 = vmatpush1.msra.mxu0 %v860
    %906 = vmatprep.subr.mxu0 %v864
    %907 = vmatpush1.msra.mxu0 %v863
    %908 = vmatprep.subr.mxu0 %v867
    %909 = vmatpush1.msra.mxu0 %v866
    %910 = vmatprep.subr.mxu0 %v870
    %911 = vmatpush1.msra.mxu0 %v869
    %912 = vmatprep.subr.mxu0 %v873
    %913 = vmatpush1.msra.mxu0 %v872
    %914 = vmatprep.subr.mxu0 %v876
    %915 = vmatpush1.msra.mxu0 %v875
    %916 = vmatprep.subr.mxu0 %v879
    %917 = vmatpush1.msra.mxu0 %v878
    %918 = vmatprep.subr.mxu0 %v882
    %919 = vmatpush1.msra.mxu0 %v881
    %920 = vmatprep.subr.mxu0 %v885
    %921 = vmatpush1.msra.mxu0 %v884
    %922 = vmatprep.subr.mxu0 %v888
    %923 = vmatpush1.msra.mxu0 %v887
    %924 = vmatprep.subr.mxu0 %v891
    %925 = vmatpush1.msra.mxu0 %v890
    %926 = vmatprep.subr.mxu0 %v894
    %927 = vmatpush1.msra.mxu0 %v893
    %928 = vmatprep.subr.mxu0 0.0
    %929 = vmatpush1.msra.mxu0 0.0
    %930 = vmatprep.subr.mxu0 0.0
    %931 = vmatpush1.msra.mxu0 0.0
    %932 = vmatprep.subr.mxu0 0.0
    %933 = vmatpush1.msra.mxu0 0.0
    %934 = vmatprep.subr.mxu0 0.0
    %935 = vmatpush1.msra.mxu0 0.0
    %936 = vmatprep.subr.mxu0 0.0
    %937 = vmatpush1.msra.mxu0 0.0
    %938 = vmatprep.subr.mxu0 0.0
    %939 = vmatpush1.msra.mxu0 0.0
    %940 = vmatprep.subr.mxu0 0.0
    %941 = vmatpush1.msra.mxu0 0.0
    %942 = vmatprep.subr.mxu0 0.0
    %943 = vmatpush1.msra.mxu0 0.0
    %944 = vmatprep.subr.mxu0 0.0
    %945 = vmatpush1.msra.mxu0 0.0
    %946 = vmatprep.subr.mxu0 0.0
    %947 = vmatpush1.msra.mxu0 0.0
    %948 = vmatprep.subr.mxu0 0.0
    %949 = vmatpush1.msra.mxu0 0.0
    %950 = vmatprep.subr.mxu0 0.0
    %951 = vmatpush1.msra.mxu0 0.0
    %952 = vmatprep.subr.mxu0 0.0
    %953 = vmatpush1.msra.mxu0 0.0
    %954 = vmatprep.subr.mxu0 0.0
    %955 = vmatpush1.msra.mxu0 0.0
    %956 = vmatprep.subr.mxu0 0.0
    %957 = vmatpush1.msra.mxu0 0.0
    %958 = vmatprep.subr.mxu0 0.0
    %959 = vmatpush1.msra.mxu0 0.0
    %960 = vmatprep.mubr.f32.mxu0 0.0
    %961 = vmatmul.mubr.f32.gmra.mrb[0].mxu0 %v841
    %v962 = vpop.f32.mrb[0].mxu0
    %v963 = vadd.f32 0.0, %v962
    %v964 = vpop.f32.mrb[0].mxu0
    %v965 = vadd.f32 0.0, %v964
    %966 = vdwg.mxu0
    %967 = vmatprep.subr.mxu0 0.0
    %968 = vmatpush1.msra.mxu0 %v850
    %969 = vmatprep.subr.mxu0 0.0
    %970 = vmatpush1.msra.mxu0 %v853
    %971 = vmatprep.subr.mxu0 0.0
    %972 = vmatpush1.msra.mxu0 %v856
    %973 = vmatprep.subr.mxu0 0.0
    %974 = vmatpush1.msra.mxu0 %v859
    %975 = vmatprep.subr.mxu0 0.0
    %976 = vmatpush1.msra.mxu0 %v862
    %977 = vmatprep.subr.mxu0 0.0
    %978 = vmatpush1.msra.mxu0 %v865
    %979 = vmatprep.subr.mxu0 0.0
    %980 = vmatpush1.msra.mxu0 %v868
    %981 = vmatprep.subr.mxu0 0.0
    %982 = vmatpush1.msra.mxu0 %v871
    %983 = vmatprep.subr.mxu0 0.0
    %984 = vmatpush1.msra.mxu0 %v874
    %985 = vmatprep.subr.mxu0 0.0
    %986 = vmatpush1.msra.mxu0 %v877
    %987 = vmatprep.subr.mxu0 0.0
    %988 = vmatpush1.msra.mxu0 %v880
    %989 = vmatprep.subr.mxu0 0.0
    %990 = vmatpush1.msra.mxu0 %v883
    %991 = vmatprep.subr.mxu0 0.0
    %992 = vmatpush1.msra.mxu0 %v886
    %993 = vmatprep.subr.mxu0 0.0
    %994 = vmatpush1.msra.mxu0 %v889
    %995 = vmatprep.subr.mxu0 0.0
    %996 = vmatpush1.msra.mxu0 %v892
    %997 = vmatprep.subr.mxu0 0.0
    %998 = vmatpush1.msra.mxu0 %v895
    %999 = vmatprep.subr.mxu0 0.0
    %1000 = vmatpush1.msra.mxu0 0.0
    %1001 = vmatprep.subr.mxu0 0.0
    %1002 = vmatpush1.msra.mxu0 0.0
    %1003 = vmatprep.subr.mxu0 0.0
    %1004 = vmatpush1.msra.mxu0 0.0
    %1005 = vmatprep.subr.mxu0 0.0
    %1006 = vmatpush1.msra.mxu0 0.0
    %1007 = vmatprep.subr.mxu0 0.0
    %1008 = vmatpush1.msra.mxu0 0.0
    %1009 = vmatprep.subr.mxu0 0.0
    %1010 = vmatpush1.msra.mxu0 0.0
    %1011 = vmatprep.subr.mxu0 0.0
    %1012 = vmatpush1.msra.mxu0 0.0
    %1013 = vmatprep.subr.mxu0 0.0
    %1014 = vmatpush1.msra.mxu0 0.0
    %1015 = vmatprep.subr.mxu0 0.0
    %1016 = vmatpush1.msra.mxu0 0.0
    %1017 = vmatprep.subr.mxu0 0.0
    %1018 = vmatpush1.msra.mxu0 0.0
    %1019 = vmatprep.subr.mxu0 0.0
    %1020 = vmatpush1.msra.mxu0 0.0
    %1021 = vmatprep.subr.mxu0 0.0
    %1022 = vmatpush1.msra.mxu0 0.0
    %1023 = vmatprep.subr.mxu0 0.0
    %1024 = vmatpush1.msra.mxu0 0.0
    %1025 = vmatprep.subr.mxu0 0.0
    %1026 = vmatpush1.msra.mxu0 0.0
    %1027 = vmatprep.subr.mxu0 0.0
    %1028 = vmatpush1.msra.mxu0 0.0
    %1029 = vmatprep.subr.mxu0 0.0
    %1030 = vmatpush1.msra.mxu0 0.0
    %1031 = vmatprep.mubr.f32.mxu0 0.0
    %1032 = vmatmul.mubr.f32.gmra.mrb[0].mxu0 %v841
    %v1033 = vpop.f32.mrb[0].mxu0
    %v1034 = vadd.f32 0.0, %v1033
    %v1035 = vpop.f32.mrb[0].mxu0
    %1036 = vdwg.mxu0
    %v1037 = vadd.f32 %v845, %v963
    %v1038 = vxor.u32 %v1037, 2147483648
    %v1039 = vmul.f32 %v1038, 1.442695
    %v1040 = vpow.pop %v1039
    %v1041 = vadd.f32 %v1040, 1.0
    %v1042 = vrcp.pop %v1041
    %v1043 = vmul.f32 1.0, %v1042
    %v1044 = vadd.f32 %v846, %v965
    %v1045 = vxor.u32 %v1044, 2147483648
    %v1046 = vmul.f32 %v1045, 1.442695
    %v1047 = vpow.pop %v1046
    %v1048 = vadd.f32 %v1047, 1.0
    %v1049 = vrcp.pop %v1048
    %v1050 = vmul.f32 1.0, %v1049
    %v1051 = vadd.f32 %v1034, %v409
    %v1052 = vmul.f32 %v1043, %v1051
    %v1053 = vadd.f32 %v847, %v1052
    %v1054 = vtanh.pop %v1053
    %v1055 = vsub.f32 1.0, %v1050
    %v1056 = vmul.f32 %v1055, %v1054
    %v1057 = vmul.f32 %v1050, %v841
    %v1058 = vadd.f32 %v1056, %v1057
    %s1059 = scalar_lea.vmem [#allocation15], 16
    %1060 = vst [vmem:[%s1059] sm:$0xff] %v1058
    %s1061 = scalar_lea.vmem [#allocation3], 72
    %v1062 = vld [vmem:[%s1061] sm:$0xff]
    %v1063 = vld [vmem:[%s1061 + $0x8] sm:$0xff]
    %v1064 = vld [vmem:[%s1061 + $0x10] sm:$0xff]
    %v1065 = vld [vmem:[#allocation12] sm:$0xff]
    %v1066 = vld [vmem:[#allocation12 + $0x8] sm:$0xff]
    %v1067 = vld [vmem:[#allocation12 + $0x10] sm:$0xff]
    %v1068 = vld [vmem:[#allocation12 + $0x18] sm:$0xff]
    %v1069 = vld [vmem:[#allocation12 + $0x20] sm:$0xff]
    %v1070 = vld [vmem:[#allocation12 + $0x28] sm:$0xff]
    %v1071 = vld [vmem:[#allocation12 + $0x30] sm:$0xff]
    %v1072 = vld [vmem:[#allocation12 + $0x38] sm:$0xff]
    %v1073 = vld [vmem:[#allocation12 + $0x40] sm:$0xff]
    %v1074 = vld [vmem:[#allocation12 + $0x48] sm:$0xff]
    %v1075 = vld [vmem:[#allocation12 + $0x50] sm:$0xff]
    %v1076 = vld [vmem:[#allocation12 + $0x58] sm:$0xff]
    %v1077 = vld [vmem:[#allocation12 + $0x60] sm:$0xff]
    %v1078 = vld [vmem:[#allocation12 + $0x68] sm:$0xff]
    %v1079 = vld [vmem:[#allocation12 + $0x70] sm:$0xff]
    %v1080 = vld [vmem:[#allocation12 + $0x78] sm:$0xff]
    %v1081 = vld [vmem:[#allocation12 + $0x80] sm:$0xff]
    %v1082 = vld [vmem:[#allocation12 + $0x88] sm:$0xff]
    %v1083 = vld [vmem:[#allocation12 + $0x90] sm:$0xff]
    %v1084 = vld [vmem:[#allocation12 + $0x98] sm:$0xff]
    %v1085 = vld [vmem:[#allocation12 + $0xa0] sm:$0xff]
    %v1086 = vld [vmem:[#allocation12 + $0xa8] sm:$0xff]
    %v1087 = vld [vmem:[#allocation12 + $0xb0] sm:$0xff]
    %v1088 = vld [vmem:[#allocation12 + $0xb8] sm:$0xff]
    %v1089 = vld [vmem:[#allocation12 + $0xc0] sm:$0xff]
    %v1090 = vld [vmem:[#allocation12 + $0xc8] sm:$0xff]
    %v1091 = vld [vmem:[#allocation12 + $0xd0] sm:$0xff]
    %v1092 = vld [vmem:[#allocation12 + $0xd8] sm:$0xff]
    %v1093 = vld [vmem:[#allocation12 + $0xe0] sm:$0xff]
    %v1094 = vld [vmem:[#allocation12 + $0xe8] sm:$0xff]
    %v1095 = vld [vmem:[#allocation12 + $0xf0] sm:$0xff]
    %v1096 = vld [vmem:[#allocation12 + $0xf8] sm:$0xff]
    %v1097 = vld [vmem:[#allocation12 + $0x100] sm:$0xff]
    %v1098 = vld [vmem:[#allocation12 + $0x108] sm:$0xff]
    %v1099 = vld [vmem:[#allocation12 + $0x110] sm:$0xff]
    %v1100 = vld [vmem:[#allocation12 + $0x118] sm:$0xff]
    %v1101 = vld [vmem:[#allocation12 + $0x120] sm:$0xff]
    %v1102 = vld [vmem:[#allocation12 + $0x128] sm:$0xff]
    %v1103 = vld [vmem:[#allocation12 + $0x130] sm:$0xff]
    %v1104 = vld [vmem:[#allocation12 + $0x138] sm:$0xff]
    %v1105 = vld [vmem:[#allocation12 + $0x140] sm:$0xff]
    %v1106 = vld [vmem:[#allocation12 + $0x148] sm:$0xff]
    %v1107 = vld [vmem:[#allocation12 + $0x150] sm:$0xff]
    %v1108 = vld [vmem:[#allocation12 + $0x158] sm:$0xff]
    %v1109 = vld [vmem:[#allocation12 + $0x160] sm:$0xff]
    %v1110 = vld [vmem:[#allocation12 + $0x168] sm:$0xff]
    %v1111 = vld [vmem:[#allocation12 + $0x170] sm:$0xff]
    %v1112 = vld [vmem:[#allocation12 + $0x178] sm:$0xff]
    %1113 = vmatprep.subr.mxu0 %v1066
    %1114 = vmatpush1.msra.mxu0 %v1065
    %1115 = vmatprep.subr.mxu0 %v1069
    %1116 = vmatpush1.msra.mxu0 %v1068
    %1117 = vmatprep.subr.mxu0 %v1072
    %1118 = vmatpush1.msra.mxu0 %v1071
    %1119 = vmatprep.subr.mxu0 %v1075
    %1120 = vmatpush1.msra.mxu0 %v1074
    %1121 = vmatprep.subr.mxu0 %v1078
    %1122 = vmatpush1.msra.mxu0 %v1077
    %1123 = vmatprep.subr.mxu0 %v1081
    %1124 = vmatpush1.msra.mxu0 %v1080
    %1125 = vmatprep.subr.mxu0 %v1084
    %1126 = vmatpush1.msra.mxu0 %v1083
    %1127 = vmatprep.subr.mxu0 %v1087
    %1128 = vmatpush1.msra.mxu0 %v1086
    %1129 = vmatprep.subr.mxu0 %v1090
    %1130 = vmatpush1.msra.mxu0 %v1089
    %1131 = vmatprep.subr.mxu0 %v1093
    %1132 = vmatpush1.msra.mxu0 %v1092
    %1133 = vmatprep.subr.mxu0 %v1096
    %1134 = vmatpush1.msra.mxu0 %v1095
    %1135 = vmatprep.subr.mxu0 %v1099
    %1136 = vmatpush1.msra.mxu0 %v1098
    %1137 = vmatprep.subr.mxu0 %v1102
    %1138 = vmatpush1.msra.mxu0 %v1101
    %1139 = vmatprep.subr.mxu0 %v1105
    %1140 = vmatpush1.msra.mxu0 %v1104
    %1141 = vmatprep.subr.mxu0 %v1108
    %1142 = vmatpush1.msra.mxu0 %v1107
    %1143 = vmatprep.subr.mxu0 %v1111
    %1144 = vmatpush1.msra.mxu0 %v1110
    %1145 = vmatprep.subr.mxu0 0.0
    %1146 = vmatpush1.msra.mxu0 0.0
    %1147 = vmatprep.subr.mxu0 0.0
    %1148 = vmatpush1.msra.mxu0 0.0
    %1149 = vmatprep.subr.mxu0 0.0
    %1150 = vmatpush1.msra.mxu0 0.0
    %1151 = vmatprep.subr.mxu0 0.0
    %1152 = vmatpush1.msra.mxu0 0.0
    %1153 = vmatprep.subr.mxu0 0.0
    %1154 = vmatpush1.msra.mxu0 0.0
    %1155 = vmatprep.subr.mxu0 0.0
    %1156 = vmatpush1.msra.mxu0 0.0
    %1157 = vmatprep.subr.mxu0 0.0
    %1158 = vmatpush1.msra.mxu0 0.0
    %1159 = vmatprep.subr.mxu0 0.0
    %1160 = vmatpush1.msra.mxu0 0.0
    %1161 = vmatprep.subr.mxu0 0.0
    %1162 = vmatpush1.msra.mxu0 0.0
    %1163 = vmatprep.subr.mxu0 0.0
    %1164 = vmatpush1.msra.mxu0 0.0
    %1165 = vmatprep.subr.mxu0 0.0
    %1166 = vmatpush1.msra.mxu0 0.0
    %1167 = vmatprep.subr.mxu0 0.0
    %1168 = vmatpush1.msra.mxu0 0.0
    %1169 = vmatprep.subr.mxu0 0.0
    %1170 = vmatpush1.msra.mxu0 0.0
    %1171 = vmatprep.subr.mxu0 0.0
    %1172 = vmatpush1.msra.mxu0 0.0
    %1173 = vmatprep.subr.mxu0 0.0
    %1174 = vmatpush1.msra.mxu0 0.0
    %1175 = vmatprep.subr.mxu0 0.0
    %1176 = vmatpush1.msra.mxu0 0.0
    %1177 = vmatprep.mubr.f32.mxu0 0.0
    %1178 = vmatmul.mubr.f32.gmra.mrb[0].mxu0 %v1058
    %v1179 = vpop.f32.mrb[0].mxu0
    %v1180 = vadd.f32 0.0, %v1179
    %v1181 = vpop.f32.mrb[0].mxu0
    %v1182 = vadd.f32 0.0, %v1181
    %1183 = vdwg.mxu0
    %1184 = vmatprep.subr.mxu0 0.0
    %1185 = vmatpush1.msra.mxu0 %v1067
    %1186 = vmatprep.subr.mxu0 0.0
    %1187 = vmatpush1.msra.mxu0 %v1070
    %1188 = vmatprep.subr.mxu0 0.0
    %1189 = vmatpush1.msra.mxu0 %v1073
    %1190 = vmatprep.subr.mxu0 0.0
    %1191 = vmatpush1.msra.mxu0 %v1076
    %1192 = vmatprep.subr.mxu0 0.0
    %1193 = vmatpush1.msra.mxu0 %v1079
    %1194 = vmatprep.subr.mxu0 0.0
    %1195 = vmatpush1.msra.mxu0 %v1082
    %1196 = vmatprep.subr.mxu0 0.0
    %1197 = vmatpush1.msra.mxu0 %v1085
    %1198 = vmatprep.subr.mxu0 0.0
    %1199 = vmatpush1.msra.mxu0 %v1088
    %1200 = vmatprep.subr.mxu0 0.0
    %1201 = vmatpush1.msra.mxu0 %v1091
    %1202 = vmatprep.subr.mxu0 0.0
    %1203 = vmatpush1.msra.mxu0 %v1094
    %1204 = vmatprep.subr.mxu0 0.0
    %1205 = vmatpush1.msra.mxu0 %v1097
    %1206 = vmatprep.subr.mxu0 0.0
    %1207 = vmatpush1.msra.mxu0 %v1100
    %1208 = vmatprep.subr.mxu0 0.0
    %1209 = vmatpush1.msra.mxu0 %v1103
    %1210 = vmatprep.subr.mxu0 0.0
    %1211 = vmatpush1.msra.mxu0 %v1106
    %1212 = vmatprep.subr.mxu0 0.0
    %1213 = vmatpush1.msra.mxu0 %v1109
    %1214 = vmatprep.subr.mxu0 0.0
    %1215 = vmatpush1.msra.mxu0 %v1112
    %1216 = vmatprep.subr.mxu0 0.0
    %1217 = vmatpush1.msra.mxu0 0.0
    %1218 = vmatprep.subr.mxu0 0.0
    %1219 = vmatpush1.msra.mxu0 0.0
    %1220 = vmatprep.subr.mxu0 0.0
    %1221 = vmatpush1.msra.mxu0 0.0
    %1222 = vmatprep.subr.mxu0 0.0
    %1223 = vmatpush1.msra.mxu0 0.0
    %1224 = vmatprep.subr.mxu0 0.0
    %1225 = vmatpush1.msra.mxu0 0.0
    %1226 = vmatprep.subr.mxu0 0.0
    %1227 = vmatpush1.msra.mxu0 0.0
    %1228 = vmatprep.subr.mxu0 0.0
    %1229 = vmatpush1.msra.mxu0 0.0
    %1230 = vmatprep.subr.mxu0 0.0
    %1231 = vmatpush1.msra.mxu0 0.0
    %1232 = vmatprep.subr.mxu0 0.0
    %1233 = vmatpush1.msra.mxu0 0.0
    %1234 = vmatprep.subr.mxu0 0.0
    %1235 = vmatpush1.msra.mxu0 0.0
    %1236 = vmatprep.subr.mxu0 0.0
    %1237 = vmatpush1.msra.mxu0 0.0
    %1238 = vmatprep.subr.mxu0 0.0
    %1239 = vmatpush1.msra.mxu0 0.0
    %1240 = vmatprep.subr.mxu0 0.0
    %1241 = vmatpush1.msra.mxu0 0.0
    %1242 = vmatprep.subr.mxu0 0.0
    %1243 = vmatpush1.msra.mxu0 0.0
    %1244 = vmatprep.subr.mxu0 0.0
    %1245 = vmatpush1.msra.mxu0 0.0
    %1246 = vmatprep.subr.mxu0 0.0
    %1247 = vmatpush1.msra.mxu0 0.0
    %1248 = vmatprep.mubr.f32.mxu0 0.0
    %1249 = vmatmul.mubr.f32.gmra.mrb[0].mxu0 %v1058
    %v1250 = vpop.f32.mrb[0].mxu0
    %v1251 = vadd.f32 0.0, %v1250
    %v1252 = vpop.f32.mrb[0].mxu0
    %1253 = vdwg.mxu0
    %v1254 = vadd.f32 %v1062, %v1180
    %v1255 = vxor.u32 %v1254, 2147483648
    %v1256 = vmul.f32 %v1255, 1.442695
    %v1257 = vpow.pop %v1256
    %v1258 = vadd.f32 %v1257, 1.0
    %v1259 = vrcp.pop %v1258
    %v1260 = vmul.f32 1.0, %v1259
    %v1261 = vadd.f32 %v1063, %v1182
    %v1262 = vxor.u32 %v1261, 2147483648
    %v1263 = vmul.f32 %v1262, 1.442695
    %v1264 = vpow.pop %v1263
    %v1265 = vadd.f32 %v1264, 1.0
    %v1266 = vrcp.pop %v1265
    %v1267 = vmul.f32 1.0, %v1266
    %v1268 = vadd.f32 %v1251, %v409
    %v1269 = vmul.f32 %v1260, %v1268
    %v1270 = vadd.f32 %v1064, %v1269
    %v1271 = vtanh.pop %v1270
    %v1272 = vsub.f32 1.0, %v1267
    %v1273 = vmul.f32 %v1272, %v1271
    %v1274 = vmul.f32 %v1267, %v1058
    %v1275 = vadd.f32 %v1273, %v1274
    %s1276 = scalar_lea.vmem [#allocation15], 24
    %1277 = vst [vmem:[%s1276] sm:$0xff] %v1275
    %s1278 = scalar_lea.vmem [#allocation3], 96
    %v1279 = vld [vmem:[%s1278] sm:$0xff]
    %v1280 = vld [vmem:[%s1278 + $0x8] sm:$0xff]
    %v1281 = vld [vmem:[%s1278 + $0x10] sm:$0xff]
    %v1282 = vld [vmem:[#allocation12] sm:$0xff]
    %v1283 = vld [vmem:[#allocation12 + $0x8] sm:$0xff]
    %v1284 = vld [vmem:[#allocation12 + $0x10] sm:$0xff]
    %v1285 = vld [vmem:[#allocation12 + $0x18] sm:$0xff]
    %v1286 = vld [vmem:[#allocation12 + $0x20] sm:$0xff]
    %v1287 = vld [vmem:[#allocation12 + $0x28] sm:$0xff]
    %v1288 = vld [vmem:[#allocation12 + $0x30] sm:$0xff]
    %v1289 = vld [vmem:[#allocation12 + $0x38] sm:$0xff]
    %v1290 = vld [vmem:[#allocation12 + $0x40] sm:$0xff]
    %v1291 = vld [vmem:[#allocation12 + $0x48] sm:$0xff]
    %v1292 = vld [vmem:[#allocation12 + $0x50] sm:$0xff]
    %v1293 = vld [vmem:[#allocation12 + $0x58] sm:$0xff]
    %v1294 = vld [vmem:[#allocation12 + $0x60] sm:$0xff]
    %v1295 = vld [vmem:[#allocation12 + $0x68] sm:$0xff]
    %v1296 = vld [vmem:[#allocation12 + $0x70] sm:$0xff]
    %v1297 = vld [vmem:[#allocation12 + $0x78] sm:$0xff]
    %v1298 = vld [vmem:[#allocation12 + $0x80] sm:$0xff]
    %v1299 = vld [vmem:[#allocation12 + $0x88] sm:$0xff]
    %v1300 = vld [vmem:[#allocation12 + $0x90] sm:$0xff]
    %v1301 = vld [vmem:[#allocation12 + $0x98] sm:$0xff]
    %v1302 = vld [vmem:[#allocation12 + $0xa0] sm:$0xff]
    %v1303 = vld [vmem:[#allocation12 + $0xa8] sm:$0xff]
    %v1304 = vld [vmem:[#allocation12 + $0xb0] sm:$0xff]
    %v1305 = vld [vmem:[#allocation12 + $0xb8] sm:$0xff]
    %v1306 = vld [vmem:[#allocation12 + $0xc0] sm:$0xff]
    %v1307 = vld [vmem:[#allocation12 + $0xc8] sm:$0xff]
    %v1308 = vld [vmem:[#allocation12 + $0xd0] sm:$0xff]
    %v1309 = vld [vmem:[#allocation12 + $0xd8] sm:$0xff]
    %v1310 = vld [vmem:[#allocation12 + $0xe0] sm:$0xff]
    %v1311 = vld [vmem:[#allocation12 + $0xe8] sm:$0xff]
    %v1312 = vld [vmem:[#allocation12 + $0xf0] sm:$0xff]
    %v1313 = vld [vmem:[#allocation12 + $0xf8] sm:$0xff]
    %v1314 = vld [vmem:[#allocation12 + $0x100] sm:$0xff]
    %v1315 = vld [vmem:[#allocation12 + $0x108] sm:$0xff]
    %v1316 = vld [vmem:[#allocation12 + $0x110] sm:$0xff]
    %v1317 = vld [vmem:[#allocation12 + $0x118] sm:$0xff]
    %v1318 = vld [vmem:[#allocation12 + $0x120] sm:$0xff]
    %v1319 = vld [vmem:[#allocation12 + $0x128] sm:$0xff]
    %v1320 = vld [vmem:[#allocation12 + $0x130] sm:$0xff]
    %v1321 = vld [vmem:[#allocation12 + $0x138] sm:$0xff]
    %v1322 = vld [vmem:[#allocation12 + $0x140] sm:$0xff]
    %v1323 = vld [vmem:[#allocation12 + $0x148] sm:$0xff]
    %v1324 = vld [vmem:[#allocation12 + $0x150] sm:$0xff]
    %v1325 = vld [vmem:[#allocation12 + $0x158] sm:$0xff]
    %v1326 = vld [vmem:[#allocation12 + $0x160] sm:$0xff]
    %v1327 = vld [vmem:[#allocation12 + $0x168] sm:$0xff]
    %v1328 = vld [vmem:[#allocation12 + $0x170] sm:$0xff]
    %v1329 = vld [vmem:[#allocation12 + $0x178] sm:$0xff]
    %1330 = vmatprep.subr.mxu0 %v1283
    %1331 = vmatpush1.msra.mxu0 %v1282
    %1332 = vmatprep.subr.mxu0 %v1286
    %1333 = vmatpush1.msra.mxu0 %v1285
    %1334 = vmatprep.subr.mxu0 %v1289
    %1335 = vmatpush1.msra.mxu0 %v1288
    %1336 = vmatprep.subr.mxu0 %v1292
    %1337 = vmatpush1.msra.mxu0 %v1291
    %1338 = vmatprep.subr.mxu0 %v1295
    %1339 = vmatpush1.msra.mxu0 %v1294
    %1340 = vmatprep.subr.mxu0 %v1298
    %1341 = vmatpush1.msra.mxu0 %v1297
    %1342 = vmatprep.subr.mxu0 %v1301
    %1343 = vmatpush1.msra.mxu0 %v1300
    %1344 = vmatprep.subr.mxu0 %v1304
    %1345 = vmatpush1.msra.mxu0 %v1303
    %1346 = vmatprep.subr.mxu0 %v1307
    %1347 = vmatpush1.msra.mxu0 %v1306
    %1348 = vmatprep.subr.mxu0 %v1310
    %1349 = vmatpush1.msra.mxu0 %v1309
    %1350 = vmatprep.subr.mxu0 %v1313
    %1351 = vmatpush1.msra.mxu0 %v1312
    %1352 = vmatprep.subr.mxu0 %v1316
    %1353 = vmatpush1.msra.mxu0 %v1315
    %1354 = vmatprep.subr.mxu0 %v1319
    %1355 = vmatpush1.msra.mxu0 %v1318
    %1356 = vmatprep.subr.mxu0 %v1322
    %1357 = vmatpush1.msra.mxu0 %v1321
    %1358 = vmatprep.subr.mxu0 %v1325
    %1359 = vmatpush1.msra.mxu0 %v1324
    %1360 = vmatprep.subr.mxu0 %v1328
    %1361 = vmatpush1.msra.mxu0 %v1327
    %1362 = vmatprep.subr.mxu0 0.0
    %1363 = vmatpush1.msra.mxu0 0.0
    %1364 = vmatprep.subr.mxu0 0.0
    %1365 = vmatpush1.msra.mxu0 0.0
    %1366 = vmatprep.subr.mxu0 0.0
    %1367 = vmatpush1.msra.mxu0 0.0
    %1368 = vmatprep.subr.mxu0 0.0
    %1369 = vmatpush1.msra.mxu0 0.0
    %1370 = vmatprep.subr.mxu0 0.0
    %1371 = vmatpush1.msra.mxu0 0.0
    %1372 = vmatprep.subr.mxu0 0.0
    %1373 = vmatpush1.msra.mxu0 0.0
    %1374 = vmatprep.subr.mxu0 0.0
    %1375 = vmatpush1.msra.mxu0 0.0
    %1376 = vmatprep.subr.mxu0 0.0
    %1377 = vmatpush1.msra.mxu0 0.0
    %1378 = vmatprep.subr.mxu0 0.0
    %1379 = vmatpush1.msra.mxu0 0.0
    %1380 = vmatprep.subr.mxu0 0.0
    %1381 = vmatpush1.msra.mxu0 0.0
    %1382 = vmatprep.subr.mxu0 0.0
    %1383 = vmatpush1.msra.mxu0 0.0
    %1384 = vmatprep.subr.mxu0 0.0
    %1385 = vmatpush1.msra.mxu0 0.0
    %1386 = vmatprep.subr.mxu0 0.0
    %1387 = vmatpush1.msra.mxu0 0.0
    %1388 = vmatprep.subr.mxu0 0.0
    %1389 = vmatpush1.msra.mxu0 0.0
    %1390 = vmatprep.subr.mxu0 0.0
    %1391 = vmatpush1.msra.mxu0 0.0
    %1392 = vmatprep.subr.mxu0 0.0
    %1393 = vmatpush1.msra.mxu0 0.0
    %1394 = vmatprep.mubr.f32.mxu0 0.0
    %1395 = vmatmul.mubr.f32.gmra.mrb[0].mxu0 %v1275
    %v1396 = vpop.f32.mrb[0].mxu0
    %v1397 = vadd.f32 0.0, %v1396
    %v1398 = vpop.f32.mrb[0].mxu0
    %v1399 = vadd.f32 0.0, %v1398
    %1400 = vdwg.mxu0
    %1401 = vmatprep.subr.mxu0 0.0
    %1402 = vmatpush1.msra.mxu0 %v1284
    %1403 = vmatprep.subr.mxu0 0.0
    %1404 = vmatpush1.msra.mxu0 %v1287
    %1405 = vmatprep.subr.mxu0 0.0
    %1406 = vmatpush1.msra.mxu0 %v1290
    %1407 = vmatprep.subr.mxu0 0.0
    %1408 = vmatpush1.msra.mxu0 %v1293
    %1409 = vmatprep.subr.mxu0 0.0
    %1410 = vmatpush1.msra.mxu0 %v1296
    %1411 = vmatprep.subr.mxu0 0.0
    %1412 = vmatpush1.msra.mxu0 %v1299
    %1413 = vmatprep.subr.mxu0 0.0
    %1414 = vmatpush1.msra.mxu0 %v1302
    %1415 = vmatprep.subr.mxu0 0.0
    %1416 = vmatpush1.msra.mxu0 %v1305
    %1417 = vmatprep.subr.mxu0 0.0
    %1418 = vmatpush1.msra.mxu0 %v1308
    %1419 = vmatprep.subr.mxu0 0.0
    %1420 = vmatpush1.msra.mxu0 %v1311
    %1421 = vmatprep.subr.mxu0 0.0
    %1422 = vmatpush1.msra.mxu0 %v1314
    %1423 = vmatprep.subr.mxu0 0.0
    %1424 = vmatpush1.msra.mxu0 %v1317
    %1425 = vmatprep.subr.mxu0 0.0
    %1426 = vmatpush1.msra.mxu0 %v1320
    %1427 = vmatprep.subr.mxu0 0.0
    %1428 = vmatpush1.msra.mxu0 %v1323
    %1429 = vmatprep.subr.mxu0 0.0
    %1430 = vmatpush1.msra.mxu0 %v1326
    %1431 = vmatprep.subr.mxu0 0.0
    %1432 = vmatpush1.msra.mxu0 %v1329
    %1433 = vmatprep.subr.mxu0 0.0
    %1434 = vmatpush1.msra.mxu0 0.0
    %1435 = vmatprep.subr.mxu0 0.0
    %1436 = vmatpush1.msra.mxu0 0.0
    %1437 = vmatprep.subr.mxu0 0.0
    %1438 = vmatpush1.msra.mxu0 0.0
    %1439 = vmatprep.subr.mxu0 0.0
    %1440 = vmatpush1.msra.mxu0 0.0
    %1441 = vmatprep.subr.mxu0 0.0
    %1442 = vmatpush1.msra.mxu0 0.0
    %1443 = vmatprep.subr.mxu0 0.0
    %1444 = vmatpush1.msra.mxu0 0.0
    %1445 = vmatprep.subr.mxu0 0.0
    %1446 = vmatpush1.msra.mxu0 0.0
    %1447 = vmatprep.subr.mxu0 0.0
    %1448 = vmatpush1.msra.mxu0 0.0
    %1449 = vmatprep.subr.mxu0 0.0
    %1450 = vmatpush1.msra.mxu0 0.0
    %1451 = vmatprep.subr.mxu0 0.0
    %1452 = vmatpush1.msra.mxu0 0.0
    %1453 = vmatprep.subr.mxu0 0.0
    %1454 = vmatpush1.msra.mxu0 0.0
    %1455 = vmatprep.subr.mxu0 0.0
    %1456 = vmatpush1.msra.mxu0 0.0
    %1457 = vmatprep.subr.mxu0 0.0
    %1458 = vmatpush1.msra.mxu0 0.0
    %1459 = vmatprep.subr.mxu0 0.0
    %1460 = vmatpush1.msra.mxu0 0.0
    %1461 = vmatprep.subr.mxu0 0.0
    %1462 = vmatpush1.msra.mxu0 0.0
    %1463 = vmatprep.subr.mxu0 0.0
    %1464 = vmatpush1.msra.mxu0 0.0
    %1465 = vmatprep.mubr.f32.mxu0 0.0
    %1466 = vmatmul.mubr.f32.gmra.mrb[0].mxu0 %v1275
    %v1467 = vpop.f32.mrb[0].mxu0
    %v1468 = vadd.f32 0.0, %v1467
    %v1469 = vpop.f32.mrb[0].mxu0
    %1470 = vdwg.mxu0
    %v1471 = vadd.f32 %v1279, %v1397
    %v1472 = vxor.u32 %v1471, 2147483648
    %v1473 = vmul.f32 %v1472, 1.442695
    %v1474 = vpow.pop %v1473
    %v1475 = vadd.f32 %v1474, 1.0
    %v1476 = vrcp.pop %v1475
    %v1477 = vmul.f32 1.0, %v1476
    %v1478 = vadd.f32 %v1280, %v1399
    %v1479 = vxor.u32 %v1478, 2147483648
    %v1480 = vmul.f32 %v1479, 1.442695
    %v1481 = vpow.pop %v1480
    %v1482 = vadd.f32 %v1481, 1.0
    %v1483 = vrcp.pop %v1482
    %v1484 = vmul.f32 1.0, %v1483
    %v1485 = vadd.f32 %v1468, %v409
    %v1486 = vmul.f32 %v1477, %v1485
    %v1487 = vadd.f32 %v1281, %v1486
    %v1488 = vtanh.pop %v1487
    %v1489 = vsub.f32 1.0, %v1484
    %v1490 = vmul.f32 %v1489, %v1488
    %v1491 = vmul.f32 %v1484, %v1275
    %v1492 = vadd.f32 %v1490, %v1491
    %s1493 = scalar_lea.vmem [#allocation15], 32
    %1494 = vst [vmem:[%s1493] sm:$0xff] %v1492
    %s1495 = scalar_lea.vmem [#allocation3], 120
    %v1496 = vld [vmem:[%s1495] sm:$0xff]
    %v1497 = vld [vmem:[%s1495 + $0x8] sm:$0xff]
    %v1498 = vld [vmem:[%s1495 + $0x10] sm:$0xff]
    %v1499 = vld [vmem:[#allocation12] sm:$0xff]
    %v1500 = vld [vmem:[#allocation12 + $0x8] sm:$0xff]
    %v1501 = vld [vmem:[#allocation12 + $0x10] sm:$0xff]
    %v1502 = vld [vmem:[#allocation12 + $0x18] sm:$0xff]
    %v1503 = vld [vmem:[#allocation12 + $0x20] sm:$0xff]
    %v1504 = vld [vmem:[#allocation12 + $0x28] sm:$0xff]
    %v1505 = vld [vmem:[#allocation12 + $0x30] sm:$0xff]
    %v1506 = vld [vmem:[#allocation12 + $0x38] sm:$0xff]
    %v1507 = vld [vmem:[#allocation12 + $0x40] sm:$0xff]
    %v1508 = vld [vmem:[#allocation12 + $0x48] sm:$0xff]
    %v1509 = vld [vmem:[#allocation12 + $0x50] sm:$0xff]
    %v1510 = vld [vmem:[#allocation12 + $0x58] sm:$0xff]
    %v1511 = vld [vmem:[#allocation12 + $0x60] sm:$0xff]
    %v1512 = vld [vmem:[#allocation12 + $0x68] sm:$0xff]
    %v1513 = vld [vmem:[#allocation12 + $0x70] sm:$0xff]
    %v1514 = vld [vmem:[#allocation12 + $0x78] sm:$0xff]
    %v1515 = vld [vmem:[#allocation12 + $0x80] sm:$0xff]
    %v1516 = vld [vmem:[#allocation12 + $0x88] sm:$0xff]
    %v1517 = vld [vmem:[#allocation12 + $0x90] sm:$0xff]
    %v1518 = vld [vmem:[#allocation12 + $0x98] sm:$0xff]
    %v1519 = vld [vmem:[#allocation12 + $0xa0] sm:$0xff]
    %v1520 = vld [vmem:[#allocation12 + $0xa8] sm:$0xff]
    %v1521 = vld [vmem:[#allocation12 + $0xb0] sm:$0xff]
    %v1522 = vld [vmem:[#allocation12 + $0xb8] sm:$0xff]
    %v1523 = vld [vmem:[#allocation12 + $0xc0] sm:$0xff]
    %v1524 = vld [vmem:[#allocation12 + $0xc8] sm:$0xff]
    %v1525 = vld [vmem:[#allocation12 + $0xd0] sm:$0xff]
    %v1526 = vld [vmem:[#allocation12 + $0xd8] sm:$0xff]
    %v1527 = vld [vmem:[#allocation12 + $0xe0] sm:$0xff]
    %v1528 = vld [vmem:[#allocation12 + $0xe8] sm:$0xff]
    %v1529 = vld [vmem:[#allocation12 + $0xf0] sm:$0xff]
    %v1530 = vld [vmem:[#allocation12 + $0xf8] sm:$0xff]
    %v1531 = vld [vmem:[#allocation12 + $0x100] sm:$0xff]
    %v1532 = vld [vmem:[#allocation12 + $0x108] sm:$0xff]
    %v1533 = vld [vmem:[#allocation12 + $0x110] sm:$0xff]
    %v1534 = vld [vmem:[#allocation12 + $0x118] sm:$0xff]
    %v1535 = vld [vmem:[#allocation12 + $0x120] sm:$0xff]
    %v1536 = vld [vmem:[#allocation12 + $0x128] sm:$0xff]
    %v1537 = vld [vmem:[#allocation12 + $0x130] sm:$0xff]
    %v1538 = vld [vmem:[#allocation12 + $0x138] sm:$0xff]
    %v1539 = vld [vmem:[#allocation12 + $0x140] sm:$0xff]
    %v1540 = vld [vmem:[#allocation12 + $0x148] sm:$0xff]
    %v1541 = vld [vmem:[#allocation12 + $0x150] sm:$0xff]
    %v1542 = vld [vmem:[#allocation12 + $0x158] sm:$0xff]
    %v1543 = vld [vmem:[#allocation12 + $0x160] sm:$0xff]
    %v1544 = vld [vmem:[#allocation12 + $0x168] sm:$0xff]
    %v1545 = vld [vmem:[#allocation12 + $0x170] sm:$0xff]
    %v1546 = vld [vmem:[#allocation12 + $0x178] sm:$0xff]
    %1547 = vmatprep.subr.mxu0 %v1500
    %1548 = vmatpush1.msra.mxu0 %v1499
    %1549 = vmatprep.subr.mxu0 %v1503
    %1550 = vmatpush1.msra.mxu0 %v1502
    %1551 = vmatprep.subr.mxu0 %v1506
    %1552 = vmatpush1.msra.mxu0 %v1505
    %1553 = vmatprep.subr.mxu0 %v1509
    %1554 = vmatpush1.msra.mxu0 %v1508
    %1555 = vmatprep.subr.mxu0 %v1512
    %1556 = vmatpush1.msra.mxu0 %v1511
    %1557 = vmatprep.subr.mxu0 %v1515
    %1558 = vmatpush1.msra.mxu0 %v1514
    %1559 = vmatprep.subr.mxu0 %v1518
    %1560 = vmatpush1.msra.mxu0 %v1517
    %1561 = vmatprep.subr.mxu0 %v1521
    %1562 = vmatpush1.msra.mxu0 %v1520
    %1563 = vmatprep.subr.mxu0 %v1524
    %1564 = vmatpush1.msra.mxu0 %v1523
    %1565 = vmatprep.subr.mxu0 %v1527
    %1566 = vmatpush1.msra.mxu0 %v1526
    %1567 = vmatprep.subr.mxu0 %v1530
    %1568 = vmatpush1.msra.mxu0 %v1529
    %1569 = vmatprep.subr.mxu0 %v1533
    %1570 = vmatpush1.msra.mxu0 %v1532
    %1571 = vmatprep.subr.mxu0 %v1536
    %1572 = vmatpush1.msra.mxu0 %v1535
    %1573 = vmatprep.subr.mxu0 %v1539
    %1574 = vmatpush1.msra.mxu0 %v1538
    %1575 = vmatprep.subr.mxu0 %v1542
    %1576 = vmatpush1.msra.mxu0 %v1541
    %1577 = vmatprep.subr.mxu0 %v1545
    %1578 = vmatpush1.msra.mxu0 %v1544
    %1579 = vmatprep.subr.mxu0 0.0
    %1580 = vmatpush1.msra.mxu0 0.0
    %1581 = vmatprep.subr.mxu0 0.0
    %1582 = vmatpush1.msra.mxu0 0.0
    %1583 = vmatprep.subr.mxu0 0.0
    %1584 = vmatpush1.msra.mxu0 0.0
    %1585 = vmatprep.subr.mxu0 0.0
    %1586 = vmatpush1.msra.mxu0 0.0
    %1587 = vmatprep.subr.mxu0 0.0
    %1588 = vmatpush1.msra.mxu0 0.0
    %1589 = vmatprep.subr.mxu0 0.0
    %1590 = vmatpush1.msra.mxu0 0.0
    %1591 = vmatprep.subr.mxu0 0.0
    %1592 = vmatpush1.msra.mxu0 0.0
    %1593 = vmatprep.subr.mxu0 0.0
    %1594 = vmatpush1.msra.mxu0 0.0
    %1595 = vmatprep.subr.mxu0 0.0
    %1596 = vmatpush1.msra.mxu0 0.0
    %1597 = vmatprep.subr.mxu0 0.0
    %1598 = vmatpush1.msra.mxu0 0.0
    %1599 = vmatprep.subr.mxu0 0.0
    %1600 = vmatpush1.msra.mxu0 0.0
    %1601 = vmatprep.subr.mxu0 0.0
    %1602 = vmatpush1.msra.mxu0 0.0
    %1603 = vmatprep.subr.mxu0 0.0
    %1604 = vmatpush1.msra.mxu0 0.0
    %1605 = vmatprep.subr.mxu0 0.0
    %1606 = vmatpush1.msra.mxu0 0.0
    %1607 = vmatprep.subr.mxu0 0.0
    %1608 = vmatpush1.msra.mxu0 0.0
    %1609 = vmatprep.subr.mxu0 0.0
    %1610 = vmatpush1.msra.mxu0 0.0
    %1611 = vmatprep.mubr.f32.mxu0 0.0
    %1612 = vmatmul.mubr.f32.gmra.mrb[0].mxu0 %v1492
    %v1613 = vpop.f32.mrb[0].mxu0
    %v1614 = vadd.f32 0.0, %v1613
    %v1615 = vpop.f32.mrb[0].mxu0
    %v1616 = vadd.f32 0.0, %v1615
    %1617 = vdwg.mxu0
    %1618 = vmatprep.subr.mxu0 0.0
    %1619 = vmatpush1.msra.mxu0 %v1501
    %1620 = vmatprep.subr.mxu0 0.0
    %1621 = vmatpush1.msra.mxu0 %v1504
    %1622 = vmatprep.subr.mxu0 0.0
    %1623 = vmatpush1.msra.mxu0 %v1507
    %1624 = vmatprep.subr.mxu0 0.0
    %1625 = vmatpush1.msra.mxu0 %v1510
    %1626 = vmatprep.subr.mxu0 0.0
    %1627 = vmatpush1.msra.mxu0 %v1513
    %1628 = vmatprep.subr.mxu0 0.0
    %1629 = vmatpush1.msra.mxu0 %v1516
    %1630 = vmatprep.subr.mxu0 0.0
    %1631 = vmatpush1.msra.mxu0 %v1519
    %1632 = vmatprep.subr.mxu0 0.0
    %1633 = vmatpush1.msra.mxu0 %v1522
    %1634 = vmatprep.subr.mxu0 0.0
    %1635 = vmatpush1.msra.mxu0 %v1525
    %1636 = vmatprep.subr.mxu0 0.0
    %1637 = vmatpush1.msra.mxu0 %v1528
    %1638 = vmatprep.subr.mxu0 0.0
    %1639 = vmatpush1.msra.mxu0 %v1531
    %1640 = vmatprep.subr.mxu0 0.0
    %1641 = vmatpush1.msra.mxu0 %v1534
    %1642 = vmatprep.subr.mxu0 0.0
    %1643 = vmatpush1.msra.mxu0 %v1537
    %1644 = vmatprep.subr.mxu0 0.0
    %1645 = vmatpush1.msra.mxu0 %v1540
    %1646 = vmatprep.subr.mxu0 0.0
    %1647 = vmatpush1.msra.mxu0 %v1543
    %1648 = vmatprep.subr.mxu0 0.0
    %1649 = vmatpush1.msra.mxu0 %v1546
    %1650 = vmatprep.subr.mxu0 0.0
    %1651 = vmatpush1.msra.mxu0 0.0
    %1652 = vmatprep.subr.mxu0 0.0
    %1653 = vmatpush1.msra.mxu0 0.0
    %1654 = vmatprep.subr.mxu0 0.0
    %1655 = vmatpush1.msra.mxu0 0.0
    %1656 = vmatprep.subr.mxu0 0.0
    %1657 = vmatpush1.msra.mxu0 0.0
    %1658 = vmatprep.subr.mxu0 0.0
    %1659 = vmatpush1.msra.mxu0 0.0
    %1660 = vmatprep.subr.mxu0 0.0
    %1661 = vmatpush1.msra.mxu0 0.0
    %1662 = vmatprep.subr.mxu0 0.0
    %1663 = vmatpush1.msra.mxu0 0.0
    %1664 = vmatprep.subr.mxu0 0.0
    %1665 = vmatpush1.msra.mxu0 0.0
    %1666 = vmatprep.subr.mxu0 0.0
    %1667 = vmatpush1.msra.mxu0 0.0
    %1668 = vmatprep.subr.mxu0 0.0
    %1669 = vmatpush1.msra.mxu0 0.0
    %1670 = vmatprep.subr.mxu0 0.0
    %1671 = vmatpush1.msra.mxu0 0.0
    %1672 = vmatprep.subr.mxu0 0.0
    %1673 = vmatpush1.msra.mxu0 0.0
    %1674 = vmatprep.subr.mxu0 0.0
    %1675 = vmatpush1.msra.mxu0 0.0
    %1676 = vmatprep.subr.mxu0 0.0
    %1677 = vmatpush1.msra.mxu0 0.0
    %1678 = vmatprep.subr.mxu0 0.0
    %1679 = vmatpush1.msra.mxu0 0.0
    %1680 = vmatprep.subr.mxu0 0.0
    %1681 = vmatpush1.msra.mxu0 0.0
    %1682 = vmatprep.mubr.f32.mxu0 0.0
    %1683 = vmatmul.mubr.f32.gmra.mrb[0].mxu0 %v1492
    %v1684 = vpop.f32.mrb[0].mxu0
    %v1685 = vadd.f32 0.0, %v1684
    %v1686 = vpop.f32.mrb[0].mxu0
    %1687 = vdwg.mxu0
    %v1688 = vadd.f32 %v1496, %v1614
    %v1689 = vxor.u32 %v1688, 2147483648
    %v1690 = vmul.f32 %v1689, 1.442695
    %v1691 = vpow.pop %v1690
    %v1692 = vadd.f32 %v1691, 1.0
    %v1693 = vrcp.pop %v1692
    %v1694 = vmul.f32 1.0, %v1693
    %v1695 = vadd.f32 %v1497, %v1616
    %v1696 = vxor.u32 %v1695, 2147483648
    %v1697 = vmul.f32 %v1696, 1.442695
    %v1698 = vpow.pop %v1697
    %v1699 = vadd.f32 %v1698, 1.0
    %v1700 = vrcp.pop %v1699
    %v1701 = vmul.f32 1.0, %v1700
    %v1702 = vadd.f32 %v1685, %v409
    %v1703 = vmul.f32 %v1694, %v1702
    %v1704 = vadd.f32 %v1498, %v1703
    %v1705 = vtanh.pop %v1704
    %v1706 = vsub.f32 1.0, %v1701
    %v1707 = vmul.f32 %v1706, %v1705
    %v1708 = vmul.f32 %v1701, %v1492
    %v1709 = vadd.f32 %v1707, %v1708
    %s1710 = scalar_lea.vmem [#allocation15], 40
    %1711 = vst [vmem:[%s1710] sm:$0xff] %v1709
    %s1712 = scalar_lea.vmem [#allocation3], 144
    %v1713 = vld [vmem:[%s1712] sm:$0xff]
    %v1714 = vld [vmem:[%s1712 + $0x8] sm:$0xff]
    %v1715 = vld [vmem:[%s1712 + $0x10] sm:$0xff]
    %v1716 = vld [vmem:[#allocation12] sm:$0xff]
    %v1717 = vld [vmem:[#allocation12 + $0x8] sm:$0xff]
    %v1718 = vld [vmem:[#allocation12 + $0x10] sm:$0xff]
    %v1719 = vld [vmem:[#allocation12 + $0x18] sm:$0xff]
    %v1720 = vld [vmem:[#allocation12 + $0x20] sm:$0xff]
    %v1721 = vld [vmem:[#allocation12 + $0x28] sm:$0xff]
    %v1722 = vld [vmem:[#allocation12 + $0x30] sm:$0xff]
    %v1723 = vld [vmem:[#allocation12 + $0x38] sm:$0xff]
    %v1724 = vld [vmem:[#allocation12 + $0x40] sm:$0xff]
    %v1725 = vld [vmem:[#allocation12 + $0x48] sm:$0xff]
    %v1726 = vld [vmem:[#allocation12 + $0x50] sm:$0xff]
    %v1727 = vld [vmem:[#allocation12 + $0x58] sm:$0xff]
    %v1728 = vld [vmem:[#allocation12 + $0x60] sm:$0xff]
    %v1729 = vld [vmem:[#allocation12 + $0x68] sm:$0xff]
    %v1730 = vld [vmem:[#allocation12 + $0x70] sm:$0xff]
    %v1731 = vld [vmem:[#allocation12 + $0x78] sm:$0xff]
    %v1732 = vld [vmem:[#allocation12 + $0x80] sm:$0xff]
    %v1733 = vld [vmem:[#allocation12 + $0x88] sm:$0xff]
    %v1734 = vld [vmem:[#allocation12 + $0x90] sm:$0xff]
    %v1735 = vld [vmem:[#allocation12 + $0x98] sm:$0xff]
    %v1736 = vld [vmem:[#allocation12 + $0xa0] sm:$0xff]
    %v1737 = vld [vmem:[#allocation12 + $0xa8] sm:$0xff]
    %v1738 = vld [vmem:[#allocation12 + $0xb0] sm:$0xff]
    %v1739 = vld [vmem:[#allocation12 + $0xb8] sm:$0xff]
    %v1740 = vld [vmem:[#allocation12 + $0xc0] sm:$0xff]
    %v1741 = vld [vmem:[#allocation12 + $0xc8] sm:$0xff]
    %v1742 = vld [vmem:[#allocation12 + $0xd0] sm:$0xff]
    %v1743 = vld [vmem:[#allocation12 + $0xd8] sm:$0xff]
    %v1744 = vld [vmem:[#allocation12 + $0xe0] sm:$0xff]
    %v1745 = vld [vmem:[#allocation12 + $0xe8] sm:$0xff]
    %v1746 = vld [vmem:[#allocation12 + $0xf0] sm:$0xff]
    %v1747 = vld [vmem:[#allocation12 + $0xf8] sm:$0xff]
    %v1748 = vld [vmem:[#allocation12 + $0x100] sm:$0xff]
    %v1749 = vld [vmem:[#allocation12 + $0x108] sm:$0xff]
    %v1750 = vld [vmem:[#allocation12 + $0x110] sm:$0xff]
    %v1751 = vld [vmem:[#allocation12 + $0x118] sm:$0xff]
    %v1752 = vld [vmem:[#allocation12 + $0x120] sm:$0xff]
    %v1753 = vld [vmem:[#allocation12 + $0x128] sm:$0xff]
    %v1754 = vld [vmem:[#allocation12 + $0x130] sm:$0xff]
    %v1755 = vld [vmem:[#allocation12 + $0x138] sm:$0xff]
    %v1756 = vld [vmem:[#allocation12 + $0x140] sm:$0xff]
    %v1757 = vld [vmem:[#allocation12 + $0x148] sm:$0xff]
    %v1758 = vld [vmem:[#allocation12 + $0x150] sm:$0xff]
    %v1759 = vld [vmem:[#allocation12 + $0x158] sm:$0xff]
    %v1760 = vld [vmem:[#allocation12 + $0x160] sm:$0xff]
    %v1761 = vld [vmem:[#allocation12 + $0x168] sm:$0xff]
    %v1762 = vld [vmem:[#allocation12 + $0x170] sm:$0xff]
    %v1763 = vld [vmem:[#allocation12 + $0x178] sm:$0xff]
    %1764 = vmatprep.subr.mxu0 %v1717
    %1765 = vmatpush1.msra.mxu0 %v1716
    %1766 = vmatprep.subr.mxu0 %v1720
    %1767 = vmatpush1.msra.mxu0 %v1719
    %1768 = vmatprep.subr.mxu0 %v1723
    %1769 = vmatpush1.msra.mxu0 %v1722
    %1770 = vmatprep.subr.mxu0 %v1726
    %1771 = vmatpush1.msra.mxu0 %v1725
    %1772 = vmatprep.subr.mxu0 %v1729
    %1773 = vmatpush1.msra.mxu0 %v1728
    %1774 = vmatprep.subr.mxu0 %v1732
    %1775 = vmatpush1.msra.mxu0 %v1731
    %1776 = vmatprep.subr.mxu0 %v1735
    %1777 = vmatpush1.msra.mxu0 %v1734
    %1778 = vmatprep.subr.mxu0 %v1738
    %1779 = vmatpush1.msra.mxu0 %v1737
    %1780 = vmatprep.subr.mxu0 %v1741
    %1781 = vmatpush1.msra.mxu0 %v1740
    %1782 = vmatprep.subr.mxu0 %v1744
    %1783 = vmatpush1.msra.mxu0 %v1743
    %1784 = vmatprep.subr.mxu0 %v1747
    %1785 = vmatpush1.msra.mxu0 %v1746
    %1786 = vmatprep.subr.mxu0 %v1750
    %1787 = vmatpush1.msra.mxu0 %v1749
    %1788 = vmatprep.subr.mxu0 %v1753
    %1789 = vmatpush1.msra.mxu0 %v1752
    %1790 = vmatprep.subr.mxu0 %v1756
    %1791 = vmatpush1.msra.mxu0 %v1755
    %1792 = vmatprep.subr.mxu0 %v1759
    %1793 = vmatpush1.msra.mxu0 %v1758
    %1794 = vmatprep.subr.mxu0 %v1762
    %1795 = vmatpush1.msra.mxu0 %v1761
    %1796 = vmatprep.subr.mxu0 0.0
    %1797 = vmatpush1.msra.mxu0 0.0
    %1798 = vmatprep.subr.mxu0 0.0
    %1799 = vmatpush1.msra.mxu0 0.0
    %1800 = vmatprep.subr.mxu0 0.0
    %1801 = vmatpush1.msra.mxu0 0.0
    %1802 = vmatprep.subr.mxu0 0.0
    %1803 = vmatpush1.msra.mxu0 0.0
    %1804 = vmatprep.subr.mxu0 0.0
    %1805 = vmatpush1.msra.mxu0 0.0
    %1806 = vmatprep.subr.mxu0 0.0
    %1807 = vmatpush1.msra.mxu0 0.0
    %1808 = vmatprep.subr.mxu0 0.0
    %1809 = vmatpush1.msra.mxu0 0.0
    %1810 = vmatprep.subr.mxu0 0.0
    %1811 = vmatpush1.msra.mxu0 0.0
    %1812 = vmatprep.subr.mxu0 0.0
    %1813 = vmatpush1.msra.mxu0 0.0
    %1814 = vmatprep.subr.mxu0 0.0
    %1815 = vmatpush1.msra.mxu0 0.0
    %1816 = vmatprep.subr.mxu0 0.0
    %1817 = vmatpush1.msra.mxu0 0.0
    %1818 = vmatprep.subr.mxu0 0.0
    %1819 = vmatpush1.msra.mxu0 0.0
    %1820 = vmatprep.subr.mxu0 0.0
    %1821 = vmatpush1.msra.mxu0 0.0
    %1822 = vmatprep.subr.mxu0 0.0
    %1823 = vmatpush1.msra.mxu0 0.0
    %1824 = vmatprep.subr.mxu0 0.0
    %1825 = vmatpush1.msra.mxu0 0.0
    %1826 = vmatprep.subr.mxu0 0.0
    %1827 = vmatpush1.msra.mxu0 0.0
    %1828 = vmatprep.mubr.f32.mxu0 0.0
    %1829 = vmatmul.mubr.f32.gmra.mrb[0].mxu0 %v1709
    %v1830 = vpop.f32.mrb[0].mxu0
    %v1831 = vadd.f32 0.0, %v1830
    %v1832 = vpop.f32.mrb[0].mxu0
    %v1833 = vadd.f32 0.0, %v1832
    %1834 = vdwg.mxu0
    %1835 = vmatprep.subr.mxu0 0.0
    %1836 = vmatpush1.msra.mxu0 %v1718
    %1837 = vmatprep.subr.mxu0 0.0
    %1838 = vmatpush1.msra.mxu0 %v1721
    %1839 = vmatprep.subr.mxu0 0.0
    %1840 = vmatpush1.msra.mxu0 %v1724
    %1841 = vmatprep.subr.mxu0 0.0
    %1842 = vmatpush1.msra.mxu0 %v1727
    %1843 = vmatprep.subr.mxu0 0.0
    %1844 = vmatpush1.msra.mxu0 %v1730
    %1845 = vmatprep.subr.mxu0 0.0
    %1846 = vmatpush1.msra.mxu0 %v1733
    %1847 = vmatprep.subr.mxu0 0.0
    %1848 = vmatpush1.msra.mxu0 %v1736
    %1849 = vmatprep.subr.mxu0 0.0
    %1850 = vmatpush1.msra.mxu0 %v1739
    %1851 = vmatprep.subr.mxu0 0.0
    %1852 = vmatpush1.msra.mxu0 %v1742
    %1853 = vmatprep.subr.mxu0 0.0
    %1854 = vmatpush1.msra.mxu0 %v1745
    %1855 = vmatprep.subr.mxu0 0.0
    %1856 = vmatpush1.msra.mxu0 %v1748
    %1857 = vmatprep.subr.mxu0 0.0
    %1858 = vmatpush1.msra.mxu0 %v1751
    %1859 = vmatprep.subr.mxu0 0.0
    %1860 = vmatpush1.msra.mxu0 %v1754
    %1861 = vmatprep.subr.mxu0 0.0
    %1862 = vmatpush1.msra.mxu0 %v1757
    %1863 = vmatprep.subr.mxu0 0.0
    %1864 = vmatpush1.msra.mxu0 %v1760
    %1865 = vmatprep.subr.mxu0 0.0
    %1866 = vmatpush1.msra.mxu0 %v1763
    %1867 = vmatprep.subr.mxu0 0.0
    %1868 = vmatpush1.msra.mxu0 0.0
    %1869 = vmatprep.subr.mxu0 0.0
    %1870 = vmatpush1.msra.mxu0 0.0
    %1871 = vmatprep.subr.mxu0 0.0
    %1872 = vmatpush1.msra.mxu0 0.0
    %1873 = vmatprep.subr.mxu0 0.0
    %1874 = vmatpush1.msra.mxu0 0.0
    %1875 = vmatprep.subr.mxu0 0.0
    %1876 = vmatpush1.msra.mxu0 0.0
    %1877 = vmatprep.subr.mxu0 0.0
    %1878 = vmatpush1.msra.mxu0 0.0
    %1879 = vmatprep.subr.mxu0 0.0
    %1880 = vmatpush1.msra.mxu0 0.0
    %1881 = vmatprep.subr.mxu0 0.0
    %1882 = vmatpush1.msra.mxu0 0.0
    %1883 = vmatprep.subr.mxu0 0.0
    %1884 = vmatpush1.msra.mxu0 0.0
    %1885 = vmatprep.subr.mxu0 0.0
    %1886 = vmatpush1.msra.mxu0 0.0
    %1887 = vmatprep.subr.mxu0 0.0
    %1888 = vmatpush1.msra.mxu0 0.0
    %1889 = vmatprep.subr.mxu0 0.0
    %1890 = vmatpush1.msra.mxu0 0.0
    %1891 = vmatprep.subr.mxu0 0.0
    %1892 = vmatpush1.msra.mxu0 0.0
    %1893 = vmatprep.subr.mxu0 0.0
    %1894 = vmatpush1.msra.mxu0 0.0
    %1895 = vmatprep.subr.mxu0 0.0
    %1896 = vmatpush1.msra.mxu0 0.0
    %1897 = vmatprep.subr.mxu0 0.0
    %1898 = vmatpush1.msra.mxu0 0.0
    %1899 = vmatprep.mubr.f32.mxu0 0.0
    %1900 = vmatmul.mubr.f32.gmra.mrb[0].mxu0 %v1709
    %v1901 = vpop.f32.mrb[0].mxu0
    %v1902 = vadd.f32 0.0, %v1901
    %v1903 = vpop.f32.mrb[0].mxu0
    %1904 = vdwg.mxu0
    %v1905 = vadd.f32 %v1713, %v1831
    %v1906 = vxor.u32 %v1905, 2147483648
    %v1907 = vmul.f32 %v1906, 1.442695
    %v1908 = vpow.pop %v1907
    %v1909 = vadd.f32 %v1908, 1.0
    %v1910 = vrcp.pop %v1909
    %v1911 = vmul.f32 1.0, %v1910
    %v1912 = vadd.f32 %v1714, %v1833
    %v1913 = vxor.u32 %v1912, 2147483648
    %v1914 = vmul.f32 %v1913, 1.442695
    %v1915 = vpow.pop %v1914
    %v1916 = vadd.f32 %v1915, 1.0
    %v1917 = vrcp.pop %v1916
    %v1918 = vmul.f32 1.0, %v1917
    %v1919 = vadd.f32 %v1902, %v409
    %v1920 = vmul.f32 %v1911, %v1919
    %v1921 = vadd.f32 %v1715, %v1920
    %v1922 = vtanh.pop %v1921
    %v1923 = vsub.f32 1.0, %v1918
    %v1924 = vmul.f32 %v1923, %v1922
    %v1925 = vmul.f32 %v1918, %v1709
    %v1926 = vadd.f32 %v1924, %v1925
    %s1927 = scalar_lea.vmem [#allocation15], 48
    %1928 = vst [vmem:[%s1927] sm:$0xff] %v1926
    %s1929 = scalar_lea.vmem [#allocation3], 168
    %v1930 = vld [vmem:[%s1929] sm:$0xff]
    %v1931 = vld [vmem:[%s1929 + $0x8] sm:$0xff]
    %v1932 = vld [vmem:[%s1929 + $0x10] sm:$0xff]
    %v1933 = vld [vmem:[#allocation12] sm:$0xff]
    %v1934 = vld [vmem:[#allocation12 + $0x8] sm:$0xff]
    %v1935 = vld [vmem:[#allocation12 + $0x10] sm:$0xff]
    %v1936 = vld [vmem:[#allocation12 + $0x18] sm:$0xff]
    %v1937 = vld [vmem:[#allocation12 + $0x20] sm:$0xff]
    %v1938 = vld [vmem:[#allocation12 + $0x28] sm:$0xff]
    %v1939 = vld [vmem:[#allocation12 + $0x30] sm:$0xff]
    %v1940 = vld [vmem:[#allocation12 + $0x38] sm:$0xff]
    %v1941 = vld [vmem:[#allocation12 + $0x40] sm:$0xff]
    %v1942 = vld [vmem:[#allocation12 + $0x48] sm:$0xff]
    %v1943 = vld [vmem:[#allocation12 + $0x50] sm:$0xff]
    %v1944 = vld [vmem:[#allocation12 + $0x58] sm:$0xff]
    %v1945 = vld [vmem:[#allocation12 + $0x60] sm:$0xff]
    %v1946 = vld [vmem:[#allocation12 + $0x68] sm:$0xff]
    %v1947 = vld [vmem:[#allocation12 + $0x70] sm:$0xff]
    %v1948 = vld [vmem:[#allocation12 + $0x78] sm:$0xff]
    %v1949 = vld [vmem:[#allocation12 + $0x80] sm:$0xff]
    %v1950 = vld [vmem:[#allocation12 + $0x88] sm:$0xff]
    %v1951 = vld [vmem:[#allocation12 + $0x90] sm:$0xff]
    %v1952 = vld [vmem:[#allocation12 + $0x98] sm:$0xff]
    %v1953 = vld [vmem:[#allocation12 + $0xa0] sm:$0xff]
    %v1954 = vld [vmem:[#allocation12 + $0xa8] sm:$0xff]
    %v1955 = vld [vmem:[#allocation12 + $0xb0] sm:$0xff]
    %v1956 = vld [vmem:[#allocation12 + $0xb8] sm:$0xff]
    %v1957 = vld [vmem:[#allocation12 + $0xc0] sm:$0xff]
    %v1958 = vld [vmem:[#allocation12 + $0xc8] sm:$0xff]
    %v1959 = vld [vmem:[#allocation12 + $0xd0] sm:$0xff]
    %v1960 = vld [vmem:[#allocation12 + $0xd8] sm:$0xff]
    %v1961 = vld [vmem:[#allocation12 + $0xe0] sm:$0xff]
    %v1962 = vld [vmem:[#allocation12 + $0xe8] sm:$0xff]
    %v1963 = vld [vmem:[#allocation12 + $0xf0] sm:$0xff]
    %v1964 = vld [vmem:[#allocation12 + $0xf8] sm:$0xff]
    %v1965 = vld [vmem:[#allocation12 + $0x100] sm:$0xff]
    %v1966 = vld [vmem:[#allocation12 + $0x108] sm:$0xff]
    %v1967 = vld [vmem:[#allocation12 + $0x110] sm:$0xff]
    %v1968 = vld [vmem:[#allocation12 + $0x118] sm:$0xff]
    %v1969 = vld [vmem:[#allocation12 + $0x120] sm:$0xff]
    %v1970 = vld [vmem:[#allocation12 + $0x128] sm:$0xff]
    %v1971 = vld [vmem:[#allocation12 + $0x130] sm:$0xff]
    %v1972 = vld [vmem:[#allocation12 + $0x138] sm:$0xff]
    %v1973 = vld [vmem:[#allocation12 + $0x140] sm:$0xff]
    %v1974 = vld [vmem:[#allocation12 + $0x148] sm:$0xff]
    %v1975 = vld [vmem:[#allocation12 + $0x150] sm:$0xff]
    %v1976 = vld [vmem:[#allocation12 + $0x158] sm:$0xff]
    %v1977 = vld [vmem:[#allocation12 + $0x160] sm:$0xff]
    %v1978 = vld [vmem:[#allocation12 + $0x168] sm:$0xff]
    %v1979 = vld [vmem:[#allocation12 + $0x170] sm:$0xff]
    %v1980 = vld [vmem:[#allocation12 + $0x178] sm:$0xff]
    %1981 = vmatprep.subr.mxu0 %v1934
    %1982 = vmatpush1.msra.mxu0 %v1933
    %1983 = vmatprep.subr.mxu0 %v1937
    %1984 = vmatpush1.msra.mxu0 %v1936
    %1985 = vmatprep.subr.mxu0 %v1940
    %1986 = vmatpush1.msra.mxu0 %v1939
    %1987 = vmatprep.subr.mxu0 %v1943
    %1988 = vmatpush1.msra.mxu0 %v1942
    %1989 = vmatprep.subr.mxu0 %v1946
    %1990 = vmatpush1.msra.mxu0 %v1945
    %1991 = vmatprep.subr.mxu0 %v1949
    %1992 = vmatpush1.msra.mxu0 %v1948
    %1993 = vmatprep.subr.mxu0 %v1952
    %1994 = vmatpush1.msra.mxu0 %v1951
    %1995 = vmatprep.subr.mxu0 %v1955
    %1996 = vmatpush1.msra.mxu0 %v1954
    %1997 = vmatprep.subr.mxu0 %v1958
    %1998 = vmatpush1.msra.mxu0 %v1957
    %1999 = vmatprep.subr.mxu0 %v1961
    %2000 = vmatpush1.msra.mxu0 %v1960
    %2001 = vmatprep.subr.mxu0 %v1964
    %2002 = vmatpush1.msra.mxu0 %v1963
    %2003 = vmatprep.subr.mxu0 %v1967
    %2004 = vmatpush1.msra.mxu0 %v1966
    %2005 = vmatprep.subr.mxu0 %v1970
    %2006 = vmatpush1.msra.mxu0 %v1969
    %2007 = vmatprep.subr.mxu0 %v1973
    %2008 = vmatpush1.msra.mxu0 %v1972
    %2009 = vmatprep.subr.mxu0 %v1976
    %2010 = vmatpush1.msra.mxu0 %v1975
    %2011 = vmatprep.subr.mxu0 %v1979
    %2012 = vmatpush1.msra.mxu0 %v1978
    %2013 = vmatprep.subr.mxu0 0.0
    %2014 = vmatpush1.msra.mxu0 0.0
    %2015 = vmatprep.subr.mxu0 0.0
    %2016 = vmatpush1.msra.mxu0 0.0
    %2017 = vmatprep.subr.mxu0 0.0
    %2018 = vmatpush1.msra.mxu0 0.0
    %2019 = vmatprep.subr.mxu0 0.0
    %2020 = vmatpush1.msra.mxu0 0.0
    %2021 = vmatprep.subr.mxu0 0.0
    %2022 = vmatpush1.msra.mxu0 0.0
    %2023 = vmatprep.subr.mxu0 0.0
    %2024 = vmatpush1.msra.mxu0 0.0
    %2025 = vmatprep.subr.mxu0 0.0
    %2026 = vmatpush1.msra.mxu0 0.0
    %2027 = vmatprep.subr.mxu0 0.0
    %2028 = vmatpush1.msra.mxu0 0.0
    %2029 = vmatprep.subr.mxu0 0.0
    %2030 = vmatpush1.msra.mxu0 0.0
    %2031 = vmatprep.subr.mxu0 0.0
    %2032 = vmatpush1.msra.mxu0 0.0
    %2033 = vmatprep.subr.mxu0 0.0
    %2034 = vmatpush1.msra.mxu0 0.0
    %2035 = vmatprep.subr.mxu0 0.0
    %2036 = vmatpush1.msra.mxu0 0.0
    %2037 = vmatprep.subr.mxu0 0.0
    %2038 = vmatpush1.msra.mxu0 0.0
    %2039 = vmatprep.subr.mxu0 0.0
    %2040 = vmatpush1.msra.mxu0 0.0
    %2041 = vmatprep.subr.mxu0 0.0
    %2042 = vmatpush1.msra.mxu0 0.0
    %2043 = vmatprep.subr.mxu0 0.0
    %2044 = vmatpush1.msra.mxu0 0.0
    %2045 = vmatprep.mubr.f32.mxu0 0.0
    %2046 = vmatmul.mubr.f32.gmra.mrb[0].mxu0 %v1926
    %v2047 = vpop.f32.mrb[0].mxu0
    %v2048 = vadd.f32 0.0, %v2047
    %v2049 = vpop.f32.mrb[0].mxu0
    %v2050 = vadd.f32 0.0, %v2049
    %2051 = vdwg.mxu0
    %2052 = vmatprep.subr.mxu0 0.0
    %2053 = vmatpush1.msra.mxu0 %v1935
    %2054 = vmatprep.subr.mxu0 0.0
    %2055 = vmatpush1.msra.mxu0 %v1938
    %2056 = vmatprep.subr.mxu0 0.0
    %2057 = vmatpush1.msra.mxu0 %v1941
    %2058 = vmatprep.subr.mxu0 0.0
    %2059 = vmatpush1.msra.mxu0 %v1944
    %2060 = vmatprep.subr.mxu0 0.0
    %2061 = vmatpush1.msra.mxu0 %v1947
    %2062 = vmatprep.subr.mxu0 0.0
    %2063 = vmatpush1.msra.mxu0 %v1950
    %2064 = vmatprep.subr.mxu0 0.0
    %2065 = vmatpush1.msra.mxu0 %v1953
    %2066 = vmatprep.subr.mxu0 0.0
    %2067 = vmatpush1.msra.mxu0 %v1956
    %2068 = vmatprep.subr.mxu0 0.0
    %2069 = vmatpush1.msra.mxu0 %v1959
    %2070 = vmatprep.subr.mxu0 0.0
    %2071 = vmatpush1.msra.mxu0 %v1962
    %2072 = vmatprep.subr.mxu0 0.0
    %2073 = vmatpush1.msra.mxu0 %v1965
    %2074 = vmatprep.subr.mxu0 0.0
    %2075 = vmatpush1.msra.mxu0 %v1968
    %2076 = vmatprep.subr.mxu0 0.0
    %2077 = vmatpush1.msra.mxu0 %v1971
    %2078 = vmatprep.subr.mxu0 0.0
    %2079 = vmatpush1.msra.mxu0 %v1974
    %2080 = vmatprep.subr.mxu0 0.0
    %2081 = vmatpush1.msra.mxu0 %v1977
    %2082 = vmatprep.subr.mxu0 0.0
    %2083 = vmatpush1.msra.mxu0 %v1980
    %2084 = vmatprep.subr.mxu0 0.0
    %2085 = vmatpush1.msra.mxu0 0.0
    %2086 = vmatprep.subr.mxu0 0.0
    %2087 = vmatpush1.msra.mxu0 0.0
    %2088 = vmatprep.subr.mxu0 0.0
    %2089 = vmatpush1.msra.mxu0 0.0
    %2090 = vmatprep.subr.mxu0 0.0
    %2091 = vmatpush1.msra.mxu0 0.0
    %2092 = vmatprep.subr.mxu0 0.0
    %2093 = vmatpush1.msra.mxu0 0.0
    %2094 = vmatprep.subr.mxu0 0.0
    %2095 = vmatpush1.msra.mxu0 0.0
    %2096 = vmatprep.subr.mxu0 0.0
    %2097 = vmatpush1.msra.mxu0 0.0
    %2098 = vmatprep.subr.mxu0 0.0
    %2099 = vmatpush1.msra.mxu0 0.0
    %2100 = vmatprep.subr.mxu0 0.0
    %2101 = vmatpush1.msra.mxu0 0.0
    %2102 = vmatprep.subr.mxu0 0.0
    %2103 = vmatpush1.msra.mxu0 0.0
    %2104 = vmatprep.subr.mxu0 0.0
    %2105 = vmatpush1.msra.mxu0 0.0
    %2106 = vmatprep.subr.mxu0 0.0
    %2107 = vmatpush1.msra.mxu0 0.0
    %2108 = vmatprep.subr.mxu0 0.0
    %2109 = vmatpush1.msra.mxu0 0.0
    %2110 = vmatprep.subr.mxu0 0.0
    %2111 = vmatpush1.msra.mxu0 0.0
    %2112 = vmatprep.subr.mxu0 0.0
    %2113 = vmatpush1.msra.mxu0 0.0
    %2114 = vmatprep.subr.mxu0 0.0
    %2115 = vmatpush1.msra.mxu0 0.0
    %2116 = vmatprep.mubr.f32.mxu0 0.0
    %2117 = vmatmul.mubr.f32.gmra.mrb[0].mxu0 %v1926
    %v2118 = vpop.f32.mrb[0].mxu0
    %v2119 = vadd.f32 0.0, %v2118
    %v2120 = vpop.f32.mrb[0].mxu0
    %2121 = vdwg.mxu0
    %v2122 = vadd.f32 %v1930, %v2048
    %v2123 = vxor.u32 %v2122, 2147483648
    %v2124 = vmul.f32 %v2123, 1.442695
    %v2125 = vpow.pop %v2124
    %v2126 = vadd.f32 %v2125, 1.0
    %v2127 = vrcp.pop %v2126
    %v2128 = vmul.f32 1.0, %v2127
    %v2129 = vadd.f32 %v1931, %v2050
    %v2130 = vxor.u32 %v2129, 2147483648
    %v2131 = vmul.f32 %v2130, 1.442695
    %v2132 = vpow.pop %v2131
    %v2133 = vadd.f32 %v2132, 1.0
    %v2134 = vrcp.pop %v2133
    %v2135 = vmul.f32 1.0, %v2134
    %v2136 = vadd.f32 %v2119, %v409
    %v2137 = vmul.f32 %v2128, %v2136
    %v2138 = vadd.f32 %v1932, %v2137
    %v2139 = vtanh.pop %v2138
    %v2140 = vsub.f32 1.0, %v2135
    %v2141 = vmul.f32 %v2140, %v2139
    %v2142 = vmul.f32 %v2135, %v1926
    %v2143 = vadd.f32 %v2141, %v2142
    %s2144 = scalar_lea.vmem [#allocation15], 56
    %2145 = vst [vmem:[%s2144] sm:$0xff] %v2143
    %2146 = vst [vmem:[#allocation2] sm:$0xff] %v2143
    // Predicated region
    $region54: #{encoder_forward.2} parent=1 // pred_check
      _
    $region55: #{encoder_forward.2} parent=1 // pred_check_branch
      %2148 = sbr.rel (0) target = $region57
    $region56: #{encoder_forward.2} parent=1 // pred_region
      %s2150 = ssub.s32 1024, 1024
      %2151 = vsyncadd [#allocation6], %s2150
      %s2152 = sshll.u32 [#allocation15], 4
      %s2153 = int_to_ptr.vmem [resolvable:$true] %s2152
      %2158 = dma.vmem_to_hbm [thread:$0]  %s2153, 1024, %s6, [#allocation6], 128, 128, 8
    $region57: #{encoder_forward.2} parent=1 // pred_fallthru
      _
    // Predicated region
    $region58: #{encoder_forward.2} parent=1 // pred_check
      _
    $region59: #{encoder_forward.2} parent=1 // pred_check_branch
      %2160 = sbr.rel (0) target = $region61
    $region60: #{encoder_forward.2} parent=1 // pred_region
      %2161 = dma.done [#allocation6], 1024
    $region61: #{encoder_forward.2} parent=1 // pred_fallthru
      _
    %2162 = vsyncpa [#allocation5], 1
    %2163 = vsyncpa [#allocation8], 1
    %2164 = vsyncpa [#allocation11], 1
    %2165 = vsyncpa [#allocation14], 1
    %2166 = vsyncpa [#allocation6], 1

</llo_original>
